<compile_context>
chip_gen: v6e
topology: v6e:2x2x1
jax: 0.10.0
libtpu: 0.0.40
codegen_flags: <defaults>
</compile_context>

<pallas_src>
import functools

import numpy as np
import jax
import jax.numpy as jnp
from jax import lax
from jax.experimental import pallas as pl
from jax.experimental.pallas import tpu as pltpu


def _rnn_kernel(block_b,
                u_ref, bias_ref,                      # SMEM: (B, T), (do, do)
                w_ref, win_ref, oma_ref, wout_ref,    # VMEM params
                x0_ref, noise_ref,                    # VMEM per-block inputs
                out_ref, xs_ref,                      # VMEM outputs
                rs_ref):                              # VMEM scratch (block_b, T, dh)
    T = xs_ref.shape[1]
    g = pl.program_id(0)

    win = win_ref[...]        # (1, dh)
    oma = oma_ref[...]        # (1, dh)  == 1 - alpha

    # Initial carry: block_b independent (x, r) row pairs.
    x_init = tuple(x0_ref[b] for b in range(block_b))            # (1, dh) each
    r_init = tuple(jax.nn.sigmoid(x) for x in x_init)

    def step(t, carry):
        xs_c, rs_c = carry
        new_x, new_r = [], []
        for b in range(block_b):
            # Loop-invariant RHS read from a stable VMEM input-block address.
            # TODO(synk): hold the RHS in MXU weight regs across the loop via
            # pltpu.matmul_push_rhs / matmul_acc_lhs for long T.
            rec = jnp.dot(rs_c[b], w_ref[b],
                          preferred_element_type=jnp.float32)     # (1, dh)
            # Drive is off the carry path -> hides under the MXU latency.
            drive = (u_ref[g * block_b + b, t] * win
                     + noise_ref[b, pl.ds(t, 1), :])              # (1, dh)
            x_new = oma * xs_c[b] + rec + drive
            r_new = jax.nn.sigmoid(x_new)      # one EUP sigmoid per step per b
            xs_ref[b, pl.ds(t, 1), :] = x_new
            rs_ref[b, pl.ds(t, 1), :] = r_new  # reused by the readout epilogue
            new_x.append(x_new)
            new_r.append(r_new)
        return tuple(new_x), tuple(new_r)

    lax.fori_loop(0, T, step, (x_init, r_init), unroll=min(T, 8))

    # Readout epilogue: one dense matmul per batch row on the stored sigmoids
    # (no sigmoid recompute, no xs re-read). out[d, t] = sum_h wout[d,h]*r[t,h].
    for b in range(block_b):
        out = lax.dot_general(wout_ref[...], rs_ref[b],
                              (((1,), (1,)), ((), ())),
                              preferred_element_type=jnp.float32)  # (do, T)
        out_ref[b] = out + bias_ref[0, 0]


def rnn_forward(u, x0, noise, nm_signal,
                win, m, wout, w_raw, taus_raw, bias,
                *, dt=1.0, tau_range=(4.0, 20.0), block_b=2):
    B, T, di = u.shape
    dh = x0.shape[1]
    do = wout.shape[0]
    assert di == 1, "torch.matmul(win, u_t) in the reference requires di == 1"
    assert do == 1, "bias handling assumes do == 1 (module default)"
    block_b = min(block_b, B)
    if B % block_b != 0:
        block_b = 1

    f32 = jnp.float32
    # ---- one-time parameter prep hoisted to XLA (tiny) ----------------------
    taus = jax.nn.sigmoid(taus_raw.astype(f32)) * (tau_range[1] - tau_range[0]) \
        + tau_range[0]                                            # (dh, 1)
    alpha = dt / taus                                             # (dh, 1)
    one_minus_alpha = (1.0 - alpha).T                             # (1, dh) row
    w_full = jnp.matmul(jnp.abs(w_raw).astype(f32) @ m.astype(f32),
                        nm_signal.astype(f32))                    # (B, dh, dh)
    # Fold alpha and pre-transpose:  w_alpha_t[b, j, i] = alpha[i] * w[b, i, j]
    w_alpha_t = jnp.transpose(alpha[None] * w_full, (0, 2, 1))    # (B, dh, dh)

    win_row = win.T.astype(f32)                                   # (1, dh)
    u_bt = u[..., 0].astype(f32)                                  # (B, T) -> SMEM
    x0_row = jnp.transpose(x0, (0, 2, 1)).astype(f32)             # (B, 1, dh)
    noise_f = noise.astype(f32)                                   # (B, T, dh)

    nb = B // block_b
    kernel = functools.partial(_rnn_kernel, block_b)

    out_dT, xs_btd = pl.pallas_call(
        kernel,
        out_shape=(jax.ShapeDtypeStruct((B, do, T), f32),   # lane-dense (do, T)
                   jax.ShapeDtypeStruct((B, T, dh), f32)),
        grid_spec=pltpu.PrefetchScalarGridSpec(
            num_scalar_prefetch=0,
            grid=(nb,),
            in_specs=[
                pl.BlockSpec(memory_space=pltpu.MemorySpace.SMEM),  # u (B, T)
                pl.BlockSpec(memory_space=pltpu.MemorySpace.SMEM),  # bias
                pl.BlockSpec((block_b, dh, dh), lambda g: (g, 0, 0)),  # w_alpha_t
                pl.BlockSpec((1, dh), lambda g: (0, 0)),            # win row
                pl.BlockSpec((1, dh), lambda g: (0, 0)),            # 1 - alpha row
                pl.BlockSpec((do, dh), lambda g: (0, 0)),           # wout
                pl.BlockSpec((block_b, 1, dh), lambda g: (g, 0, 0)),   # x0 rows
                pl.BlockSpec((block_b, T, dh), lambda g: (g, 0, 0)),   # noise
            ],
            out_specs=[
                pl.BlockSpec((block_b, do, T), lambda g: (g, 0, 0)),   # outputs
                pl.BlockSpec((block_b, T, dh), lambda g: (g, 0, 0)),   # xs
            ],
            # r (sigmoid) scratch, written per step, consumed by the readout.
            scratch_shapes=[pltpu.VMEM((block_b, T, dh), f32)],
        ),
        # "parallel" lets v7x shard batch blocks across its 2 TensorCores;
        # harmless on v5e/v6e (single TC).
        compiler_params=pltpu.CompilerParams(
            dimension_semantics=("parallel",)),
    )(u_bt, bias.astype(f32), w_alpha_t, win_row, one_minus_alpha,
      wout.astype(f32), x0_row, noise_f)

    outputs = jnp.transpose(out_dT, (0, 2, 1))   # (B, T, do) — PyTorch convention
    xs = jnp.transpose(xs_btd, (0, 2, 1))        # (B, dh, T) — PyTorch convention
    return outputs, xs


def _rnn_forward_ref(u, x0, noise, nm_signal,
                     win, m, wout, w_raw, taus_raw, bias,
                     *, dt=1.0, tau_range=(4.0, 20.0)):
    """Pure-JAX reference mirroring the PyTorch forward (column layout)."""
    B, T, _ = u.shape
    taus = jax.nn.sigmoid(taus_raw) * (tau_range[1] - tau_range[0]) + tau_range[0]
    w = jnp.matmul(jnp.matmul(jnp.abs(w_raw), m), nm_signal)       # (B, dh, dh)
    x = x0                                                         # (B, dh, 1)
    outs, xs = [], []
    for t in range(T):
        u_t = u[:, t, :][:, None, :]                               # (B, 1, di)
        r = jax.nn.sigmoid(x)
        decay = (1.0 - dt / taus) * x
        rec = (dt / taus) * jnp.matmul(w, r)
        inp = jnp.matmul(win, u_t)                                 # di == 1
        x = decay + rec + inp + noise[:, t, :][:, :, None]
        o = jnp.matmul(wout, jax.nn.sigmoid(x)) + bias             # (B, do, 1)
        outs.append(jnp.transpose(o, (0, 2, 1)))
        xs.append(x)
    return jnp.concatenate(outs, axis=1), jnp.concatenate(xs, axis=-1)


if __name__ == "__main__":
    # Small, deterministic configuration consistent with the module.
    # dh chosen as a multiple of 128 (lane-dense vregs / unpadded MXU RHS).
    seed = 1234
    B, T = 4, 8
    dh, di, do = 128, 1, 1
    pinh, pcon, g = 0.2, 0.8, 1.5
    wout_scl, x_noise_scl = 100.0, 10.0
    dt, tau_range = 1.0, (4.0, 20.0)

    key = jax.random.PRNGKey(0)
    (k_win, k_wout, k_mask, k_w, k_tau,
     k_u, k_x0, k_noise, k_nm) = jax.random.split(key, 9)

    # Parameters (deterministic synthetic init, same shapes as the nn.Module).
    win = jax.random.normal(k_win, (dh, di), dtype=jnp.float32)
    np_rng = np.random.default_rng(seed)
    inh_idxs = np_rng.choice(dh, size=int(dh * pinh), replace=False)
    m = jnp.eye(dh, dtype=jnp.float32)
    m = m.at[inh_idxs, inh_idxs].set(-1.0)
    wout = jax.random.normal(k_wout, (do, dh), dtype=jnp.float32) / wout_scl
    w_mask = (jax.random.uniform(k_mask, (dh, dh)) < pcon).astype(jnp.float32)
    w_raw = w_mask * jax.random.normal(k_w, (dh, dh), dtype=jnp.float32) * (
        g / np.sqrt(dh * pcon))
    taus_raw = jax.random.normal(k_tau, (dh, 1), dtype=jnp.float32)
    bias = jnp.zeros((do, do), dtype=jnp.float32)

    # Inputs.
    u = jax.random.normal(k_u, (B, T, di), dtype=jnp.float32)
    x0 = jax.random.normal(k_x0, (B, dh, 1), dtype=jnp.float32)
    # Per-batch neuromodulation signal (identity + small perturbation) to
    # exercise the general per-batch-weight path.
    nm_signal = (jnp.broadcast_to(jnp.eye(dh, dtype=jnp.float32), (B, dh, dh))
                 + 0.05 * jax.random.normal(k_nm, (B, dh, dh), dtype=jnp.float32))
    # Per-step noise (deterministic JAX draw standing in for torch.normal).
    noise = jax.random.normal(k_noise, (B, T, dh), dtype=jnp.float32) / x_noise_scl

    outputs, xs = rnn_forward(u, x0, noise, nm_signal,
                              win, m, wout, w_raw, taus_raw, bias,
                              dt=dt, tau_range=tau_range, block_b=2)
    jax.block_until_ready((outputs, xs))

    # Validate against a pure-JAX reference of the PyTorch forward.
    ref_out, ref_xs = _rnn_forward_ref(u, x0, noise, nm_signal,
                                       win, m, wout, w_raw, taus_raw, bias,
                                       dt=dt, tau_range=tau_range)
    assert outputs.shape == (B, T, do) and xs.shape == (B, dh, T)
    np.testing.assert_allclose(np.asarray(outputs), np.asarray(ref_out),
                               rtol=2e-3, atol=2e-3)
    np.testing.assert_allclose(np.asarray(xs), np.asarray(ref_xs),
                               rtol=2e-3, atol=2e-3)

    print("KERNEL_OK")
</pallas_src>

<mosaic_0001>
module attributes {stable_mosaic.version = 11 : i64} {
  func.func @_rnn_kernel(%arg0: i32, %arg1: memref<4x8xf32, #tpu.memory_space<smem>>, %arg2: memref<1x1xf32, #tpu.memory_space<smem>>, %arg3: memref<2x128x128xf32, #tpu.memory_space<vmem>>, %arg4: memref<1x128xf32, #tpu.memory_space<vmem>>, %arg5: memref<1x128xf32, #tpu.memory_space<vmem>>, %arg6: memref<1x128xf32, #tpu.memory_space<vmem>>, %arg7: memref<2x1x128xf32, #tpu.memory_space<vmem>>, %arg8: memref<2x8x128xf32, #tpu.memory_space<vmem>>, %arg9: memref<2x1x8xf32, #tpu.memory_space<vmem>>, %arg10: memref<2x8x128xf32, #tpu.memory_space<vmem>>, %arg11: memref<2x8x128xf32, #tpu.memory_space<vmem>>) attributes {dimension_semantics = [#tpu.dimension_semantics<parallel>], iteration_bounds = array<i64: 2>, scalar_prefetch = 0 : i64, scratch_operands = 1 : i64, tpu.core_type = #tpu.core_type<tc>, window_params = [{transform_indices = @transform_0, window_bounds = array<i64: 4, 8>}, {transform_indices = @transform_1, window_bounds = array<i64: 1, 1>}, {transform_indices = @transform_2, window_bounds = array<i64: 2, 128, 128>}, {pipeline_mode = #tpu.pipeline_mode<synchronous>, transform_indices = @transform_3, window_bounds = array<i64: 1, 128>}, {pipeline_mode = #tpu.pipeline_mode<synchronous>, transform_indices = @transform_4, window_bounds = array<i64: 1, 128>}, {pipeline_mode = #tpu.pipeline_mode<synchronous>, transform_indices = @transform_5, window_bounds = array<i64: 1, 128>}, {transform_indices = @transform_6, window_bounds = array<i64: 2, 1, 128>}, {transform_indices = @transform_7, window_bounds = array<i64: 2, 8, 128>}, {transform_indices = @transform_8, window_bounds = array<i64: 2, 1, 8>}, {transform_indices = @transform_9, window_bounds = array<i64: 2, 8, 128>}]} {
    %c0 = arith.constant 0 : index
    %c0_0 = arith.constant 0 : index
    %0 = vector.load %arg4[%c0, %c0_0] : memref<1x128xf32, #tpu.memory_space<vmem>>, vector<1x128xf32>
    %c0_1 = arith.constant 0 : index
    %c0_2 = arith.constant 0 : index
    %1 = vector.load %arg5[%c0_1, %c0_2] : memref<1x128xf32, #tpu.memory_space<vmem>>, vector<1x128xf32>
    %c0_3 = arith.constant 0 : index
    %c0_4 = arith.constant 0 : index
    %c0_5 = arith.constant 0 : index
    %2 = vector.load %arg7[%c0_3, %c0_4, %c0_5] : memref<2x1x128xf32, #tpu.memory_space<vmem>>, vector<1x1x128xf32>
    %3 = vector.shape_cast %2 : vector<1x1x128xf32> to vector<1x128xf32>
    %c1 = arith.constant 1 : index
    %c0_6 = arith.constant 0 : index
    %c0_7 = arith.constant 0 : index
    %4 = vector.load %arg7[%c1, %c0_6, %c0_7] : memref<2x1x128xf32, #tpu.memory_space<vmem>>, vector<1x1x128xf32>
    %5 = vector.shape_cast %4 : vector<1x1x128xf32> to vector<1x128xf32>
    %6 = arith.negf %3 : vector<1x128xf32>
    %7 = math.exp %6 : vector<1x128xf32>
    %cst = arith.constant 1.000000e+00 : f32
    %8 = vector.broadcast %cst : f32 to vector<1x128xf32>
    %9 = arith.addf %8, %7 : vector<1x128xf32>
    %10 = arith.divf %8, %9 : vector<1x128xf32>
    %11 = arith.negf %5 : vector<1x128xf32>
    %12 = math.exp %11 : vector<1x128xf32>
    %cst_8 = arith.constant 1.000000e+00 : f32
    %13 = vector.broadcast %cst_8 : f32 to vector<1x128xf32>
    %14 = arith.addf %13, %12 : vector<1x128xf32>
    %15 = arith.divf %13, %14 : vector<1x128xf32>
    %c0_i32 = arith.constant 0 : i32
    %c0_9 = arith.constant 0 : index
    %c0_10 = arith.constant 0 : index
    %c0_11 = arith.constant 0 : index
    %16 = vector.load %arg3[%c0_9, %c0_10, %c0_11] : memref<2x128x128xf32, #tpu.memory_space<vmem>>, vector<1x128x128xf32>
    %17 = vector.shape_cast %16 : vector<1x128x128xf32> to vector<128x128xf32>
    %cst_12 = arith.constant dense<0.000000e+00> : vector<1x128xf32>
    %18 = tpu.matmul %10, %17, %cst_12 {dimension_numbers = #tpu.dot_dimension_numbers<[1], [0], [0], [1], [0, 0, 1, 1], [], []>} : vector<1x128xf32>, vector<128x128xf32>, vector<1x128xf32> -> vector<1x128xf32>
    %c2_i32 = arith.constant 2 : i32
    %19 = arith.muli %arg0, %c2_i32 : i32
    %c0_i32_13 = arith.constant 0 : i32
    %20 = arith.addi %19, %c0_i32_13 : i32
    %21 = arith.index_cast %20 : i32 to index
    %22 = arith.index_cast %c0_i32 : i32 to index
    %23 = memref.load %arg1[%21, %22] : memref<4x8xf32, #tpu.memory_space<smem>>
    %24 = vector.broadcast %23 : f32 to vector<1x128xf32>
    %25 = arith.mulf %24, %0 : vector<1x128xf32>
    %c0_14 = arith.constant 0 : index
    %26 = arith.index_cast %c0_i32 : i32 to index
    %c0_15 = arith.constant 0 : index
    %27 = vector.load %arg8[%c0_14, %26, %c0_15] : memref<2x8x128xf32, #tpu.memory_space<vmem>>, vector<1x1x128xf32>
    %28 = vector.shape_cast %27 : vector<1x1x128xf32> to vector<1x128xf32>
    %29 = arith.addf %25, %28 : vector<1x128xf32>
    %30 = arith.mulf %1, %3 : vector<1x128xf32>
    %31 = arith.addf %30, %18 : vector<1x128xf32>
    %32 = arith.addf %31, %29 : vector<1x128xf32>
    %33 = arith.negf %32 : vector<1x128xf32>
    %34 = math.exp %33 : vector<1x128xf32>
    %cst_16 = arith.constant 1.000000e+00 : f32
    %35 = vector.broadcast %cst_16 : f32 to vector<1x128xf32>
    %36 = arith.addf %35, %34 : vector<1x128xf32>
    %37 = arith.divf %35, %36 : vector<1x128xf32>
    %c0_17 = arith.constant 0 : index
    %38 = arith.index_cast %c0_i32 : i32 to index
    %c0_18 = arith.constant 0 : index
    %39 = vector.load %arg10[%c0_17, %38, %c0_18] : memref<2x8x128xf32, #tpu.memory_space<vmem>>, vector<1x1x128xf32>
    %40 = vector.shape_cast %39 : vector<1x1x128xf32> to vector<1x128xf32>
    %41 = vector.shape_cast %32 : vector<1x128xf32> to vector<1x1x128xf32>
    tpu.vector_store %arg10[%c0_17, %38, %c0_18], %41 {strides = array<i32>} : memref<2x8x128xf32, #tpu.memory_space<vmem>>, vector<1x1x128xf32>,
    %c0_19 = arith.constant 0 : index
    %42 = arith.index_cast %c0_i32 : i32 to index
    %c0_20 = arith.constant 0 : index
    %43 = vector.load %arg11[%c0_19, %42, %c0_20] : memref<2x8x128xf32, #tpu.memory_space<vmem>>, vector<1x1x128xf32>
    %44 = vector.shape_cast %43 : vector<1x1x128xf32> to vector<1x128xf32>
    %45 = vector.shape_cast %37 : vector<1x128xf32> to vector<1x1x128xf32>
    tpu.vector_store %arg11[%c0_19, %42, %c0_20], %45 {strides = array<i32>} : memref<2x8x128xf32, #tpu.memory_space<vmem>>, vector<1x1x128xf32>,
    %c1_21 = arith.constant 1 : index
    %c0_22 = arith.constant 0 : index
    %c0_23 = arith.constant 0 : index
    %46 = vector.load %arg3[%c1_21, %c0_22, %c0_23] : memref<2x128x128xf32, #tpu.memory_space<vmem>>, vector<1x128x128xf32>
    %47 = vector.shape_cast %46 : vector<1x128x128xf32> to vector<128x128xf32>
    %cst_24 = arith.constant dense<0.000000e+00> : vector<1x128xf32>
    %48 = tpu.matmul %15, %47, %cst_24 {dimension_numbers = #tpu.dot_dimension_numbers<[1], [0], [0], [1], [0, 0, 1, 1], [], []>} : vector<1x128xf32>, vector<128x128xf32>, vector<1x128xf32> -> vector<1x128xf32>
    %c2_i32_25 = arith.constant 2 : i32
    %49 = arith.muli %arg0, %c2_i32_25 : i32
    %c1_i32 = arith.constant 1 : i32
    %50 = arith.addi %49, %c1_i32 : i32
    %51 = arith.index_cast %50 : i32 to index
    %52 = arith.index_cast %c0_i32 : i32 to index
    %53 = memref.load %arg1[%51, %52] : memref<4x8xf32, #tpu.memory_space<smem>>
    %54 = vector.broadcast %53 : f32 to vector<1x128xf32>
    %55 = arith.mulf %54, %0 : vector<1x128xf32>
    %c1_26 = arith.constant 1 : index
    %56 = arith.index_cast %c0_i32 : i32 to index
    %c0_27 = arith.constant 0 : index
    %57 = vector.load %arg8[%c1_26, %56, %c0_27] : memref<2x8x128xf32, #tpu.memory_space<vmem>>, vector<1x1x128xf32>
    %58 = vector.shape_cast %57 : vector<1x1x128xf32> to vector<1x128xf32>
    %59 = arith.addf %55, %58 : vector<1x128xf32>
    %60 = arith.mulf %1, %5 : vector<1x128xf32>
    %61 = arith.addf %60, %48 : vector<1x128xf32>
    %62 = arith.addf %61, %59 : vector<1x128xf32>
    %63 = arith.negf %62 : vector<1x128xf32>
    %64 = math.exp %63 : vector<1x128xf32>
    %cst_28 = arith.constant 1.000000e+00 : f32
    %65 = vector.broadcast %cst_28 : f32 to vector<1x128xf32>
    %66 = arith.addf %65, %64 : vector<1x128xf32>
    %67 = arith.divf %65, %66 : vector<1x128xf32>
    %c1_29 = arith.constant 1 : index
    %68 = arith.index_cast %c0_i32 : i32 to index
    %c0_30 = arith.constant 0 : index
    %69 = vector.load %arg10[%c1_29, %68, %c0_30] : memref<2x8x128xf32, #tpu.memory_space<vmem>>, vector<1x1x128xf32>
    %70 = vector.shape_cast %69 : vector<1x1x128xf32> to vector<1x128xf32>
    %71 = vector.shape_cast %62 : vector<1x128xf32> to vector<1x1x128xf32>
    tpu.vector_store %arg10[%c1_29, %68, %c0_30], %71 {strides = array<i32>} : memref<2x8x128xf32, #tpu.memory_space<vmem>>, vector<1x1x128xf32>,
    %c1_31 = arith.constant 1 : index
    %72 = arith.index_cast %c0_i32 : i32 to index
    %c0_32 = arith.constant 0 : index
    %73 = vector.load %arg11[%c1_31, %72, %c0_32] : memref<2x8x128xf32, #tpu.memory_space<vmem>>, vector<1x1x128xf32>
    %74 = vector.shape_cast %73 : vector<1x1x128xf32> to vector<1x128xf32>
    %75 = vector.shape_cast %67 : vector<1x128xf32> to vector<1x1x128xf32>
    tpu.vector_store %arg11[%c1_31, %72, %c0_32], %75 {strides = array<i32>} : memref<2x8x128xf32, #tpu.memory_space<vmem>>, vector<1x1x128xf32>,
    %c1_i32_33 = arith.constant 1 : i32
    %c0_34 = arith.constant 0 : index
    %c0_35 = arith.constant 0 : index
    %c0_36 = arith.constant 0 : index
    %76 = vector.load %arg3[%c0_34, %c0_35, %c0_36] : memref<2x128x128xf32, #tpu.memory_space<vmem>>, vector<1x128x128xf32>
    %77 = vector.shape_cast %76 : vector<1x128x128xf32> to vector<128x128xf32>
    %cst_37 = arith.constant dense<0.000000e+00> : vector<1x128xf32>
    %78 = tpu.matmul %37, %77, %cst_37 {dimension_numbers = #tpu.dot_dimension_numbers<[1], [0], [0], [1], [0, 0, 1, 1], [], []>} : vector<1x128xf32>, vector<128x128xf32>, vector<1x128xf32> -> vector<1x128xf32>
    %c2_i32_38 = arith.constant 2 : i32
    %79 = arith.muli %arg0, %c2_i32_38 : i32
    %c0_i32_39 = arith.constant 0 : i32
    %80 = arith.addi %79, %c0_i32_39 : i32
    %81 = arith.index_cast %80 : i32 to index
    %82 = arith.index_cast %c1_i32_33 : i32 to index
    %83 = memref.load %arg1[%81, %82] : memref<4x8xf32, #tpu.memory_space<smem>>
    %84 = vector.broadcast %83 : f32 to vector<1x128xf32>
    %85 = arith.mulf %84, %0 : vector<1x128xf32>
    %c0_40 = arith.constant 0 : index
    %86 = arith.index_cast %c1_i32_33 : i32 to index
    %c0_41 = arith.constant 0 : index
    %87 = vector.load %arg8[%c0_40, %86, %c0_41] : memref<2x8x128xf32, #tpu.memory_space<vmem>>, vector<1x1x128xf32>
    %88 = vector.shape_cast %87 : vector<1x1x128xf32> to vector<1x128xf32>
    %89 = arith.addf %85, %88 : vector<1x128xf32>
    %90 = arith.mulf %1, %32 : vector<1x128xf32>
    %91 = arith.addf %90, %78 : vector<1x128xf32>
    %92 = arith.addf %91, %89 : vector<1x128xf32>
    %93 = arith.negf %92 : vector<1x128xf32>
    %94 = math.exp %93 : vector<1x128xf32>
    %cst_42 = arith.constant 1.000000e+00 : f32
    %95 = vector.broadcast %cst_42 : f32 to vector<1x128xf32>
    %96 = arith.addf %95, %94 : vector<1x128xf32>
    %97 = arith.divf %95, %96 : vector<1x128xf32>
    %c0_43 = arith.constant 0 : index
    %98 = arith.index_cast %c1_i32_33 : i32 to index
    %c0_44 = arith.constant 0 : index
    %99 = vector.load %arg10[%c0_43, %98, %c0_44] : memref<2x8x128xf32, #tpu.memory_space<vmem>>, vector<1x1x128xf32>
    %100 = vector.shape_cast %99 : vector<1x1x128xf32> to vector<1x128xf32>
    %101 = vector.shape_cast %92 : vector<1x128xf32> to vector<1x1x128xf32>
    tpu.vector_store %arg10[%c0_43, %98, %c0_44], %101 {strides = array<i32>} : memref<2x8x128xf32, #tpu.memory_space<vmem>>, vector<1x1x128xf32>,
    %c0_45 = arith.constant 0 : index
    %102 = arith.index_cast %c1_i32_33 : i32 to index
    %c0_46 = arith.constant 0 : index
    %103 = vector.load %arg11[%c0_45, %102, %c0_46] : memref<2x8x128xf32, #tpu.memory_space<vmem>>, vector<1x1x128xf32>
    %104 = vector.shape_cast %103 : vector<1x1x128xf32> to vector<1x128xf32>
    %105 = vector.shape_cast %97 : vector<1x128xf32> to vector<1x1x128xf32>
    tpu.vector_store %arg11[%c0_45, %102, %c0_46], %105 {strides = array<i32>} : memref<2x8x128xf32, #tpu.memory_space<vmem>>, vector<1x1x128xf32>,
    %c1_47 = arith.constant 1 : index
    %c0_48 = arith.constant 0 : index
    %c0_49 = arith.constant 0 : index
    %106 = vector.load %arg3[%c1_47, %c0_48, %c0_49] : memref<2x128x128xf32, #tpu.memory_space<vmem>>, vector<1x128x128xf32>
    %107 = vector.shape_cast %106 : vector<1x128x128xf32> to vector<128x128xf32>
    %cst_50 = arith.constant dense<0.000000e+00> : vector<1x128xf32>
    %108 = tpu.matmul %67, %107, %cst_50 {dimension_numbers = #tpu.dot_dimension_numbers<[1], [0], [0], [1], [0, 0, 1, 1], [], []>} : vector<1x128xf32>, vector<128x128xf32>, vector<1x128xf32> -> vector<1x128xf32>
    %c2_i32_51 = arith.constant 2 : i32
    %109 = arith.muli %arg0, %c2_i32_51 : i32
    %c1_i32_52 = arith.constant 1 : i32
    %110 = arith.addi %109, %c1_i32_52 : i32
    %111 = arith.index_cast %110 : i32 to index
    %112 = arith.index_cast %c1_i32_33 : i32 to index
    %113 = memref.load %arg1[%111, %112] : memref<4x8xf32, #tpu.memory_space<smem>>
    %114 = vector.broadcast %113 : f32 to vector<1x128xf32>
    %115 = arith.mulf %114, %0 : vector<1x128xf32>
    %c1_53 = arith.constant 1 : index
    %116 = arith.index_cast %c1_i32_33 : i32 to index
    %c0_54 = arith.constant 0 : index
    %117 = vector.load %arg8[%c1_53, %116, %c0_54] : memref<2x8x128xf32, #tpu.memory_space<vmem>>, vector<1x1x128xf32>
    %118 = vector.shape_cast %117 : vector<1x1x128xf32> to vector<1x128xf32>
    %119 = arith.addf %115, %118 : vector<1x128xf32>
    %120 = arith.mulf %1, %62 : vector<1x128xf32>
    %121 = arith.addf %120, %108 : vector<1x128xf32>
    %122 = arith.addf %121, %119 : vector<1x128xf32>
    %123 = arith.negf %122 : vector<1x128xf32>
    %124 = math.exp %123 : vector<1x128xf32>
    %cst_55 = arith.constant 1.000000e+00 : f32
    %125 = vector.broadcast %cst_55 : f32 to vector<1x128xf32>
    %126 = arith.addf %125, %124 : vector<1x128xf32>
    %127 = arith.divf %125, %126 : vector<1x128xf32>
    %c1_56 = arith.constant 1 : index
    %128 = arith.index_cast %c1_i32_33 : i32 to index
    %c0_57 = arith.constant 0 : index
    %129 = vector.load %arg10[%c1_56, %128, %c0_57] : memref<2x8x128xf32, #tpu.memory_space<vmem>>, vector<1x1x128xf32>
    %130 = vector.shape_cast %129 : vector<1x1x128xf32> to vector<1x128xf32>
    %131 = vector.shape_cast %122 : vector<1x128xf32> to vector<1x1x128xf32>
    tpu.vector_store %arg10[%c1_56, %128, %c0_57], %131 {strides = array<i32>} : memref<2x8x128xf32, #tpu.memory_space<vmem>>, vector<1x1x128xf32>,
    %c1_58 = arith.constant 1 : index
    %132 = arith.index_cast %c1_i32_33 : i32 to index
    %c0_59 = arith.constant 0 : index
    %133 = vector.load %arg11[%c1_58, %132, %c0_59] : memref<2x8x128xf32, #tpu.memory_space<vmem>>, vector<1x1x128xf32>
    %134 = vector.shape_cast %133 : vector<1x1x128xf32> to vector<1x128xf32>
    %135 = vector.shape_cast %127 : vector<1x128xf32> to vector<1x1x128xf32>
    tpu.vector_store %arg11[%c1_58, %132, %c0_59], %135 {strides = array<i32>} : memref<2x8x128xf32, #tpu.memory_space<vmem>>, vector<1x1x128xf32>,
    %c2_i32_60 = arith.constant 2 : i32
    %c0_61 = arith.constant 0 : index
    %c0_62 = arith.constant 0 : index
    %c0_63 = arith.constant 0 : index
    %136 = vector.load %arg3[%c0_61, %c0_62, %c0_63] : memref<2x128x128xf32, #tpu.memory_space<vmem>>, vector<1x128x128xf32>
    %137 = vector.shape_cast %136 : vector<1x128x128xf32> to vector<128x128xf32>
    %cst_64 = arith.constant dense<0.000000e+00> : vector<1x128xf32>
    %138 = tpu.matmul %97, %137, %cst_64 {dimension_numbers = #tpu.dot_dimension_numbers<[1], [0], [0], [1], [0, 0, 1, 1], [], []>} : vector<1x128xf32>, vector<128x128xf32>, vector<1x128xf32> -> vector<1x128xf32>
    %c2_i32_65 = arith.constant 2 : i32
    %139 = arith.muli %arg0, %c2_i32_65 : i32
    %c0_i32_66 = arith.constant 0 : i32
    %140 = arith.addi %139, %c0_i32_66 : i32
    %141 = arith.index_cast %140 : i32 to index
    %142 = arith.index_cast %c2_i32_60 : i32 to index
    %143 = memref.load %arg1[%141, %142] : memref<4x8xf32, #tpu.memory_space<smem>>
    %144 = vector.broadcast %143 : f32 to vector<1x128xf32>
    %145 = arith.mulf %144, %0 : vector<1x128xf32>
    %c0_67 = arith.constant 0 : index
    %146 = arith.index_cast %c2_i32_60 : i32 to index
    %c0_68 = arith.constant 0 : index
    %147 = vector.load %arg8[%c0_67, %146, %c0_68] : memref<2x8x128xf32, #tpu.memory_space<vmem>>, vector<1x1x128xf32>
    %148 = vector.shape_cast %147 : vector<1x1x128xf32> to vector<1x128xf32>
    %149 = arith.addf %145, %148 : vector<1x128xf32>
    %150 = arith.mulf %1, %92 : vector<1x128xf32>
    %151 = arith.addf %150, %138 : vector<1x128xf32>
    %152 = arith.addf %151, %149 : vector<1x128xf32>
    %153 = arith.negf %152 : vector<1x128xf32>
    %154 = math.exp %153 : vector<1x128xf32>
    %cst_69 = arith.constant 1.000000e+00 : f32
    %155 = vector.broadcast %cst_69 : f32 to vector<1x128xf32>
    %156 = arith.addf %155, %154 : vector<1x128xf32>
    %157 = arith.divf %155, %156 : vector<1x128xf32>
    %c0_70 = arith.constant 0 : index
    %158 = arith.index_cast %c2_i32_60 : i32 to index
    %c0_71 = arith.constant 0 : index
    %159 = vector.load %arg10[%c0_70, %158, %c0_71] : memref<2x8x128xf32, #tpu.memory_space<vmem>>, vector<1x1x128xf32>
    %160 = vector.shape_cast %159 : vector<1x1x128xf32> to vector<1x128xf32>
    %161 = vector.shape_cast %152 : vector<1x128xf32> to vector<1x1x128xf32>
    tpu.vector_store %arg10[%c0_70, %158, %c0_71], %161 {strides = array<i32>} : memref<2x8x128xf32, #tpu.memory_space<vmem>>, vector<1x1x128xf32>,
    %c0_72 = arith.constant 0 : index
    %162 = arith.index_cast %c2_i32_60 : i32 to index
    %c0_73 = arith.constant 0 : index
    %163 = vector.load %arg11[%c0_72, %162, %c0_73] : memref<2x8x128xf32, #tpu.memory_space<vmem>>, vector<1x1x128xf32>
    %164 = vector.shape_cast %163 : vector<1x1x128xf32> to vector<1x128xf32>
    %165 = vector.shape_cast %157 : vector<1x128xf32> to vector<1x1x128xf32>
    tpu.vector_store %arg11[%c0_72, %162, %c0_73], %165 {strides = array<i32>} : memref<2x8x128xf32, #tpu.memory_space<vmem>>, vector<1x1x128xf32>,
    %c1_74 = arith.constant 1 : index
    %c0_75 = arith.constant 0 : index
    %c0_76 = arith.constant 0 : index
    %166 = vector.load %arg3[%c1_74, %c0_75, %c0_76] : memref<2x128x128xf32, #tpu.memory_space<vmem>>, vector<1x128x128xf32>
    %167 = vector.shape_cast %166 : vector<1x128x128xf32> to vector<128x128xf32>
    %cst_77 = arith.constant dense<0.000000e+00> : vector<1x128xf32>
    %168 = tpu.matmul %127, %167, %cst_77 {dimension_numbers = #tpu.dot_dimension_numbers<[1], [0], [0], [1], [0, 0, 1, 1], [], []>} : vector<1x128xf32>, vector<128x128xf32>, vector<1x128xf32> -> vector<1x128xf32>
    %c2_i32_78 = arith.constant 2 : i32
    %169 = arith.muli %arg0, %c2_i32_78 : i32
    %c1_i32_79 = arith.constant 1 : i32
    %170 = arith.addi %169, %c1_i32_79 : i32
    %171 = arith.index_cast %170 : i32 to index
    %172 = arith.index_cast %c2_i32_60 : i32 to index
    %173 = memref.load %arg1[%171, %172] : memref<4x8xf32, #tpu.memory_space<smem>>
    %174 = vector.broadcast %173 : f32 to vector<1x128xf32>
    %175 = arith.mulf %174, %0 : vector<1x128xf32>
    %c1_80 = arith.constant 1 : index
    %176 = arith.index_cast %c2_i32_60 : i32 to index
    %c0_81 = arith.constant 0 : index
    %177 = vector.load %arg8[%c1_80, %176, %c0_81] : memref<2x8x128xf32, #tpu.memory_space<vmem>>, vector<1x1x128xf32>
    %178 = vector.shape_cast %177 : vector<1x1x128xf32> to vector<1x128xf32>
    %179 = arith.addf %175, %178 : vector<1x128xf32>
    %180 = arith.mulf %1, %122 : vector<1x128xf32>
    %181 = arith.addf %180, %168 : vector<1x128xf32>
    %182 = arith.addf %181, %179 : vector<1x128xf32>
    %183 = arith.negf %182 : vector<1x128xf32>
    %184 = math.exp %183 : vector<1x128xf32>
    %cst_82 = arith.constant 1.000000e+00 : f32
    %185 = vector.broadcast %cst_82 : f32 to vector<1x128xf32>
    %186 = arith.addf %185, %184 : vector<1x128xf32>
    %187 = arith.divf %185, %186 : vector<1x128xf32>
    %c1_83 = arith.constant 1 : index
    %188 = arith.index_cast %c2_i32_60 : i32 to index
    %c0_84 = arith.constant 0 : index
    %189 = vector.load %arg10[%c1_83, %188, %c0_84] : memref<2x8x128xf32, #tpu.memory_space<vmem>>, vector<1x1x128xf32>
    %190 = vector.shape_cast %189 : vector<1x1x128xf32> to vector<1x128xf32>
    %191 = vector.shape_cast %182 : vector<1x128xf32> to vector<1x1x128xf32>
    tpu.vector_store %arg10[%c1_83, %188, %c0_84], %191 {strides = array<i32>} : memref<2x8x128xf32, #tpu.memory_space<vmem>>, vector<1x1x128xf32>,
    %c1_85 = arith.constant 1 : index
    %192 = arith.index_cast %c2_i32_60 : i32 to index
    %c0_86 = arith.constant 0 : index
    %193 = vector.load %arg11[%c1_85, %192, %c0_86] : memref<2x8x128xf32, #tpu.memory_space<vmem>>, vector<1x1x128xf32>
    %194 = vector.shape_cast %193 : vector<1x1x128xf32> to vector<1x128xf32>
    %195 = vector.shape_cast %187 : vector<1x128xf32> to vector<1x1x128xf32>
    tpu.vector_store %arg11[%c1_85, %192, %c0_86], %195 {strides = array<i32>} : memref<2x8x128xf32, #tpu.memory_space<vmem>>, vector<1x1x128xf32>,
    %c3_i32 = arith.constant 3 : i32
    %c0_87 = arith.constant 0 : index
    %c0_88 = arith.constant 0 : index
    %c0_89 = arith.constant 0 : index
    %196 = vector.load %arg3[%c0_87, %c0_88, %c0_89] : memref<2x128x128xf32, #tpu.memory_space<vmem>>, vector<1x128x128xf32>
    %197 = vector.shape_cast %196 : vector<1x128x128xf32> to vector<128x128xf32>
    %cst_90 = arith.constant dense<0.000000e+00> : vector<1x128xf32>
    %198 = tpu.matmul %157, %197, %cst_90 {dimension_numbers = #tpu.dot_dimension_numbers<[1], [0], [0], [1], [0, 0, 1, 1], [], []>} : vector<1x128xf32>, vector<128x128xf32>, vector<1x128xf32> -> vector<1x128xf32>
    %c2_i32_91 = arith.constant 2 : i32
    %199 = arith.muli %arg0, %c2_i32_91 : i32
    %c0_i32_92 = arith.constant 0 : i32
    %200 = arith.addi %199, %c0_i32_92 : i32
    %201 = arith.index_cast %200 : i32 to index
    %202 = arith.index_cast %c3_i32 : i32 to index
    %203 = memref.load %arg1[%201, %202] : memref<4x8xf32, #tpu.memory_space<smem>>
    %204 = vector.broadcast %203 : f32 to vector<1x128xf32>
    %205 = arith.mulf %204, %0 : vector<1x128xf32>
    %c0_93 = arith.constant 0 : index
    %206 = arith.index_cast %c3_i32 : i32 to index
    %c0_94 = arith.constant 0 : index
    %207 = vector.load %arg8[%c0_93, %206, %c0_94] : memref<2x8x128xf32, #tpu.memory_space<vmem>>, vector<1x1x128xf32>
    %208 = vector.shape_cast %207 : vector<1x1x128xf32> to vector<1x128xf32>
    %209 = arith.addf %205, %208 : vector<1x128xf32>
    %210 = arith.mulf %1, %152 : vector<1x128xf32>
    %211 = arith.addf %210, %198 : vector<1x128xf32>
    %212 = arith.addf %211, %209 : vector<1x128xf32>
    %213 = arith.negf %212 : vector<1x128xf32>
    %214 = math.exp %213 : vector<1x128xf32>
    %cst_95 = arith.constant 1.000000e+00 : f32
    %215 = vector.broadcast %cst_95 : f32 to vector<1x128xf32>
    %216 = arith.addf %215, %214 : vector<1x128xf32>
    %217 = arith.divf %215, %216 : vector<1x128xf32>
    %c0_96 = arith.constant 0 : index
    %218 = arith.index_cast %c3_i32 : i32 to index
    %c0_97 = arith.constant 0 : index
    %219 = vector.load %arg10[%c0_96, %218, %c0_97] : memref<2x8x128xf32, #tpu.memory_space<vmem>>, vector<1x1x128xf32>
    %220 = vector.shape_cast %219 : vector<1x1x128xf32> to vector<1x128xf32>
    %221 = vector.shape_cast %212 : vector<1x128xf32> to vector<1x1x128xf32>
    tpu.vector_store %arg10[%c0_96, %218, %c0_97], %221 {strides = array<i32>} : memref<2x8x128xf32, #tpu.memory_space<vmem>>, vector<1x1x128xf32>,
    %c0_98 = arith.constant 0 : index
    %222 = arith.index_cast %c3_i32 : i32 to index
    %c0_99 = arith.constant 0 : index
    %223 = vector.load %arg11[%c0_98, %222, %c0_99] : memref<2x8x128xf32, #tpu.memory_space<vmem>>, vector<1x1x128xf32>
    %224 = vector.shape_cast %223 : vector<1x1x128xf32> to vector<1x128xf32>
    %225 = vector.shape_cast %217 : vector<1x128xf32> to vector<1x1x128xf32>
    tpu.vector_store %arg11[%c0_98, %222, %c0_99], %225 {strides = array<i32>} : memref<2x8x128xf32, #tpu.memory_space<vmem>>, vector<1x1x128xf32>,
    %c1_100 = arith.constant 1 : index
    %c0_101 = arith.constant 0 : index
    %c0_102 = arith.constant 0 : index
    %226 = vector.load %arg3[%c1_100, %c0_101, %c0_102] : memref<2x128x128xf32, #tpu.memory_space<vmem>>, vector<1x128x128xf32>
    %227 = vector.shape_cast %226 : vector<1x128x128xf32> to vector<128x128xf32>
    %cst_103 = arith.constant dense<0.000000e+00> : vector<1x128xf32>
    %228 = tpu.matmul %187, %227, %cst_103 {dimension_numbers = #tpu.dot_dimension_numbers<[1], [0], [0], [1], [0, 0, 1, 1], [], []>} : vector<1x128xf32>, vector<128x128xf32>, vector<1x128xf32> -> vector<1x128xf32>
    %c2_i32_104 = arith.constant 2 : i32
    %229 = arith.muli %arg0, %c2_i32_104 : i32
    %c1_i32_105 = arith.constant 1 : i32
    %230 = arith.addi %229, %c1_i32_105 : i32
    %231 = arith.index_cast %230 : i32 to index
    %232 = arith.index_cast %c3_i32 : i32 to index
    %233 = memref.load %arg1[%231, %232] : memref<4x8xf32, #tpu.memory_space<smem>>
    %234 = vector.broadcast %233 : f32 to vector<1x128xf32>
    %235 = arith.mulf %234, %0 : vector<1x128xf32>
    %c1_106 = arith.constant 1 : index
    %236 = arith.index_cast %c3_i32 : i32 to index
    %c0_107 = arith.constant 0 : index
    %237 = vector.load %arg8[%c1_106, %236, %c0_107] : memref<2x8x128xf32, #tpu.memory_space<vmem>>, vector<1x1x128xf32>
    %238 = vector.shape_cast %237 : vector<1x1x128xf32> to vector<1x128xf32>
    %239 = arith.addf %235, %238 : vector<1x128xf32>
    %240 = arith.mulf %1, %182 : vector<1x128xf32>
    %241 = arith.addf %240, %228 : vector<1x128xf32>
    %242 = arith.addf %241, %239 : vector<1x128xf32>
    %243 = arith.negf %242 : vector<1x128xf32>
    %244 = math.exp %243 : vector<1x128xf32>
    %cst_108 = arith.constant 1.000000e+00 : f32
    %245 = vector.broadcast %cst_108 : f32 to vector<1x128xf32>
    %246 = arith.addf %245, %244 : vector<1x128xf32>
    %247 = arith.divf %245, %246 : vector<1x128xf32>
    %c1_109 = arith.constant 1 : index
    %248 = arith.index_cast %c3_i32 : i32 to index
    %c0_110 = arith.constant 0 : index
    %249 = vector.load %arg10[%c1_109, %248, %c0_110] : memref<2x8x128xf32, #tpu.memory_space<vmem>>, vector<1x1x128xf32>
    %250 = vector.shape_cast %249 : vector<1x1x128xf32> to vector<1x128xf32>
    %251 = vector.shape_cast %242 : vector<1x128xf32> to vector<1x1x128xf32>
    tpu.vector_store %arg10[%c1_109, %248, %c0_110], %251 {strides = array<i32>} : memref<2x8x128xf32, #tpu.memory_space<vmem>>, vector<1x1x128xf32>,
    %c1_111 = arith.constant 1 : index
    %252 = arith.index_cast %c3_i32 : i32 to index
    %c0_112 = arith.constant 0 : index
    %253 = vector.load %arg11[%c1_111, %252, %c0_112] : memref<2x8x128xf32, #tpu.memory_space<vmem>>, vector<1x1x128xf32>
    %254 = vector.shape_cast %253 : vector<1x1x128xf32> to vector<1x128xf32>
    %255 = vector.shape_cast %247 : vector<1x128xf32> to vector<1x1x128xf32>
    tpu.vector_store %arg11[%c1_111, %252, %c0_112], %255 {strides = array<i32>} : memref<2x8x128xf32, #tpu.memory_space<vmem>>, vector<1x1x128xf32>,
    %c4_i32 = arith.constant 4 : i32
    %c0_113 = arith.constant 0 : index
    %c0_114 = arith.constant 0 : index
    %c0_115 = arith.constant 0 : index
    %256 = vector.load %arg3[%c0_113, %c0_114, %c0_115] : memref<2x128x128xf32, #tpu.memory_space<vmem>>, vector<1x128x128xf32>
    %257 = vector.shape_cast %256 : vector<1x128x128xf32> to vector<128x128xf32>
    %cst_116 = arith.constant dense<0.000000e+00> : vector<1x128xf32>
    %258 = tpu.matmul %217, %257, %cst_116 {dimension_numbers = #tpu.dot_dimension_numbers<[1], [0], [0], [1], [0, 0, 1, 1], [], []>} : vector<1x128xf32>, vector<128x128xf32>, vector<1x128xf32> -> vector<1x128xf32>
    %c2_i32_117 = arith.constant 2 : i32
    %259 = arith.muli %arg0, %c2_i32_117 : i32
    %c0_i32_118 = arith.constant 0 : i32
    %260 = arith.addi %259, %c0_i32_118 : i32
    %261 = arith.index_cast %260 : i32 to index
    %262 = arith.index_cast %c4_i32 : i32 to index
    %263 = memref.load %arg1[%261, %262] : memref<4x8xf32, #tpu.memory_space<smem>>
    %264 = vector.broadcast %263 : f32 to vector<1x128xf32>
    %265 = arith.mulf %264, %0 : vector<1x128xf32>
    %c0_119 = arith.constant 0 : index
    %266 = arith.index_cast %c4_i32 : i32 to index
    %c0_120 = arith.constant 0 : index
    %267 = vector.load %arg8[%c0_119, %266, %c0_120] : memref<2x8x128xf32, #tpu.memory_space<vmem>>, vector<1x1x128xf32>
    %268 = vector.shape_cast %267 : vector<1x1x128xf32> to vector<1x128xf32>
    %269 = arith.addf %265, %268 : vector<1x128xf32>
    %270 = arith.mulf %1, %212 : vector<1x128xf32>
    %271 = arith.addf %270, %258 : vector<1x128xf32>
    %272 = arith.addf %271, %269 : vector<1x128xf32>
    %273 = arith.negf %272 : vector<1x128xf32>
    %274 = math.exp %273 : vector<1x128xf32>
    %cst_121 = arith.constant 1.000000e+00 : f32
    %275 = vector.broadcast %cst_121 : f32 to vector<1x128xf32>
    %276 = arith.addf %275, %274 : vector<1x128xf32>
    %277 = arith.divf %275, %276 : vector<1x128xf32>
    %c0_122 = arith.constant 0 : index
    %278 = arith.index_cast %c4_i32 : i32 to index
    %c0_123 = arith.constant 0 : index
    %279 = vector.load %arg10[%c0_122, %278, %c0_123] : memref<2x8x128xf32, #tpu.memory_space<vmem>>, vector<1x1x128xf32>
    %280 = vector.shape_cast %279 : vector<1x1x128xf32> to vector<1x128xf32>
    %281 = vector.shape_cast %272 : vector<1x128xf32> to vector<1x1x128xf32>
    tpu.vector_store %arg10[%c0_122, %278, %c0_123], %281 {strides = array<i32>} : memref<2x8x128xf32, #tpu.memory_space<vmem>>, vector<1x1x128xf32>,
    %c0_124 = arith.constant 0 : index
    %282 = arith.index_cast %c4_i32 : i32 to index
    %c0_125 = arith.constant 0 : index
    %283 = vector.load %arg11[%c0_124, %282, %c0_125] : memref<2x8x128xf32, #tpu.memory_space<vmem>>, vector<1x1x128xf32>
    %284 = vector.shape_cast %283 : vector<1x1x128xf32> to vector<1x128xf32>
    %285 = vector.shape_cast %277 : vector<1x128xf32> to vector<1x1x128xf32>
    tpu.vector_store %arg11[%c0_124, %282, %c0_125], %285 {strides = array<i32>} : memref<2x8x128xf32, #tpu.memory_space<vmem>>, vector<1x1x128xf32>,
    %c1_126 = arith.constant 1 : index
    %c0_127 = arith.constant 0 : index
    %c0_128 = arith.constant 0 : index
    %286 = vector.load %arg3[%c1_126, %c0_127, %c0_128] : memref<2x128x128xf32, #tpu.memory_space<vmem>>, vector<1x128x128xf32>
    %287 = vector.shape_cast %286 : vector<1x128x128xf32> to vector<128x128xf32>
    %cst_129 = arith.constant dense<0.000000e+00> : vector<1x128xf32>
    %288 = tpu.matmul %247, %287, %cst_129 {dimension_numbers = #tpu.dot_dimension_numbers<[1], [0], [0], [1], [0, 0, 1, 1], [], []>} : vector<1x128xf32>, vector<128x128xf32>, vector<1x128xf32> -> vector<1x128xf32>
    %c2_i32_130 = arith.constant 2 : i32
    %289 = arith.muli %arg0, %c2_i32_130 : i32
    %c1_i32_131 = arith.constant 1 : i32
    %290 = arith.addi %289, %c1_i32_131 : i32
    %291 = arith.index_cast %290 : i32 to index
    %292 = arith.index_cast %c4_i32 : i32 to index
    %293 = memref.load %arg1[%291, %292] : memref<4x8xf32, #tpu.memory_space<smem>>
    %294 = vector.broadcast %293 : f32 to vector<1x128xf32>
    %295 = arith.mulf %294, %0 : vector<1x128xf32>
    %c1_132 = arith.constant 1 : index
    %296 = arith.index_cast %c4_i32 : i32 to index
    %c0_133 = arith.constant 0 : index
    %297 = vector.load %arg8[%c1_132, %296, %c0_133] : memref<2x8x128xf32, #tpu.memory_space<vmem>>, vector<1x1x128xf32>
    %298 = vector.shape_cast %297 : vector<1x1x128xf32> to vector<1x128xf32>
    %299 = arith.addf %295, %298 : vector<1x128xf32>
    %300 = arith.mulf %1, %242 : vector<1x128xf32>
    %301 = arith.addf %300, %288 : vector<1x128xf32>
    %302 = arith.addf %301, %299 : vector<1x128xf32>
    %303 = arith.negf %302 : vector<1x128xf32>
    %304 = math.exp %303 : vector<1x128xf32>
    %cst_134 = arith.constant 1.000000e+00 : f32
    %305 = vector.broadcast %cst_134 : f32 to vector<1x128xf32>
    %306 = arith.addf %305, %304 : vector<1x128xf32>
    %307 = arith.divf %305, %306 : vector<1x128xf32>
    %c1_135 = arith.constant 1 : index
    %308 = arith.index_cast %c4_i32 : i32 to index
    %c0_136 = arith.constant 0 : index
    %309 = vector.load %arg10[%c1_135, %308, %c0_136] : memref<2x8x128xf32, #tpu.memory_space<vmem>>, vector<1x1x128xf32>
    %310 = vector.shape_cast %309 : vector<1x1x128xf32> to vector<1x128xf32>
    %311 = vector.shape_cast %302 : vector<1x128xf32> to vector<1x1x128xf32>
    tpu.vector_store %arg10[%c1_135, %308, %c0_136], %311 {strides = array<i32>} : memref<2x8x128xf32, #tpu.memory_space<vmem>>, vector<1x1x128xf32>,
    %c1_137 = arith.constant 1 : index
    %312 = arith.index_cast %c4_i32 : i32 to index
    %c0_138 = arith.constant 0 : index
    %313 = vector.load %arg11[%c1_137, %312, %c0_138] : memref<2x8x128xf32, #tpu.memory_space<vmem>>, vector<1x1x128xf32>
    %314 = vector.shape_cast %313 : vector<1x1x128xf32> to vector<1x128xf32>
    %315 = vector.shape_cast %307 : vector<1x128xf32> to vector<1x1x128xf32>
    tpu.vector_store %arg11[%c1_137, %312, %c0_138], %315 {strides = array<i32>} : memref<2x8x128xf32, #tpu.memory_space<vmem>>, vector<1x1x128xf32>,
    %c5_i32 = arith.constant 5 : i32
    %c0_139 = arith.constant 0 : index
    %c0_140 = arith.constant 0 : index
    %c0_141 = arith.constant 0 : index
    %316 = vector.load %arg3[%c0_139, %c0_140, %c0_141] : memref<2x128x128xf32, #tpu.memory_space<vmem>>, vector<1x128x128xf32>
    %317 = vector.shape_cast %316 : vector<1x128x128xf32> to vector<128x128xf32>
    %cst_142 = arith.constant dense<0.000000e+00> : vector<1x128xf32>
    %318 = tpu.matmul %277, %317, %cst_142 {dimension_numbers = #tpu.dot_dimension_numbers<[1], [0], [0], [1], [0, 0, 1, 1], [], []>} : vector<1x128xf32>, vector<128x128xf32>, vector<1x128xf32> -> vector<1x128xf32>
    %c2_i32_143 = arith.constant 2 : i32
    %319 = arith.muli %arg0, %c2_i32_143 : i32
    %c0_i32_144 = arith.constant 0 : i32
    %320 = arith.addi %319, %c0_i32_144 : i32
    %321 = arith.index_cast %320 : i32 to index
    %322 = arith.index_cast %c5_i32 : i32 to index
    %323 = memref.load %arg1[%321, %322] : memref<4x8xf32, #tpu.memory_space<smem>>
    %324 = vector.broadcast %323 : f32 to vector<1x128xf32>
    %325 = arith.mulf %324, %0 : vector<1x128xf32>
    %c0_145 = arith.constant 0 : index
    %326 = arith.index_cast %c5_i32 : i32 to index
    %c0_146 = arith.constant 0 : index
    %327 = vector.load %arg8[%c0_145, %326, %c0_146] : memref<2x8x128xf32, #tpu.memory_space<vmem>>, vector<1x1x128xf32>
    %328 = vector.shape_cast %327 : vector<1x1x128xf32> to vector<1x128xf32>
    %329 = arith.addf %325, %328 : vector<1x128xf32>
    %330 = arith.mulf %1, %272 : vector<1x128xf32>
    %331 = arith.addf %330, %318 : vector<1x128xf32>
    %332 = arith.addf %331, %329 : vector<1x128xf32>
    %333 = arith.negf %332 : vector<1x128xf32>
    %334 = math.exp %333 : vector<1x128xf32>
    %cst_147 = arith.constant 1.000000e+00 : f32
    %335 = vector.broadcast %cst_147 : f32 to vector<1x128xf32>
    %336 = arith.addf %335, %334 : vector<1x128xf32>
    %337 = arith.divf %335, %336 : vector<1x128xf32>
    %c0_148 = arith.constant 0 : index
    %338 = arith.index_cast %c5_i32 : i32 to index
    %c0_149 = arith.constant 0 : index
    %339 = vector.load %arg10[%c0_148, %338, %c0_149] : memref<2x8x128xf32, #tpu.memory_space<vmem>>, vector<1x1x128xf32>
    %340 = vector.shape_cast %339 : vector<1x1x128xf32> to vector<1x128xf32>
    %341 = vector.shape_cast %332 : vector<1x128xf32> to vector<1x1x128xf32>
    tpu.vector_store %arg10[%c0_148, %338, %c0_149], %341 {strides = array<i32>} : memref<2x8x128xf32, #tpu.memory_space<vmem>>, vector<1x1x128xf32>,
    %c0_150 = arith.constant 0 : index
    %342 = arith.index_cast %c5_i32 : i32 to index
    %c0_151 = arith.constant 0 : index
    %343 = vector.load %arg11[%c0_150, %342, %c0_151] : memref<2x8x128xf32, #tpu.memory_space<vmem>>, vector<1x1x128xf32>
    %344 = vector.shape_cast %343 : vector<1x1x128xf32> to vector<1x128xf32>
    %345 = vector.shape_cast %337 : vector<1x128xf32> to vector<1x1x128xf32>
    tpu.vector_store %arg11[%c0_150, %342, %c0_151], %345 {strides = array<i32>} : memref<2x8x128xf32, #tpu.memory_space<vmem>>, vector<1x1x128xf32>,
    %c1_152 = arith.constant 1 : index
    %c0_153 = arith.constant 0 : index
    %c0_154 = arith.constant 0 : index
    %346 = vector.load %arg3[%c1_152, %c0_153, %c0_154] : memref<2x128x128xf32, #tpu.memory_space<vmem>>, vector<1x128x128xf32>
    %347 = vector.shape_cast %346 : vector<1x128x128xf32> to vector<128x128xf32>
    %cst_155 = arith.constant dense<0.000000e+00> : vector<1x128xf32>
    %348 = tpu.matmul %307, %347, %cst_155 {dimension_numbers = #tpu.dot_dimension_numbers<[1], [0], [0], [1], [0, 0, 1, 1], [], []>} : vector<1x128xf32>, vector<128x128xf32>, vector<1x128xf32> -> vector<1x128xf32>
    %c2_i32_156 = arith.constant 2 : i32
    %349 = arith.muli %arg0, %c2_i32_156 : i32
    %c1_i32_157 = arith.constant 1 : i32
    %350 = arith.addi %349, %c1_i32_157 : i32
    %351 = arith.index_cast %350 : i32 to index
    %352 = arith.index_cast %c5_i32 : i32 to index
    %353 = memref.load %arg1[%351, %352] : memref<4x8xf32, #tpu.memory_space<smem>>
    %354 = vector.broadcast %353 : f32 to vector<1x128xf32>
    %355 = arith.mulf %354, %0 : vector<1x128xf32>
    %c1_158 = arith.constant 1 : index
    %356 = arith.index_cast %c5_i32 : i32 to index
    %c0_159 = arith.constant 0 : index
    %357 = vector.load %arg8[%c1_158, %356, %c0_159] : memref<2x8x128xf32, #tpu.memory_space<vmem>>, vector<1x1x128xf32>
    %358 = vector.shape_cast %357 : vector<1x1x128xf32> to vector<1x128xf32>
    %359 = arith.addf %355, %358 : vector<1x128xf32>
    %360 = arith.mulf %1, %302 : vector<1x128xf32>
    %361 = arith.addf %360, %348 : vector<1x128xf32>
    %362 = arith.addf %361, %359 : vector<1x128xf32>
    %363 = arith.negf %362 : vector<1x128xf32>
    %364 = math.exp %363 : vector<1x128xf32>
    %cst_160 = arith.constant 1.000000e+00 : f32
    %365 = vector.broadcast %cst_160 : f32 to vector<1x128xf32>
    %366 = arith.addf %365, %364 : vector<1x128xf32>
    %367 = arith.divf %365, %366 : vector<1x128xf32>
    %c1_161 = arith.constant 1 : index
    %368 = arith.index_cast %c5_i32 : i32 to index
    %c0_162 = arith.constant 0 : index
    %369 = vector.load %arg10[%c1_161, %368, %c0_162] : memref<2x8x128xf32, #tpu.memory_space<vmem>>, vector<1x1x128xf32>
    %370 = vector.shape_cast %369 : vector<1x1x128xf32> to vector<1x128xf32>
    %371 = vector.shape_cast %362 : vector<1x128xf32> to vector<1x1x128xf32>
    tpu.vector_store %arg10[%c1_161, %368, %c0_162], %371 {strides = array<i32>} : memref<2x8x128xf32, #tpu.memory_space<vmem>>, vector<1x1x128xf32>,
    %c1_163 = arith.constant 1 : index
    %372 = arith.index_cast %c5_i32 : i32 to index
    %c0_164 = arith.constant 0 : index
    %373 = vector.load %arg11[%c1_163, %372, %c0_164] : memref<2x8x128xf32, #tpu.memory_space<vmem>>, vector<1x1x128xf32>
    %374 = vector.shape_cast %373 : vector<1x1x128xf32> to vector<1x128xf32>
    %375 = vector.shape_cast %367 : vector<1x128xf32> to vector<1x1x128xf32>
    tpu.vector_store %arg11[%c1_163, %372, %c0_164], %375 {strides = array<i32>} : memref<2x8x128xf32, #tpu.memory_space<vmem>>, vector<1x1x128xf32>,
    %c6_i32 = arith.constant 6 : i32
    %c0_165 = arith.constant 0 : index
    %c0_166 = arith.constant 0 : index
    %c0_167 = arith.constant 0 : index
    %376 = vector.load %arg3[%c0_165, %c0_166, %c0_167] : memref<2x128x128xf32, #tpu.memory_space<vmem>>, vector<1x128x128xf32>
    %377 = vector.shape_cast %376 : vector<1x128x128xf32> to vector<128x128xf32>
    %cst_168 = arith.constant dense<0.000000e+00> : vector<1x128xf32>
    %378 = tpu.matmul %337, %377, %cst_168 {dimension_numbers = #tpu.dot_dimension_numbers<[1], [0], [0], [1], [0, 0, 1, 1], [], []>} : vector<1x128xf32>, vector<128x128xf32>, vector<1x128xf32> -> vector<1x128xf32>
    %c2_i32_169 = arith.constant 2 : i32
    %379 = arith.muli %arg0, %c2_i32_169 : i32
    %c0_i32_170 = arith.constant 0 : i32
    %380 = arith.addi %379, %c0_i32_170 : i32
    %381 = arith.index_cast %380 : i32 to index
    %382 = arith.index_cast %c6_i32 : i32 to index
    %383 = memref.load %arg1[%381, %382] : memref<4x8xf32, #tpu.memory_space<smem>>
    %384 = vector.broadcast %383 : f32 to vector<1x128xf32>
    %385 = arith.mulf %384, %0 : vector<1x128xf32>
    %c0_171 = arith.constant 0 : index
    %386 = arith.index_cast %c6_i32 : i32 to index
    %c0_172 = arith.constant 0 : index
    %387 = vector.load %arg8[%c0_171, %386, %c0_172] : memref<2x8x128xf32, #tpu.memory_space<vmem>>, vector<1x1x128xf32>
    %388 = vector.shape_cast %387 : vector<1x1x128xf32> to vector<1x128xf32>
    %389 = arith.addf %385, %388 : vector<1x128xf32>
    %390 = arith.mulf %1, %332 : vector<1x128xf32>
    %391 = arith.addf %390, %378 : vector<1x128xf32>
    %392 = arith.addf %391, %389 : vector<1x128xf32>
    %393 = arith.negf %392 : vector<1x128xf32>
    %394 = math.exp %393 : vector<1x128xf32>
    %cst_173 = arith.constant 1.000000e+00 : f32
    %395 = vector.broadcast %cst_173 : f32 to vector<1x128xf32>
    %396 = arith.addf %395, %394 : vector<1x128xf32>
    %397 = arith.divf %395, %396 : vector<1x128xf32>
    %c0_174 = arith.constant 0 : index
    %398 = arith.index_cast %c6_i32 : i32 to index
    %c0_175 = arith.constant 0 : index
    %399 = vector.load %arg10[%c0_174, %398, %c0_175] : memref<2x8x128xf32, #tpu.memory_space<vmem>>, vector<1x1x128xf32>
    %400 = vector.shape_cast %399 : vector<1x1x128xf32> to vector<1x128xf32>
    %401 = vector.shape_cast %392 : vector<1x128xf32> to vector<1x1x128xf32>
    tpu.vector_store %arg10[%c0_174, %398, %c0_175], %401 {strides = array<i32>} : memref<2x8x128xf32, #tpu.memory_space<vmem>>, vector<1x1x128xf32>,
    %c0_176 = arith.constant 0 : index
    %402 = arith.index_cast %c6_i32 : i32 to index
    %c0_177 = arith.constant 0 : index
    %403 = vector.load %arg11[%c0_176, %402, %c0_177] : memref<2x8x128xf32, #tpu.memory_space<vmem>>, vector<1x1x128xf32>
    %404 = vector.shape_cast %403 : vector<1x1x128xf32> to vector<1x128xf32>
    %405 = vector.shape_cast %397 : vector<1x128xf32> to vector<1x1x128xf32>
    tpu.vector_store %arg11[%c0_176, %402, %c0_177], %405 {strides = array<i32>} : memref<2x8x128xf32, #tpu.memory_space<vmem>>, vector<1x1x128xf32>,
    %c1_178 = arith.constant 1 : index
    %c0_179 = arith.constant 0 : index
    %c0_180 = arith.constant 0 : index
    %406 = vector.load %arg3[%c1_178, %c0_179, %c0_180] : memref<2x128x128xf32, #tpu.memory_space<vmem>>, vector<1x128x128xf32>
    %407 = vector.shape_cast %406 : vector<1x128x128xf32> to vector<128x128xf32>
    %cst_181 = arith.constant dense<0.000000e+00> : vector<1x128xf32>
    %408 = tpu.matmul %367, %407, %cst_181 {dimension_numbers = #tpu.dot_dimension_numbers<[1], [0], [0], [1], [0, 0, 1, 1], [], []>} : vector<1x128xf32>, vector<128x128xf32>, vector<1x128xf32> -> vector<1x128xf32>
    %c2_i32_182 = arith.constant 2 : i32
    %409 = arith.muli %arg0, %c2_i32_182 : i32
    %c1_i32_183 = arith.constant 1 : i32
    %410 = arith.addi %409, %c1_i32_183 : i32
    %411 = arith.index_cast %410 : i32 to index
    %412 = arith.index_cast %c6_i32 : i32 to index
    %413 = memref.load %arg1[%411, %412] : memref<4x8xf32, #tpu.memory_space<smem>>
    %414 = vector.broadcast %413 : f32 to vector<1x128xf32>
    %415 = arith.mulf %414, %0 : vector<1x128xf32>
    %c1_184 = arith.constant 1 : index
    %416 = arith.index_cast %c6_i32 : i32 to index
    %c0_185 = arith.constant 0 : index
    %417 = vector.load %arg8[%c1_184, %416, %c0_185] : memref<2x8x128xf32, #tpu.memory_space<vmem>>, vector<1x1x128xf32>
    %418 = vector.shape_cast %417 : vector<1x1x128xf32> to vector<1x128xf32>
    %419 = arith.addf %415, %418 : vector<1x128xf32>
    %420 = arith.mulf %1, %362 : vector<1x128xf32>
    %421 = arith.addf %420, %408 : vector<1x128xf32>
    %422 = arith.addf %421, %419 : vector<1x128xf32>
    %423 = arith.negf %422 : vector<1x128xf32>
    %424 = math.exp %423 : vector<1x128xf32>
    %cst_186 = arith.constant 1.000000e+00 : f32
    %425 = vector.broadcast %cst_186 : f32 to vector<1x128xf32>
    %426 = arith.addf %425, %424 : vector<1x128xf32>
    %427 = arith.divf %425, %426 : vector<1x128xf32>
    %c1_187 = arith.constant 1 : index
    %428 = arith.index_cast %c6_i32 : i32 to index
    %c0_188 = arith.constant 0 : index
    %429 = vector.load %arg10[%c1_187, %428, %c0_188] : memref<2x8x128xf32, #tpu.memory_space<vmem>>, vector<1x1x128xf32>
    %430 = vector.shape_cast %429 : vector<1x1x128xf32> to vector<1x128xf32>
    %431 = vector.shape_cast %422 : vector<1x128xf32> to vector<1x1x128xf32>
    tpu.vector_store %arg10[%c1_187, %428, %c0_188], %431 {strides = array<i32>} : memref<2x8x128xf32, #tpu.memory_space<vmem>>, vector<1x1x128xf32>,
    %c1_189 = arith.constant 1 : index
    %432 = arith.index_cast %c6_i32 : i32 to index
    %c0_190 = arith.constant 0 : index
    %433 = vector.load %arg11[%c1_189, %432, %c0_190] : memref<2x8x128xf32, #tpu.memory_space<vmem>>, vector<1x1x128xf32>
    %434 = vector.shape_cast %433 : vector<1x1x128xf32> to vector<1x128xf32>
    %435 = vector.shape_cast %427 : vector<1x128xf32> to vector<1x1x128xf32>
    tpu.vector_store %arg11[%c1_189, %432, %c0_190], %435 {strides = array<i32>} : memref<2x8x128xf32, #tpu.memory_space<vmem>>, vector<1x1x128xf32>,
    %c7_i32 = arith.constant 7 : i32
    %c0_191 = arith.constant 0 : index
    %c0_192 = arith.constant 0 : index
    %c0_193 = arith.constant 0 : index
    %436 = vector.load %arg3[%c0_191, %c0_192, %c0_193] : memref<2x128x128xf32, #tpu.memory_space<vmem>>, vector<1x128x128xf32>
    %437 = vector.shape_cast %436 : vector<1x128x128xf32> to vector<128x128xf32>
    %cst_194 = arith.constant dense<0.000000e+00> : vector<1x128xf32>
    %438 = tpu.matmul %397, %437, %cst_194 {dimension_numbers = #tpu.dot_dimension_numbers<[1], [0], [0], [1], [0, 0, 1, 1], [], []>} : vector<1x128xf32>, vector<128x128xf32>, vector<1x128xf32> -> vector<1x128xf32>
    %c2_i32_195 = arith.constant 2 : i32
    %439 = arith.muli %arg0, %c2_i32_195 : i32
    %c0_i32_196 = arith.constant 0 : i32
    %440 = arith.addi %439, %c0_i32_196 : i32
    %441 = arith.index_cast %440 : i32 to index
    %442 = arith.index_cast %c7_i32 : i32 to index
    %443 = memref.load %arg1[%441, %442] : memref<4x8xf32, #tpu.memory_space<smem>>
    %444 = vector.broadcast %443 : f32 to vector<1x128xf32>
    %445 = arith.mulf %444, %0 : vector<1x128xf32>
    %c0_197 = arith.constant 0 : index
    %446 = arith.index_cast %c7_i32 : i32 to index
    %c0_198 = arith.constant 0 : index
    %447 = vector.load %arg8[%c0_197, %446, %c0_198] : memref<2x8x128xf32, #tpu.memory_space<vmem>>, vector<1x1x128xf32>
    %448 = vector.shape_cast %447 : vector<1x1x128xf32> to vector<1x128xf32>
    %449 = arith.addf %445, %448 : vector<1x128xf32>
    %450 = arith.mulf %1, %392 : vector<1x128xf32>
    %451 = arith.addf %450, %438 : vector<1x128xf32>
    %452 = arith.addf %451, %449 : vector<1x128xf32>
    %453 = arith.negf %452 : vector<1x128xf32>
    %454 = math.exp %453 : vector<1x128xf32>
    %cst_199 = arith.constant 1.000000e+00 : f32
    %455 = vector.broadcast %cst_199 : f32 to vector<1x128xf32>
    %456 = arith.addf %455, %454 : vector<1x128xf32>
    %457 = arith.divf %455, %456 : vector<1x128xf32>
    %c0_200 = arith.constant 0 : index
    %458 = arith.index_cast %c7_i32 : i32 to index
    %c0_201 = arith.constant 0 : index
    %459 = vector.load %arg10[%c0_200, %458, %c0_201] : memref<2x8x128xf32, #tpu.memory_space<vmem>>, vector<1x1x128xf32>
    %460 = vector.shape_cast %459 : vector<1x1x128xf32> to vector<1x128xf32>
    %461 = vector.shape_cast %452 : vector<1x128xf32> to vector<1x1x128xf32>
    tpu.vector_store %arg10[%c0_200, %458, %c0_201], %461 {strides = array<i32>} : memref<2x8x128xf32, #tpu.memory_space<vmem>>, vector<1x1x128xf32>,
    %c0_202 = arith.constant 0 : index
    %462 = arith.index_cast %c7_i32 : i32 to index
    %c0_203 = arith.constant 0 : index
    %463 = vector.load %arg11[%c0_202, %462, %c0_203] : memref<2x8x128xf32, #tpu.memory_space<vmem>>, vector<1x1x128xf32>
    %464 = vector.shape_cast %463 : vector<1x1x128xf32> to vector<1x128xf32>
    %465 = vector.shape_cast %457 : vector<1x128xf32> to vector<1x1x128xf32>
    tpu.vector_store %arg11[%c0_202, %462, %c0_203], %465 {strides = array<i32>} : memref<2x8x128xf32, #tpu.memory_space<vmem>>, vector<1x1x128xf32>,
    %c1_204 = arith.constant 1 : index
    %c0_205 = arith.constant 0 : index
    %c0_206 = arith.constant 0 : index
    %466 = vector.load %arg3[%c1_204, %c0_205, %c0_206] : memref<2x128x128xf32, #tpu.memory_space<vmem>>, vector<1x128x128xf32>
    %467 = vector.shape_cast %466 : vector<1x128x128xf32> to vector<128x128xf32>
    %cst_207 = arith.constant dense<0.000000e+00> : vector<1x128xf32>
    %468 = tpu.matmul %427, %467, %cst_207 {dimension_numbers = #tpu.dot_dimension_numbers<[1], [0], [0], [1], [0, 0, 1, 1], [], []>} : vector<1x128xf32>, vector<128x128xf32>, vector<1x128xf32> -> vector<1x128xf32>
    %c2_i32_208 = arith.constant 2 : i32
    %469 = arith.muli %arg0, %c2_i32_208 : i32
    %c1_i32_209 = arith.constant 1 : i32
    %470 = arith.addi %469, %c1_i32_209 : i32
    %471 = arith.index_cast %470 : i32 to index
    %472 = arith.index_cast %c7_i32 : i32 to index
    %473 = memref.load %arg1[%471, %472] : memref<4x8xf32, #tpu.memory_space<smem>>
    %474 = vector.broadcast %473 : f32 to vector<1x128xf32>
    %475 = arith.mulf %474, %0 : vector<1x128xf32>
    %c1_210 = arith.constant 1 : index
    %476 = arith.index_cast %c7_i32 : i32 to index
    %c0_211 = arith.constant 0 : index
    %477 = vector.load %arg8[%c1_210, %476, %c0_211] : memref<2x8x128xf32, #tpu.memory_space<vmem>>, vector<1x1x128xf32>
    %478 = vector.shape_cast %477 : vector<1x1x128xf32> to vector<1x128xf32>
    %479 = arith.addf %475, %478 : vector<1x128xf32>
    %480 = arith.mulf %1, %422 : vector<1x128xf32>
    %481 = arith.addf %480, %468 : vector<1x128xf32>
    %482 = arith.addf %481, %479 : vector<1x128xf32>
    %483 = arith.negf %482 : vector<1x128xf32>
    %484 = math.exp %483 : vector<1x128xf32>
    %cst_212 = arith.constant 1.000000e+00 : f32
    %485 = vector.broadcast %cst_212 : f32 to vector<1x128xf32>
    %486 = arith.addf %485, %484 : vector<1x128xf32>
    %487 = arith.divf %485, %486 : vector<1x128xf32>
    %c1_213 = arith.constant 1 : index
    %488 = arith.index_cast %c7_i32 : i32 to index
    %c0_214 = arith.constant 0 : index
    %489 = vector.load %arg10[%c1_213, %488, %c0_214] : memref<2x8x128xf32, #tpu.memory_space<vmem>>, vector<1x1x128xf32>
    %490 = vector.shape_cast %489 : vector<1x1x128xf32> to vector<1x128xf32>
    %491 = vector.shape_cast %482 : vector<1x128xf32> to vector<1x1x128xf32>
    tpu.vector_store %arg10[%c1_213, %488, %c0_214], %491 {strides = array<i32>} : memref<2x8x128xf32, #tpu.memory_space<vmem>>, vector<1x1x128xf32>,
    %c1_215 = arith.constant 1 : index
    %492 = arith.index_cast %c7_i32 : i32 to index
    %c0_216 = arith.constant 0 : index
    %493 = vector.load %arg11[%c1_215, %492, %c0_216] : memref<2x8x128xf32, #tpu.memory_space<vmem>>, vector<1x1x128xf32>
    %494 = vector.shape_cast %493 : vector<1x1x128xf32> to vector<1x128xf32>
    %495 = vector.shape_cast %487 : vector<1x128xf32> to vector<1x1x128xf32>
    tpu.vector_store %arg11[%c1_215, %492, %c0_216], %495 {strides = array<i32>} : memref<2x8x128xf32, #tpu.memory_space<vmem>>, vector<1x1x128xf32>,
    %c8_i32 = arith.constant 8 : i32
    %c0_217 = arith.constant 0 : index
    %c0_218 = arith.constant 0 : index
    %496 = vector.load %arg6[%c0_217, %c0_218] : memref<1x128xf32, #tpu.memory_space<vmem>>, vector<1x128xf32>
    %c0_219 = arith.constant 0 : index
    %c0_220 = arith.constant 0 : index
    %c0_221 = arith.constant 0 : index
    %497 = vector.load %arg11[%c0_219, %c0_220, %c0_221] : memref<2x8x128xf32, #tpu.memory_space<vmem>>, vector<1x8x128xf32>
    %498 = vector.shape_cast %497 : vector<1x8x128xf32> to vector<8x128xf32>
    %cst_222 = arith.constant dense<0.000000e+00> : vector<1x8xf32>
    %499 = tpu.matmul %496, %498, %cst_222 {dimension_numbers = #tpu.dot_dimension_numbers<[1], [1], [0], [0], [0, 0, 1, 0], [], []>} : vector<1x128xf32>, vector<8x128xf32>, vector<1x8xf32> -> vector<1x8xf32>
    %c0_223 = arith.constant 0 : index
    %c0_224 = arith.constant 0 : index
    %500 = memref.load %arg2[%c0_223, %c0_224] : memref<1x1xf32, #tpu.memory_space<smem>>
    %501 = vector.broadcast %500 : f32 to vector<1x8xf32>
    %502 = arith.addf %499, %501 : vector<1x8xf32>
    %c0_225 = arith.constant 0 : index
    %c0_226 = arith.constant 0 : index
    %c0_227 = arith.constant 0 : index
    %503 = vector.load %arg9[%c0_225, %c0_226, %c0_227] : memref<2x1x8xf32, #tpu.memory_space<vmem>>, vector<1x1x8xf32>
    %504 = vector.shape_cast %503 : vector<1x1x8xf32> to vector<1x8xf32>
    %505 = vector.shape_cast %502 : vector<1x8xf32> to vector<1x1x8xf32>
    tpu.vector_store %arg9[%c0_225, %c0_226, %c0_227], %505 {strides = array<i32>} : memref<2x1x8xf32, #tpu.memory_space<vmem>>, vector<1x1x8xf32>,
    %c0_228 = arith.constant 0 : index
    %c0_229 = arith.constant 0 : index
    %506 = vector.load %arg6[%c0_228, %c0_229] : memref<1x128xf32, #tpu.memory_space<vmem>>, vector<1x128xf32>
    %c1_230 = arith.constant 1 : index
    %c0_231 = arith.constant 0 : index
    %c0_232 = arith.constant 0 : index
    %507 = vector.load %arg11[%c1_230, %c0_231, %c0_232] : memref<2x8x128xf32, #tpu.memory_space<vmem>>, vector<1x8x128xf32>
    %508 = vector.shape_cast %507 : vector<1x8x128xf32> to vector<8x128xf32>
    %cst_233 = arith.constant dense<0.000000e+00> : vector<1x8xf32>
    %509 = tpu.matmul %506, %508, %cst_233 {dimension_numbers = #tpu.dot_dimension_numbers<[1], [1], [0], [0], [0, 0, 1, 0], [], []>} : vector<1x128xf32>, vector<8x128xf32>, vector<1x8xf32> -> vector<1x8xf32>
    %c0_234 = arith.constant 0 : index
    %c0_235 = arith.constant 0 : index
    %510 = memref.load %arg2[%c0_234, %c0_235] : memref<1x1xf32, #tpu.memory_space<smem>>
    %511 = vector.broadcast %510 : f32 to vector<1x8xf32>
    %512 = arith.addf %509, %511 : vector<1x8xf32>
    %c1_236 = arith.constant 1 : index
    %c0_237 = arith.constant 0 : index
    %c0_238 = arith.constant 0 : index
    %513 = vector.load %arg9[%c1_236, %c0_237, %c0_238] : memref<2x1x8xf32, #tpu.memory_space<vmem>>, vector<1x1x8xf32>
    %514 = vector.shape_cast %513 : vector<1x1x8xf32> to vector<1x8xf32>
    %515 = vector.shape_cast %512 : vector<1x8xf32> to vector<1x1x8xf32>
    tpu.vector_store %arg9[%c1_236, %c0_237, %c0_238], %515 {strides = array<i32>} : memref<2x1x8xf32, #tpu.memory_space<vmem>>, vector<1x1x8xf32>,
    return
  }
  func.func @transform_0(%arg0: i32) -> (i32, i32) {
    %c0_i32 = arith.constant 0 : i32
    %c0_i32_0 = arith.constant 0 : i32
    %c0_i32_1 = arith.constant 0 : i32
    return %c0_i32, %c0_i32_0 : i32, i32
  }
  func.func @transform_1(%arg0: i32) -> (i32, i32) {
    %c0_i32 = arith.constant 0 : i32
    %c0_i32_0 = arith.constant 0 : i32
    %c0_i32_1 = arith.constant 0 : i32
    return %c0_i32, %c0_i32_0 : i32, i32
  }
  func.func @transform_2(%arg0: i32) -> (i32, i32, i32) {
    %c0_i32 = arith.constant 0 : i32
    %c0_i32_0 = arith.constant 0 : i32
    %c0_i32_1 = arith.constant 0 : i32
    return %arg0, %c0_i32, %c0_i32_0 : i32, i32, i32
  }
  func.func @transform_3(%arg0: i32) -> (i32, i32) {
    %c0_i32 = arith.constant 0 : i32
    %c0_i32_0 = arith.constant 0 : i32
    %c0_i32_1 = arith.constant 0 : i32
    return %c0_i32, %c0_i32_0 : i32, i32
  }
  func.func @transform_4(%arg0: i32) -> (i32, i32) {
    %c0_i32 = arith.constant 0 : i32
    %c0_i32_0 = arith.constant 0 : i32
    %c0_i32_1 = arith.constant 0 : i32
    return %c0_i32, %c0_i32_0 : i32, i32
  }
  func.func @transform_5(%arg0: i32) -> (i32, i32) {
    %c0_i32 = arith.constant 0 : i32
    %c0_i32_0 = arith.constant 0 : i32
    %c0_i32_1 = arith.constant 0 : i32
    return %c0_i32, %c0_i32_0 : i32, i32
  }
  func.func @transform_6(%arg0: i32) -> (i32, i32, i32) {
    %c0_i32 = arith.constant 0 : i32
    %c0_i32_0 = arith.constant 0 : i32
    %c0_i32_1 = arith.constant 0 : i32
    return %arg0, %c0_i32, %c0_i32_0 : i32, i32, i32
  }
  func.func @transform_7(%arg0: i32) -> (i32, i32, i32) {
    %c0_i32 = arith.constant 0 : i32
    %c0_i32_0 = arith.constant 0 : i32
    %c0_i32_1 = arith.constant 0 : i32
    return %arg0, %c0_i32, %c0_i32_0 : i32, i32, i32
  }
  func.func @transform_8(%arg0: i32) -> (i32, i32, i32) {
    %c0_i32 = arith.constant 0 : i32
    %c0_i32_0 = arith.constant 0 : i32
    %c0_i32_1 = arith.constant 0 : i32
    return %arg0, %c0_i32, %c0_i32_0 : i32, i32, i32
  }
  func.func @transform_9(%arg0: i32) -> (i32, i32, i32) {
    %c0_i32 = arith.constant 0 : i32
    %c0_i32_0 = arith.constant 0 : i32
    %c0_i32_1 = arith.constant 0 : i32
    return %arg0, %c0_i32, %c0_i32_0 : i32, i32, i32
  }
}

</mosaic_0001>

<llo_original>
// kernel: tpu_custom_call.1
$region0: #{tpu_custom_call.1}
  #allocation0 [shape = 'u32[]', space=smem, size = 0x4, offset = 0x4, fixed_abs, tag = 'smem constant byte address 0x4 - core index']
  #allocation1 [shape = 'u32[144,128]{1,0:T(1,128)}', space=vmem, size = 0x12000, scoped, tag = 'internal scratch']
  #allocation2 [shape = 'f32[2,8,128]{2,1,0:T(8,128)}', space=vmem, size = 0x2000, scoped, tag = 'scratch operand']
  #allocation3 [shape = 'f32[1,1]{1,0:T(1,128)S(6)}', space=smem, size = 0x200, scoped, tag = 'scoped memory for tpu_custom_call.1']
  %s0 = inlined_call_operand.hbm [shape: f32[4,8], index: 0, kind: input, shape index: {}]
  %s1 = inlined_call_operand.<no memory space> [shape: f32[1,1], index: 1, kind: input, shape index: {}]
  %s2 = inlined_call_operand.hbm [shape: f32[4,128,128], index: 2, kind: input, shape index: {}]
  %s3 = inlined_call_operand.vmem [shape: f32[1,128], index: 3, kind: input, shape index: {}]
  %s4 = inlined_call_operand.vmem [shape: f32[1,128], index: 4, kind: input, shape index: {}]
  %s5 = inlined_call_operand.vmem [shape: f32[1,128], index: 5, kind: input, shape index: {}]
  %s6 = inlined_call_operand.vmem [shape: f32[4,1,128], index: 6, kind: input, shape index: {}]
  %s7 = inlined_call_operand.hbm [shape: f32[4,8,128], index: 7, kind: input, shape index: {}]
  %s8 = inlined_call_operand.hbm [shape: f32[4,1,8], index: 8, kind: output, shape index: {0}]
  %s9 = inlined_call_operand.hbm [shape: f32[4,8,128], index: 9, kind: output, shape index: {1}]
  %10 = xla_tuple %s8, %s9
  %s11 = sld [smem:[#allocation0]]
  $region85: #{tpu_custom_call.1} parent=0
    _
  %s13 = ssub.s32 1, %s11
  %s14 = scalar_select 0, %s13, %s11
  %15 = sst [smem:[#allocation3]] %s1
  $region1: #{tpu_custom_call.1} parent=0
    #allocation4 [shape = 'u8[2048]{0}', space=smem, size = 0x800, scoped, tag = 'input window, operand 0, single buffered']
    #allocation5 [shape = 's32[2]{0}', space=sflag, size = 0x8, scoped, tag = 'scoped memory for tpu_custom_call.1']
    #allocation6 [shape = 's32[2]{0}', space=sflag, size = 0x8, scoped, tag = 'scoped memory for tpu_custom_call.1']
    #allocation7 [shape = 's32[2]{0}', space=sflag, size = 0x8, scoped, tag = 'scoped memory for tpu_custom_call.1']
    #allocation8 [shape = 'u8[262144]{0}', space=vmem, size = 0x40000, scoped, tag = 'input window, operand 2']
    #allocation9 [shape = 'u8[16384]{0}', space=vmem, size = 0x4000, scoped, tag = 'input window, operand 7']
    #allocation10 [shape = 's32[2]{0}', space=sflag, size = 0x8, scoped, tag = 'scoped memory for tpu_custom_call.1']
    #allocation11 [shape = 'u8[2048]{0}', space=vmem, size = 0x800, scoped, tag = 'output window, operand 0']
    #allocation12 [shape = 'u8[16384]{0}', space=vmem, size = 0x4000, scoped, tag = 'output window, operand 1']
    #allocation13 [shape = 's32[2]{0}', space=sflag, size = 0x8, scoped, tag = 'scoped memory for tpu_custom_call.1']
    %16 = vsyncpa [#allocation7], 0
    %17 = vsyncpa [#allocation5], 0
    %s18 = scalar_lea.sflag [#allocation5], 1
    %19 = vsyncpa %s18, 0
    %20 = vsyncpa [#allocation10], 0
    %s21 = scalar_lea.sflag [#allocation10], 1
    %22 = vsyncpa %s21, 0
    %23 = vsyncpa [#allocation6], 0
    %s24 = scalar_lea.sflag [#allocation6], 1
    %25 = vsyncpa %s24, 0
    %26 = vsyncpa [#allocation13], 0
    %s27 = scalar_lea.sflag [#allocation13], 1
    %28 = vsyncpa %s27, 0
    loop: start=0, step=1, limit=4
    $region2: #{tpu_custom_call.1} parent=1 // loop_pre_header
      _
    $region3: #{tpu_custom_call.1} parent=1 // loop_header
      %s30 = sphi 0, %s34
      %p31 = scmp.ge.s32.totalorder %s30, 4
      %s38 = sphi 0, %s38
      %s40 = sphi 0, %s38
      %s41 = sphi 0, %s40
      %s55 = sphi 0, %s41
      %s59 = sphi 0, %s59
      %s61 = sphi 0, %s59
      %s62 = sphi 0, %s61
      %s76 = sphi 0, %s62
      %s82 = sphi 0, %s84
      %s85 = sphi 0, %s82
      %s86 = sphi 0, %s85
      %s102 = sphi 0, %s86
      %s106 = sphi 0, %s106
      %s108 = sphi 0, %s106
      %s109 = sphi 0, %s108
      %s123 = sphi 0, %s109
      %s127 = sphi 0, %s127
      %s129 = sphi 0, %s127
      %s130 = sphi 0, %s129
      %s144 = sphi 0, %s130
      %s148 = sphi 0, %s148
      %s150 = sphi 0, %s148
      %s151 = sphi 0, %s150
      %s165 = sphi 0, %s151
      %s171 = sphi 0, %s173
      %s174 = sphi 0, %s171
      %s175 = sphi 0, %s174
      %s191 = sphi 0, %s175
      %s197 = sphi 0, %s199
      %s200 = sphi 0, %s197
      %s201 = sphi 0, %s200
      %s217 = sphi 0, %s201
      %s223 = sphi 0, %s225
      %s226 = sphi 0, %s223
      %s227 = sphi 0, %s226
      %s243 = sphi 0, %s227
      %s249 = sphi 0, %s251
      %s252 = sphi 0, %s249
      %s253 = sphi 0, %s252
      %s269 = sphi 0, %s253
    $region4: #{tpu_custom_call.1} parent=1 // loop_header_branch
      %33 = sbr.rel (%p31) target = $region8
    $region5: #{tpu_custom_call.1} parent=1 // loop_body
      %s35 = ssub.s32 %s30, 1
      %s36 = ssub.s32 %s30, 2
      %s37 = sadd.s32 %s30, 1
      %s39 = sadd.s32 %s38, 1
      %p42 = scmp.eq.s32.totalorder %s30, 1
      %p43 = scmp.ne.s32.totalorder %s38, %s40
      %p44 = scmp.eq.s32.totalorder %s30, 0
      %p45 = por %p43, %p44
      %p46 = scmp.ne.s32.totalorder %s38, %s40
      %p47 = scmp.eq.s32.totalorder %s35, 1
      %p48 = por %p46, %p47
      %p49 = scmp.ne.s32.totalorder %s40, %s41
      %p50 = scmp.eq.s32.totalorder %s35, 0
      %p51 = por %p49, %p50
      %p52 = scmp.ne.s32.totalorder %s40, %s41
      %p53 = scmp.eq.s32.totalorder %s36, 1
      %p54 = por %p52, %p53
      %p56 = scmp.ne.s32.totalorder %s41, %s55
      %p57 = scmp.eq.s32.totalorder %s36, 0
      %p58 = por %p56, %p57
      %s60 = sadd.s32 %s59, 1
      %p63 = scmp.eq.s32.totalorder %s30, 1
      %p64 = scmp.ne.s32.totalorder %s59, %s61
      %p65 = scmp.eq.s32.totalorder %s30, 0
      %p66 = por %p64, %p65
      %p67 = scmp.ne.s32.totalorder %s59, %s61
      %p68 = scmp.eq.s32.totalorder %s35, 1
      %p69 = por %p67, %p68
      %p70 = scmp.ne.s32.totalorder %s61, %s62
      %p71 = scmp.eq.s32.totalorder %s35, 0
      %p72 = por %p70, %p71
      %p73 = scmp.ne.s32.totalorder %s61, %s62
      %p74 = scmp.eq.s32.totalorder %s36, 1
      %p75 = por %p73, %p74
      %p77 = scmp.ne.s32.totalorder %s62, %s76
      %p78 = scmp.eq.s32.totalorder %s36, 0
      %p79 = por %p77, %p78
      %s80 = ssub.s32 %s30, %s37
      %p81 = scmp.eq.s32.totalorder %s80, 0
      %s83 = sadd.s32 %s82, 1
      %s84 = scalar_select %p81, %s82, %s83
      %p87 = pneg %p81
      %p88 = scmp.eq.s32.totalorder %s30, 1
      %p89 = por %p87, %p88
      %p90 = scmp.ne.s32.totalorder %s82, %s85
      %p91 = scmp.eq.s32.totalorder %s30, 0
      %p92 = por %p90, %p91
      %p93 = scmp.ne.s32.totalorder %s82, %s85
      %p94 = scmp.eq.s32.totalorder %s35, 1
      %p95 = por %p93, %p94
      %p96 = scmp.ne.s32.totalorder %s85, %s86
      %p97 = scmp.eq.s32.totalorder %s35, 0
      %p98 = por %p96, %p97
      %p99 = scmp.ne.s32.totalorder %s85, %s86
      %p100 = scmp.eq.s32.totalorder %s36, 1
      %p101 = por %p99, %p100
      %p103 = scmp.ne.s32.totalorder %s86, %s102
      %p104 = scmp.eq.s32.totalorder %s36, 0
      %p105 = por %p103, %p104
      %s107 = sadd.s32 %s106, 1
      %p110 = scmp.eq.s32.totalorder %s30, 1
      %p111 = scmp.ne.s32.totalorder %s106, %s108
      %p112 = scmp.eq.s32.totalorder %s30, 0
      %p113 = por %p111, %p112
      %p114 = scmp.ne.s32.totalorder %s106, %s108
      %p115 = scmp.eq.s32.totalorder %s35, 1
      %p116 = por %p114, %p115
      %p117 = scmp.ne.s32.totalorder %s108, %s109
      %p118 = scmp.eq.s32.totalorder %s35, 0
      %p119 = por %p117, %p118
      %p120 = scmp.ne.s32.totalorder %s108, %s109
      %p121 = scmp.eq.s32.totalorder %s36, 1
      %p122 = por %p120, %p121
      %p124 = scmp.ne.s32.totalorder %s109, %s123
      %p125 = scmp.eq.s32.totalorder %s36, 0
      %p126 = por %p124, %p125
      %s128 = sadd.s32 %s127, 1
      %p131 = scmp.eq.s32.totalorder %s30, 1
      %p132 = scmp.ne.s32.totalorder %s127, %s129
      %p133 = scmp.eq.s32.totalorder %s30, 0
      %p134 = por %p132, %p133
      %p135 = scmp.ne.s32.totalorder %s127, %s129
      %p136 = scmp.eq.s32.totalorder %s35, 1
      %p137 = por %p135, %p136
      %p138 = scmp.ne.s32.totalorder %s129, %s130
      %p139 = scmp.eq.s32.totalorder %s35, 0
      %p140 = por %p138, %p139
      %p141 = scmp.ne.s32.totalorder %s129, %s130
      %p142 = scmp.eq.s32.totalorder %s36, 1
      %p143 = por %p141, %p142
      %p145 = scmp.ne.s32.totalorder %s130, %s144
      %p146 = scmp.eq.s32.totalorder %s36, 0
      %p147 = por %p145, %p146
      %s149 = sadd.s32 %s148, 1
      %p152 = scmp.eq.s32.totalorder %s30, 1
      %p153 = scmp.ne.s32.totalorder %s148, %s150
      %p154 = scmp.eq.s32.totalorder %s30, 0
      %p155 = por %p153, %p154
      %p156 = scmp.ne.s32.totalorder %s148, %s150
      %p157 = scmp.eq.s32.totalorder %s35, 1
      %p158 = por %p156, %p157
      %p159 = scmp.ne.s32.totalorder %s150, %s151
      %p160 = scmp.eq.s32.totalorder %s35, 0
      %p161 = por %p159, %p160
      %p162 = scmp.ne.s32.totalorder %s150, %s151
      %p163 = scmp.eq.s32.totalorder %s36, 1
      %p164 = por %p162, %p163
      %p166 = scmp.ne.s32.totalorder %s151, %s165
      %p167 = scmp.eq.s32.totalorder %s36, 0
      %p168 = por %p166, %p167
      %s169 = ssub.s32 %s30, %s37
      %p170 = scmp.eq.s32.totalorder %s169, 0
      %s172 = sadd.s32 %s171, 1
      %s173 = scalar_select %p170, %s171, %s172
      %p176 = pneg %p170
      %p177 = scmp.eq.s32.totalorder %s30, 1
      %p178 = por %p176, %p177
      %p179 = scmp.ne.s32.totalorder %s171, %s174
      %p180 = scmp.eq.s32.totalorder %s30, 0
      %p181 = por %p179, %p180
      %p182 = scmp.ne.s32.totalorder %s171, %s174
      %p183 = scmp.eq.s32.totalorder %s35, 1
      %p184 = por %p182, %p183
      %p185 = scmp.ne.s32.totalorder %s174, %s175
      %p186 = scmp.eq.s32.totalorder %s35, 0
      %p187 = por %p185, %p186
      %p188 = scmp.ne.s32.totalorder %s174, %s175
      %p189 = scmp.eq.s32.totalorder %s36, 1
      %p190 = por %p188, %p189
      %p192 = scmp.ne.s32.totalorder %s175, %s191
      %p193 = scmp.eq.s32.totalorder %s36, 0
      %p194 = por %p192, %p193
      %s195 = ssub.s32 %s30, %s37
      %p196 = scmp.eq.s32.totalorder %s195, 0
      %s198 = sadd.s32 %s197, 1
      %s199 = scalar_select %p196, %s197, %s198
      %p202 = pneg %p196
      %p203 = scmp.eq.s32.totalorder %s30, 1
      %p204 = por %p202, %p203
      %p205 = scmp.ne.s32.totalorder %s197, %s200
      %p206 = scmp.eq.s32.totalorder %s30, 0
      %p207 = por %p205, %p206
      %p208 = scmp.ne.s32.totalorder %s197, %s200
      %p209 = scmp.eq.s32.totalorder %s35, 1
      %p210 = por %p208, %p209
      %p211 = scmp.ne.s32.totalorder %s200, %s201
      %p212 = scmp.eq.s32.totalorder %s35, 0
      %p213 = por %p211, %p212
      %p214 = scmp.ne.s32.totalorder %s200, %s201
      %p215 = scmp.eq.s32.totalorder %s36, 1
      %p216 = por %p214, %p215
      %p218 = scmp.ne.s32.totalorder %s201, %s217
      %p219 = scmp.eq.s32.totalorder %s36, 0
      %p220 = por %p218, %p219
      %s221 = ssub.s32 %s30, %s37
      %p222 = scmp.eq.s32.totalorder %s221, 0
      %s224 = sadd.s32 %s223, 1
      %s225 = scalar_select %p222, %s223, %s224
      %p228 = pneg %p222
      %p229 = scmp.eq.s32.totalorder %s30, 1
      %p230 = por %p228, %p229
      %p231 = scmp.ne.s32.totalorder %s223, %s226
      %p232 = scmp.eq.s32.totalorder %s30, 0
      %p233 = por %p231, %p232
      %p234 = scmp.ne.s32.totalorder %s223, %s226
      %p235 = scmp.eq.s32.totalorder %s35, 1
      %p236 = por %p234, %p235
      %p237 = scmp.ne.s32.totalorder %s226, %s227
      %p238 = scmp.eq.s32.totalorder %s35, 0
      %p239 = por %p237, %p238
      %p240 = scmp.ne.s32.totalorder %s226, %s227
      %p241 = scmp.eq.s32.totalorder %s36, 1
      %p242 = por %p240, %p241
      %p244 = scmp.ne.s32.totalorder %s227, %s243
      %p245 = scmp.eq.s32.totalorder %s36, 0
      %p246 = por %p244, %p245
      %s247 = ssub.s32 %s30, %s37
      %p248 = scmp.eq.s32.totalorder %s247, 0
      %s250 = sadd.s32 %s249, 1
      %s251 = scalar_select %p248, %s249, %s250
      %p254 = pneg %p248
      %p255 = scmp.eq.s32.totalorder %s30, 1
      %p256 = por %p254, %p255
      %p257 = scmp.ne.s32.totalorder %s249, %s252
      %p258 = scmp.eq.s32.totalorder %s30, 0
      %p259 = por %p257, %p258
      %p260 = scmp.ne.s32.totalorder %s249, %s252
      %p261 = scmp.eq.s32.totalorder %s35, 1
      %p262 = por %p260, %p261
      %p263 = scmp.ne.s32.totalorder %s252, %s253
      %p264 = scmp.eq.s32.totalorder %s35, 0
      %p265 = por %p263, %p264
      %p266 = scmp.ne.s32.totalorder %s252, %s253
      %p267 = scmp.eq.s32.totalorder %s36, 1
      %p268 = por %p266, %p267
      %p270 = scmp.ne.s32.totalorder %s253, %s269
      %p271 = scmp.eq.s32.totalorder %s36, 0
      %p272 = por %p270, %p271
      %p273 = scmp.le.s32.totalorder 1, %s30
      %p274 = scmp.lt.s32.totalorder %s30, 3
      %p275 = pnand %p273, %p274
      %p276 = pneg %p275
      // Predicated region
      $region9: #{tpu_custom_call.1} parent=5 // pred_check
        _
      $region10: #{tpu_custom_call.1} parent=5 // pred_check_branch
        %278 = sbr.rel (%p275) target = $region12
      $region11: #{tpu_custom_call.1} parent=5 // pred_region
        %s279 = ssub.s32 %s30, 1
        // Predicated region
        $region13: #{tpu_custom_call.1} parent=11 // pred_check
          %p280 = pneg %p51
        $region14: #{tpu_custom_call.1} parent=11 // pred_check_branch
          %282 = sbr.rel (%p280) target = $region16
        $region15: #{tpu_custom_call.1} parent=11 // pred_region
          %s284 = ssub.s32 64, 64
          %285 = vsyncadd [#allocation7], %s284
          %288 = dma.hbm_to_smem %s0, 64, [#allocation4], [#allocation7]
        $region16: #{tpu_custom_call.1} parent=11 // pred_fallthru
          _
        // Predicated region
        $region17: #{tpu_custom_call.1} parent=11 // pred_check
          %p289 = pneg %p72
        $region18: #{tpu_custom_call.1} parent=11 // pred_check_branch
          %291 = sbr.rel (%p289) target = $region20
        $region19: #{tpu_custom_call.1} parent=11 // pred_region
          _
        $region20: #{tpu_custom_call.1} parent=11 // pred_fallthru
          _
        // Predicated region
        $region21: #{tpu_custom_call.1} parent=11 // pred_check
          %p292 = pneg %p119
        $region22: #{tpu_custom_call.1} parent=11 // pred_check_branch
          %294 = sbr.rel (%p292) target = $region24
        $region23: #{tpu_custom_call.1} parent=11 // pred_region
          _
        $region24: #{tpu_custom_call.1} parent=11 // pred_fallthru
          _
        // Predicated region
        $region25: #{tpu_custom_call.1} parent=11 // pred_check
          %p295 = pneg %p140
        $region26: #{tpu_custom_call.1} parent=11 // pred_check_branch
          %297 = sbr.rel (%p295) target = $region28
        $region27: #{tpu_custom_call.1} parent=11 // pred_region
          _
        $region28: #{tpu_custom_call.1} parent=11 // pred_fallthru
          _
        // Predicated region
        $region29: #{tpu_custom_call.1} parent=11 // pred_check
          %p298 = pneg %p161
        $region30: #{tpu_custom_call.1} parent=11 // pred_check_branch
          %300 = sbr.rel (%p298) target = $region32
        $region31: #{tpu_custom_call.1} parent=11 // pred_region
          _
        $region32: #{tpu_custom_call.1} parent=11 // pred_fallthru
          _
      $region12: #{tpu_custom_call.1} parent=5 // pred_fallthru
        _
      %p301 = scmp.lt.s32.totalorder %s30, 2
      // Predicated region
      $region33: #{tpu_custom_call.1} parent=5 // pred_check
        %p302 = pneg %p301
      $region34: #{tpu_custom_call.1} parent=5 // pred_check_branch
        %304 = sbr.rel (%p302) target = $region36
      $region35: #{tpu_custom_call.1} parent=5 // pred_region
        // Predicated region
        $region37: #{tpu_custom_call.1} parent=35 // pred_check
          %p305 = pneg %p92
        $region38: #{tpu_custom_call.1} parent=35 // pred_check_branch
          %307 = sbr.rel (%p305) target = $region40
        $region39: #{tpu_custom_call.1} parent=35 // pred_region
          %s308 = sand.u32 %s82, 1
          %s309 = scalar_lea.sflag [#allocation5], %s308
          %s310 = sand.u32 %s82, 1
          %s311 = smul.addr %s310, 256
          %s312 = scalar_lea.vmem [#allocation8], %s311
          %s313 = smul.u32 2, %s30
          %s315 = ssub.s32 4096, 4096
          %316 = vsyncadd %s309, %s315
          %s317 = smul.addr %s313, 16
          %s318 = smul.addr %s317, 128
          %s319 = scalar_lea.hbm %s2, %s318
          %s320 = sshll.u32 %s312, 4
          %s321 = int_to_ptr.vmem [resolvable:$true] %s320
          %326 = dma.hbm_to_vmem [thread:$0]  %s319, 4096, %s321, %s309, 128, 128, 8
        $region40: #{tpu_custom_call.1} parent=35 // pred_fallthru
          _
        // Predicated region
        $region41: #{tpu_custom_call.1} parent=35 // pred_check
          %p327 = pneg %p181
        $region42: #{tpu_custom_call.1} parent=35 // pred_check_branch
          %329 = sbr.rel (%p327) target = $region44
        $region43: #{tpu_custom_call.1} parent=35 // pred_region
          %s330 = smul.u32 2, %s30
          %p331 = scmp.lt.s32.totalorder %s330, 3
          %s332 = scalar_select %p331, %s330, 3
          %s333 = scalar_lea.vmem %s6, %s332
          %s334 = smul.u32 2, %s30
        $region44: #{tpu_custom_call.1} parent=35 // pred_fallthru
          _
        // Predicated region
        $region45: #{tpu_custom_call.1} parent=35 // pred_check
          %p335 = pneg %p207
        $region46: #{tpu_custom_call.1} parent=35 // pred_check_branch
          %337 = sbr.rel (%p335) target = $region48
        $region47: #{tpu_custom_call.1} parent=35 // pred_region
          %s338 = sand.u32 %s197, 1
          %s339 = scalar_lea.sflag [#allocation10], %s338
          %s340 = sand.u32 %s197, 1
          %s341 = smul.addr %s340, 16
          %s342 = scalar_lea.vmem [#allocation9], %s341
          %s343 = smul.u32 2, %s30
          %s345 = ssub.s32 256, 256
          %346 = vsyncadd %s339, %s345
          %s347 = smul.addr %s343, 128
          %s348 = scalar_lea.hbm %s7, %s347
          %s349 = sshll.u32 %s342, 4
          %s350 = int_to_ptr.vmem [resolvable:$true] %s349
          %355 = dma.hbm_to_vmem [thread:$0]  %s348, 256, %s350, %s339, 128, 128, 8
        $region48: #{tpu_custom_call.1} parent=35 // pred_fallthru
          _
      $region36: #{tpu_custom_call.1} parent=5 // pred_fallthru
        _
      %p356 = scmp.le.s32.totalorder 1, %s30
      %p357 = scmp.lt.s32.totalorder %s30, 3
      %p358 = pnand %p356, %p357
      %p359 = pneg %p358
      // Predicated region
      $region49: #{tpu_custom_call.1} parent=5 // pred_check
        _
      $region50: #{tpu_custom_call.1} parent=5 // pred_check_branch
        %361 = sbr.rel (%p358) target = $region52
      $region51: #{tpu_custom_call.1} parent=5 // pred_region
        %s362 = ssub.s32 %s30, 1
        // Predicated region
        $region53: #{tpu_custom_call.1} parent=51 // pred_check
          %p363 = pneg %p51
        $region54: #{tpu_custom_call.1} parent=51 // pred_check_branch
          %365 = sbr.rel (%p363) target = $region56
        $region55: #{tpu_custom_call.1} parent=51 // pred_region
          %366 = dma.done [#allocation7], 64
        $region56: #{tpu_custom_call.1} parent=51 // pred_fallthru
          _
        %s367 = sand.u32 %s85, 1
        %s368 = scalar_lea.sflag [#allocation5], %s367
        %s369 = sand.u32 %s85, 1
        %s370 = smul.addr %s369, 256
        %s371 = scalar_lea.vmem [#allocation8], %s370
        // Predicated region
        $region57: #{tpu_custom_call.1} parent=51 // pred_check
          %p372 = pneg %p98
        $region58: #{tpu_custom_call.1} parent=51 // pred_check_branch
          %374 = sbr.rel (%p372) target = $region60
        $region59: #{tpu_custom_call.1} parent=51 // pred_region
          %375 = dma.done %s368, 4096
        $region60: #{tpu_custom_call.1} parent=51 // pred_fallthru
          _
        %s376 = sand.u32 %s200, 1
        %s377 = scalar_lea.sflag [#allocation10], %s376
        %s378 = sand.u32 %s200, 1
        %s379 = smul.addr %s378, 16
        %s380 = scalar_lea.vmem [#allocation9], %s379
        // Predicated region
        $region61: #{tpu_custom_call.1} parent=51 // pred_check
          %p381 = pneg %p213
        $region62: #{tpu_custom_call.1} parent=51 // pred_check_branch
          %383 = sbr.rel (%p381) target = $region64
        $region63: #{tpu_custom_call.1} parent=51 // pred_region
          %384 = dma.done %s377, 256
        $region64: #{tpu_custom_call.1} parent=51 // pred_fallthru
          _
        %385 = sfence
        %p386 = pneg %p51
        %p387 = pneg %p48
        %p388 = pneg %p72
        %p389 = pneg %p69
        %s390 = sand.u32 %s85, 1
        %s391 = scalar_lea.sflag [#allocation5], %s390
        %s392 = sand.u32 %s85, 1
        %s393 = smul.addr %s392, 256
        %s394 = scalar_lea.vmem [#allocation8], %s393
        %p395 = pneg %p98
        %p396 = pneg %p95
        %p397 = pneg %p119
        %p398 = pneg %p116
        %p399 = pneg %p140
        %p400 = pneg %p137
        %p401 = pneg %p161
        %p402 = pneg %p158
        %s403 = smul.u32 2, %s35
        %p404 = scmp.lt.s32.totalorder %s403, 3
        %s405 = scalar_select %p404, %s403, 3
        %s406 = scalar_lea.vmem %s6, %s405
        %p407 = pneg %p187
        %p408 = pneg %p184
        %s409 = sand.u32 %s200, 1
        %s410 = scalar_lea.sflag [#allocation10], %s409
        %s411 = sand.u32 %s200, 1
        %s412 = smul.addr %s411, 16
        %s413 = scalar_lea.vmem [#allocation9], %s412
        %p414 = pneg %p213
        %p415 = pneg %p210
        %p416 = pneg %p239
        %p417 = pneg %p236
        %s418 = sand.u32 %s226, 1
        %s419 = scalar_lea.sflag [#allocation6], %s418
        %s420 = sand.u32 %s226, 1
        %s421 = smul.addr %s420, 2
        %s422 = scalar_lea.vmem [#allocation11], %s421
        %p423 = pneg %p265
        %p424 = pneg %p262
        %s425 = sand.u32 %s252, 1
        %s426 = scalar_lea.sflag [#allocation13], %s425
        %s427 = sand.u32 %s252, 1
        %s428 = smul.addr %s427, 16
        %s429 = scalar_lea.vmem [#allocation12], %s428
        %s430 = smul.u32 2, %s35
        %s431 = smul.u32 2, %s35
        %p432 = scmp.lt.s32.totalorder %s431, 3
        %s433 = scalar_select %p432, %s431, 3
        %s434 = scalar_lea.vmem %s6, %s433
        %s435 = smul.u32 2, %s35
        %s436 = smul.u32 2, %s35
        %s437 = smul.u32 2, %s35
        %s438 = smul.u32 2, %s35
        %v439 = vld [vmem:[%s3] sm:$0x1]
        %v440 = vld [vmem:[%s4] sm:$0x1]
        %v441 = vld [vmem:[%s434] sm:$0x1]
        %s442 = scalar_lea.vmem %s434, 1
        %v443 = vld [vmem:[%s442] sm:$0x1]
        %v444 = vxor.u32 %v441, 2147483648
        %v445 = vmul.f32 %v444, 1.442695
        %v446 = vpow.pop %v445
        %v447 = vadd.f32 %v446, 1.0
        %v448 = vrcp.pop %v447
        %v449 = vmul.f32 1.0, %v448
        %v450 = vxor.u32 %v443, 2147483648
        %v451 = vmul.f32 %v450, 1.442695
        %v452 = vpow.pop %v451
        %v453 = vadd.f32 %v452, 1.0
        %v454 = vrcp.pop %v453
        %v455 = vmul.f32 1.0, %v454
        %v456 = vld [vmem:[%s371] sm:$0xff]
        %v457 = vld [vmem:[%s371 + $0x8] sm:$0xff]
        %v458 = vld [vmem:[%s371 + $0x10] sm:$0xff]
        %v459 = vld [vmem:[%s371 + $0x18] sm:$0xff]
        %v460 = vld [vmem:[%s371 + $0x20] sm:$0xff]
        %v461 = vld [vmem:[%s371 + $0x28] sm:$0xff]
        %v462 = vld [vmem:[%s371 + $0x30] sm:$0xff]
        %v463 = vld [vmem:[%s371 + $0x38] sm:$0xff]
        %v464 = vld [vmem:[%s371 + $0x40] sm:$0xff]
        %v465 = vld [vmem:[%s371 + $0x48] sm:$0xff]
        %v466 = vld [vmem:[%s371 + $0x50] sm:$0xff]
        %v467 = vld [vmem:[%s371 + $0x58] sm:$0xff]
        %v468 = vld [vmem:[%s371 + $0x60] sm:$0xff]
        %v469 = vld [vmem:[%s371 + $0x68] sm:$0xff]
        %v470 = vld [vmem:[%s371 + $0x70] sm:$0xff]
        %v471 = vld [vmem:[%s371 + $0x78] sm:$0xff]
        %472 = vmatprep.subr.mxu0 0.0
        %473 = vmatpush1.msra.mxu0 %v471
        %474 = vmatprep.subr.mxu0 0.0
        %475 = vmatpush1.msra.mxu0 %v470
        %476 = vmatprep.subr.mxu0 0.0
        %477 = vmatpush1.msra.mxu0 %v469
        %478 = vmatprep.subr.mxu0 0.0
        %479 = vmatpush1.msra.mxu0 %v468
        %480 = vmatprep.subr.mxu0 0.0
        %481 = vmatpush1.msra.mxu0 %v467
        %482 = vmatprep.subr.mxu0 0.0
        %483 = vmatpush1.msra.mxu0 %v466
        %484 = vmatprep.subr.mxu0 0.0
        %485 = vmatpush1.msra.mxu0 %v465
        %486 = vmatprep.subr.mxu0 0.0
        %487 = vmatpush1.msra.mxu0 %v464
        %488 = vmatprep.subr.mxu0 0.0
        %489 = vmatpush1.msra.mxu0 %v463
        %490 = vmatprep.subr.mxu0 0.0
        %491 = vmatpush1.msra.mxu0 %v462
        %492 = vmatprep.subr.mxu0 0.0
        %493 = vmatpush1.msra.mxu0 %v461
        %494 = vmatprep.subr.mxu0 0.0
        %495 = vmatpush1.msra.mxu0 %v460
        %496 = vmatprep.subr.mxu0 0.0
        %497 = vmatpush1.msra.mxu0 %v459
        %498 = vmatprep.subr.mxu0 0.0
        %499 = vmatpush1.msra.mxu0 %v458
        %500 = vmatprep.subr.mxu0 0.0
        %501 = vmatpush1.msra.mxu0 %v457
        %502 = vmatprep.subr.mxu0 0.0
        %503 = vmatpush1.msra.mxu0 %v456
        %504 = vmatprep.subr.mxu0 0.0
        %505 = vmatpush2.msra.mxu0 0.0
        %506 = vmatprep.subr.mxu0 0.0
        %507 = vmatpush2.msra.mxu0 0.0
        %508 = vmatprep.subr.mxu0 0.0
        %509 = vmatpush2.msra.mxu0 0.0
        %510 = vmatprep.subr.mxu0 0.0
        %511 = vmatpush2.msra.mxu0 0.0
        %512 = vmatprep.subr.mxu0 0.0
        %513 = vmatpush2.msra.mxu0 0.0
        %514 = vmatprep.subr.mxu0 0.0
        %515 = vmatpush2.msra.mxu0 0.0
        %516 = vmatprep.subr.mxu0 0.0
        %517 = vmatpush2.msra.mxu0 0.0
        %518 = vmatprep.subr.mxu0 0.0
        %519 = vmatpush2.msra.mxu0 0.0
        %520 = vmatprep.subr.mxu0 0.0
        %521 = vmatpush2.msra.mxu0 0.0
        %522 = vmatprep.subr.mxu0 0.0
        %523 = vmatpush2.msra.mxu0 0.0
        %524 = vmatprep.subr.mxu0 0.0
        %525 = vmatpush2.msra.mxu0 0.0
        %526 = vmatprep.subr.mxu0 0.0
        %527 = vmatpush2.msra.mxu0 0.0
        %528 = vmatprep.subr.mxu0 0.0
        %529 = vmatpush2.msra.mxu0 0.0
        %530 = vmatprep.subr.mxu0 0.0
        %531 = vmatpush2.msra.mxu0 0.0
        %532 = vmatprep.subr.mxu0 0.0
        %533 = vmatpush2.msra.mxu0 0.0
        %534 = vmatprep.subr.mxu0 0.0
        %535 = vmatpush2.msra.mxu0 0.0
        %536 = vmatprep.mubr.f32.mxu0 0.0
        %537 = vmatmul.mubr.f32.gmra.mxu0 %v449
        %v538 = vpop.f32.mrf.mxu0
        %v539 = vadd.f32 0.0, %v538
        %v540 = vpop.f32.mrf.mxu0
        %541 = vdwg.mxu0
        %s542 = smul.u32 %s35, 2
        %s543 = smul.u32 %s542, 128
        %s544 = sld [smem:[#allocation4 + %s543]]
        %v545 = vstv %s544
        %v546 = vmul.f32 %v545, %v439
        %v547 = vld [vmem:[%s380] sm:$0x1]
        %v548 = vadd.f32 %v546, %v547
        %v549 = vmul.f32 %v440, %v441
        %v550 = vadd.f32 %v549, %v539
        %v551 = vadd.f32 %v550, %v548
        %v552 = vxor.u32 %v551, 2147483648
        %v553 = vmul.f32 %v552, 1.442695
        %v554 = vpow.pop %v553
        %v555 = vadd.f32 %v554, 1.0
        %v556 = vrcp.pop %v555
        %v557 = vmul.f32 1.0, %v556
        %558 = vst [vmem:[%s429] sm:$0x1] %v551
        %559 = vst [vmem:[#allocation2] sm:$0x1] %v557
        %s560 = scalar_lea.vmem %s371, 128 [#allocation8]
        %v561 = vld [vmem:[%s560] sm:$0xff]
        %v562 = vld [vmem:[%s560 + $0x8] sm:$0xff]
        %v563 = vld [vmem:[%s560 + $0x10] sm:$0xff]
        %v564 = vld [vmem:[%s560 + $0x18] sm:$0xff]
        %v565 = vld [vmem:[%s560 + $0x20] sm:$0xff]
        %v566 = vld [vmem:[%s560 + $0x28] sm:$0xff]
        %v567 = vld [vmem:[%s560 + $0x30] sm:$0xff]
        %v568 = vld [vmem:[%s560 + $0x38] sm:$0xff]
        %v569 = vld [vmem:[%s560 + $0x40] sm:$0xff]
        %v570 = vld [vmem:[%s560 + $0x48] sm:$0xff]
        %v571 = vld [vmem:[%s560 + $0x50] sm:$0xff]
        %v572 = vld [vmem:[%s560 + $0x58] sm:$0xff]
        %v573 = vld [vmem:[%s560 + $0x60] sm:$0xff]
        %v574 = vld [vmem:[%s560 + $0x68] sm:$0xff]
        %v575 = vld [vmem:[%s560 + $0x70] sm:$0xff]
        %v576 = vld [vmem:[%s560 + $0x78] sm:$0xff]
        %577 = vmatprep.subr.mxu0 0.0
        %578 = vmatpush1.msra.mxu0 %v576
        %579 = vmatprep.subr.mxu0 0.0
        %580 = vmatpush1.msra.mxu0 %v575
        %581 = vmatprep.subr.mxu0 0.0
        %582 = vmatpush1.msra.mxu0 %v574
        %583 = vmatprep.subr.mxu0 0.0
        %584 = vmatpush1.msra.mxu0 %v573
        %585 = vmatprep.subr.mxu0 0.0
        %586 = vmatpush1.msra.mxu0 %v572
        %587 = vmatprep.subr.mxu0 0.0
        %588 = vmatpush1.msra.mxu0 %v571
        %589 = vmatprep.subr.mxu0 0.0
        %590 = vmatpush1.msra.mxu0 %v570
        %591 = vmatprep.subr.mxu0 0.0
        %592 = vmatpush1.msra.mxu0 %v569
        %593 = vmatprep.subr.mxu0 0.0
        %594 = vmatpush1.msra.mxu0 %v568
        %595 = vmatprep.subr.mxu0 0.0
        %596 = vmatpush1.msra.mxu0 %v567
        %597 = vmatprep.subr.mxu0 0.0
        %598 = vmatpush1.msra.mxu0 %v566
        %599 = vmatprep.subr.mxu0 0.0
        %600 = vmatpush1.msra.mxu0 %v565
        %601 = vmatprep.subr.mxu0 0.0
        %602 = vmatpush1.msra.mxu0 %v564
        %603 = vmatprep.subr.mxu0 0.0
        %604 = vmatpush1.msra.mxu0 %v563
        %605 = vmatprep.subr.mxu0 0.0
        %606 = vmatpush1.msra.mxu0 %v562
        %607 = vmatprep.subr.mxu0 0.0
        %608 = vmatpush1.msra.mxu0 %v561
        %609 = vmatprep.subr.mxu0 0.0
        %610 = vmatpush2.msra.mxu0 0.0
        %611 = vmatprep.subr.mxu0 0.0
        %612 = vmatpush2.msra.mxu0 0.0
        %613 = vmatprep.subr.mxu0 0.0
        %614 = vmatpush2.msra.mxu0 0.0
        %615 = vmatprep.subr.mxu0 0.0
        %616 = vmatpush2.msra.mxu0 0.0
        %617 = vmatprep.subr.mxu0 0.0
        %618 = vmatpush2.msra.mxu0 0.0
        %619 = vmatprep.subr.mxu0 0.0
        %620 = vmatpush2.msra.mxu0 0.0
        %621 = vmatprep.subr.mxu0 0.0
        %622 = vmatpush2.msra.mxu0 0.0
        %623 = vmatprep.subr.mxu0 0.0
        %624 = vmatpush2.msra.mxu0 0.0
        %625 = vmatprep.subr.mxu0 0.0
        %626 = vmatpush2.msra.mxu0 0.0
        %627 = vmatprep.subr.mxu0 0.0
        %628 = vmatpush2.msra.mxu0 0.0
        %629 = vmatprep.subr.mxu0 0.0
        %630 = vmatpush2.msra.mxu0 0.0
        %631 = vmatprep.subr.mxu0 0.0
        %632 = vmatpush2.msra.mxu0 0.0
        %633 = vmatprep.subr.mxu0 0.0
        %634 = vmatpush2.msra.mxu0 0.0
        %635 = vmatprep.subr.mxu0 0.0
        %636 = vmatpush2.msra.mxu0 0.0
        %637 = vmatprep.subr.mxu0 0.0
        %638 = vmatpush2.msra.mxu0 0.0
        %639 = vmatprep.subr.mxu0 0.0
        %640 = vmatpush2.msra.mxu0 0.0
        %641 = vmatprep.mubr.f32.mxu0 0.0
        %642 = vmatmul.mubr.f32.gmra.mxu0 %v455
        %v643 = vpop.f32.mrf.mxu0
        %v644 = vadd.f32 0.0, %v643
        %v645 = vpop.f32.mrf.mxu0
        %646 = vdwg.mxu0
        %s647 = sadd.s32 %s542, 1
        %s648 = smul.u32 %s647, 128
        %s649 = sld [smem:[#allocation4 + %s648]]
        %v650 = vstv %s649
        %v651 = vmul.f32 %v650, %v439
        %s652 = scalar_lea.vmem %s380, 8 [#allocation9]
        %v653 = vld [vmem:[%s652] sm:$0x1]
        %v654 = vadd.f32 %v651, %v653
        %v655 = vmul.f32 %v440, %v443
        %v656 = vadd.f32 %v655, %v644
        %v657 = vadd.f32 %v656, %v654
        %v658 = vxor.u32 %v657, 2147483648
        %v659 = vmul.f32 %v658, 1.442695
        %v660 = vpow.pop %v659
        %v661 = vadd.f32 %v660, 1.0
        %v662 = vrcp.pop %v661
        %v663 = vmul.f32 1.0, %v662
        %s664 = scalar_lea.vmem %s429, 8 [#allocation12]
        %665 = vst [vmem:[%s664] sm:$0x1] %v657
        %s666 = scalar_lea.vmem [#allocation2], 8
        %667 = vst [vmem:[%s666] sm:$0x1] %v663
        %v668 = vld [vmem:[%s371] sm:$0xff]
        %v669 = vld [vmem:[%s371 + $0x8] sm:$0xff]
        %v670 = vld [vmem:[%s371 + $0x10] sm:$0xff]
        %v671 = vld [vmem:[%s371 + $0x18] sm:$0xff]
        %v672 = vld [vmem:[%s371 + $0x20] sm:$0xff]
        %v673 = vld [vmem:[%s371 + $0x28] sm:$0xff]
        %v674 = vld [vmem:[%s371 + $0x30] sm:$0xff]
        %v675 = vld [vmem:[%s371 + $0x38] sm:$0xff]
        %v676 = vld [vmem:[%s371 + $0x40] sm:$0xff]
        %v677 = vld [vmem:[%s371 + $0x48] sm:$0xff]
        %v678 = vld [vmem:[%s371 + $0x50] sm:$0xff]
        %v679 = vld [vmem:[%s371 + $0x58] sm:$0xff]
        %v680 = vld [vmem:[%s371 + $0x60] sm:$0xff]
        %v681 = vld [vmem:[%s371 + $0x68] sm:$0xff]
        %v682 = vld [vmem:[%s371 + $0x70] sm:$0xff]
        %v683 = vld [vmem:[%s371 + $0x78] sm:$0xff]
        %684 = vmatprep.subr.mxu0 0.0
        %685 = vmatpush1.msra.mxu0 %v683
        %686 = vmatprep.subr.mxu0 0.0
        %687 = vmatpush1.msra.mxu0 %v682
        %688 = vmatprep.subr.mxu0 0.0
        %689 = vmatpush1.msra.mxu0 %v681
        %690 = vmatprep.subr.mxu0 0.0
        %691 = vmatpush1.msra.mxu0 %v680
        %692 = vmatprep.subr.mxu0 0.0
        %693 = vmatpush1.msra.mxu0 %v679
        %694 = vmatprep.subr.mxu0 0.0
        %695 = vmatpush1.msra.mxu0 %v678
        %696 = vmatprep.subr.mxu0 0.0
        %697 = vmatpush1.msra.mxu0 %v677
        %698 = vmatprep.subr.mxu0 0.0
        %699 = vmatpush1.msra.mxu0 %v676
        %700 = vmatprep.subr.mxu0 0.0
        %701 = vmatpush1.msra.mxu0 %v675
        %702 = vmatprep.subr.mxu0 0.0
        %703 = vmatpush1.msra.mxu0 %v674
        %704 = vmatprep.subr.mxu0 0.0
        %705 = vmatpush1.msra.mxu0 %v673
        %706 = vmatprep.subr.mxu0 0.0
        %707 = vmatpush1.msra.mxu0 %v672
        %708 = vmatprep.subr.mxu0 0.0
        %709 = vmatpush1.msra.mxu0 %v671
        %710 = vmatprep.subr.mxu0 0.0
        %711 = vmatpush1.msra.mxu0 %v670
        %712 = vmatprep.subr.mxu0 0.0
        %713 = vmatpush1.msra.mxu0 %v669
        %714 = vmatprep.subr.mxu0 0.0
        %715 = vmatpush1.msra.mxu0 %v668
        %716 = vmatprep.subr.mxu0 0.0
        %717 = vmatpush2.msra.mxu0 0.0
        %718 = vmatprep.subr.mxu0 0.0
        %719 = vmatpush2.msra.mxu0 0.0
        %720 = vmatprep.subr.mxu0 0.0
        %721 = vmatpush2.msra.mxu0 0.0
        %722 = vmatprep.subr.mxu0 0.0
        %723 = vmatpush2.msra.mxu0 0.0
        %724 = vmatprep.subr.mxu0 0.0
        %725 = vmatpush2.msra.mxu0 0.0
        %726 = vmatprep.subr.mxu0 0.0
        %727 = vmatpush2.msra.mxu0 0.0
        %728 = vmatprep.subr.mxu0 0.0
        %729 = vmatpush2.msra.mxu0 0.0
        %730 = vmatprep.subr.mxu0 0.0
        %731 = vmatpush2.msra.mxu0 0.0
        %732 = vmatprep.subr.mxu0 0.0
        %733 = vmatpush2.msra.mxu0 0.0
        %734 = vmatprep.subr.mxu0 0.0
        %735 = vmatpush2.msra.mxu0 0.0
        %736 = vmatprep.subr.mxu0 0.0
        %737 = vmatpush2.msra.mxu0 0.0
        %738 = vmatprep.subr.mxu0 0.0
        %739 = vmatpush2.msra.mxu0 0.0
        %740 = vmatprep.subr.mxu0 0.0
        %741 = vmatpush2.msra.mxu0 0.0
        %742 = vmatprep.subr.mxu0 0.0
        %743 = vmatpush2.msra.mxu0 0.0
        %744 = vmatprep.subr.mxu0 0.0
        %745 = vmatpush2.msra.mxu0 0.0
        %746 = vmatprep.subr.mxu0 0.0
        %747 = vmatpush2.msra.mxu0 0.0
        %748 = vmatprep.mubr.f32.mxu0 0.0
        %749 = vmatmul.mubr.f32.gmra.mxu0 %v557
        %v750 = vpop.f32.mrf.mxu0
        %v751 = vadd.f32 0.0, %v750
        %v752 = vpop.f32.mrf.mxu0
        %753 = vdwg.mxu0
        %s754 = sadd.s32 %s543, 1
        %s755 = sld [smem:[#allocation4 + %s754]]
        %v756 = vstv %s755
        %v757 = vmul.f32 %v756, %v439
        %v758 = vld [vmem:[%s380 + $0x1] sm:$0x1]
        %v759 = vadd.f32 %v757, %v758
        %v760 = vmul.f32 %v440, %v551
        %v761 = vadd.f32 %v760, %v751
        %v762 = vadd.f32 %v761, %v759
        %v763 = vxor.u32 %v762, 2147483648
        %v764 = vmul.f32 %v763, 1.442695
        %v765 = vpow.pop %v764
        %v766 = vadd.f32 %v765, 1.0
        %v767 = vrcp.pop %v766
        %v768 = vmul.f32 1.0, %v767
        %769 = vst [vmem:[%s429 + $0x1] sm:$0x1] %v762
        %770 = vst [vmem:[#allocation2 + $0x1] sm:$0x1] %v768
        %v771 = vld [vmem:[%s560] sm:$0xff]
        %v772 = vld [vmem:[%s560 + $0x8] sm:$0xff]
        %v773 = vld [vmem:[%s560 + $0x10] sm:$0xff]
        %v774 = vld [vmem:[%s560 + $0x18] sm:$0xff]
        %v775 = vld [vmem:[%s560 + $0x20] sm:$0xff]
        %v776 = vld [vmem:[%s560 + $0x28] sm:$0xff]
        %v777 = vld [vmem:[%s560 + $0x30] sm:$0xff]
        %v778 = vld [vmem:[%s560 + $0x38] sm:$0xff]
        %v779 = vld [vmem:[%s560 + $0x40] sm:$0xff]
        %v780 = vld [vmem:[%s560 + $0x48] sm:$0xff]
        %v781 = vld [vmem:[%s560 + $0x50] sm:$0xff]
        %v782 = vld [vmem:[%s560 + $0x58] sm:$0xff]
        %v783 = vld [vmem:[%s560 + $0x60] sm:$0xff]
        %v784 = vld [vmem:[%s560 + $0x68] sm:$0xff]
        %v785 = vld [vmem:[%s560 + $0x70] sm:$0xff]
        %v786 = vld [vmem:[%s560 + $0x78] sm:$0xff]
        %787 = vmatprep.subr.mxu0 0.0
        %788 = vmatpush1.msra.mxu0 %v786
        %789 = vmatprep.subr.mxu0 0.0
        %790 = vmatpush1.msra.mxu0 %v785
        %791 = vmatprep.subr.mxu0 0.0
        %792 = vmatpush1.msra.mxu0 %v784
        %793 = vmatprep.subr.mxu0 0.0
        %794 = vmatpush1.msra.mxu0 %v783
        %795 = vmatprep.subr.mxu0 0.0
        %796 = vmatpush1.msra.mxu0 %v782
        %797 = vmatprep.subr.mxu0 0.0
        %798 = vmatpush1.msra.mxu0 %v781
        %799 = vmatprep.subr.mxu0 0.0
        %800 = vmatpush1.msra.mxu0 %v780
        %801 = vmatprep.subr.mxu0 0.0
        %802 = vmatpush1.msra.mxu0 %v779
        %803 = vmatprep.subr.mxu0 0.0
        %804 = vmatpush1.msra.mxu0 %v778
        %805 = vmatprep.subr.mxu0 0.0
        %806 = vmatpush1.msra.mxu0 %v777
        %807 = vmatprep.subr.mxu0 0.0
        %808 = vmatpush1.msra.mxu0 %v776
        %809 = vmatprep.subr.mxu0 0.0
        %810 = vmatpush1.msra.mxu0 %v775
        %811 = vmatprep.subr.mxu0 0.0
        %812 = vmatpush1.msra.mxu0 %v774
        %813 = vmatprep.subr.mxu0 0.0
        %814 = vmatpush1.msra.mxu0 %v773
        %815 = vmatprep.subr.mxu0 0.0
        %816 = vmatpush1.msra.mxu0 %v772
        %817 = vmatprep.subr.mxu0 0.0
        %818 = vmatpush1.msra.mxu0 %v771
        %819 = vmatprep.subr.mxu0 0.0
        %820 = vmatpush2.msra.mxu0 0.0
        %821 = vmatprep.subr.mxu0 0.0
        %822 = vmatpush2.msra.mxu0 0.0
        %823 = vmatprep.subr.mxu0 0.0
        %824 = vmatpush2.msra.mxu0 0.0
        %825 = vmatprep.subr.mxu0 0.0
        %826 = vmatpush2.msra.mxu0 0.0
        %827 = vmatprep.subr.mxu0 0.0
        %828 = vmatpush2.msra.mxu0 0.0
        %829 = vmatprep.subr.mxu0 0.0
        %830 = vmatpush2.msra.mxu0 0.0
        %831 = vmatprep.subr.mxu0 0.0
        %832 = vmatpush2.msra.mxu0 0.0
        %833 = vmatprep.subr.mxu0 0.0
        %834 = vmatpush2.msra.mxu0 0.0
        %835 = vmatprep.subr.mxu0 0.0
        %836 = vmatpush2.msra.mxu0 0.0
        %837 = vmatprep.subr.mxu0 0.0
        %838 = vmatpush2.msra.mxu0 0.0
        %839 = vmatprep.subr.mxu0 0.0
        %840 = vmatpush2.msra.mxu0 0.0
        %841 = vmatprep.subr.mxu0 0.0
        %842 = vmatpush2.msra.mxu0 0.0
        %843 = vmatprep.subr.mxu0 0.0
        %844 = vmatpush2.msra.mxu0 0.0
        %845 = vmatprep.subr.mxu0 0.0
        %846 = vmatpush2.msra.mxu0 0.0
        %847 = vmatprep.subr.mxu0 0.0
        %848 = vmatpush2.msra.mxu0 0.0
        %849 = vmatprep.subr.mxu0 0.0
        %850 = vmatpush2.msra.mxu0 0.0
        %851 = vmatprep.mubr.f32.mxu0 0.0
        %852 = vmatmul.mubr.f32.gmra.mxu0 %v663
        %v853 = vpop.f32.mrf.mxu0
        %v854 = vadd.f32 0.0, %v853
        %v855 = vpop.f32.mrf.mxu0
        %856 = vdwg.mxu0
        %s857 = sadd.s32 %s648, 1
        %s858 = sld [smem:[#allocation4 + %s857]]
        %v859 = vstv %s858
        %v860 = vmul.f32 %v859, %v439
        %v861 = vld [vmem:[%s652 + $0x1] sm:$0x1]
        %v862 = vadd.f32 %v860, %v861
        %v863 = vmul.f32 %v440, %v657
        %v864 = vadd.f32 %v863, %v854
        %v865 = vadd.f32 %v864, %v862
        %v866 = vxor.u32 %v865, 2147483648
        %v867 = vmul.f32 %v866, 1.442695
        %v868 = vpow.pop %v867
        %v869 = vadd.f32 %v868, 1.0
        %v870 = vrcp.pop %v869
        %v871 = vmul.f32 1.0, %v870
        %872 = vst [vmem:[%s664 + $0x1] sm:$0x1] %v865
        %873 = vst [vmem:[%s666 + $0x1] sm:$0x1] %v871
        %v874 = vld [vmem:[%s371] sm:$0xff]
        %v875 = vld [vmem:[%s371 + $0x8] sm:$0xff]
        %v876 = vld [vmem:[%s371 + $0x10] sm:$0xff]
        %v877 = vld [vmem:[%s371 + $0x18] sm:$0xff]
        %v878 = vld [vmem:[%s371 + $0x20] sm:$0xff]
        %v879 = vld [vmem:[%s371 + $0x28] sm:$0xff]
        %v880 = vld [vmem:[%s371 + $0x30] sm:$0xff]
        %v881 = vld [vmem:[%s371 + $0x38] sm:$0xff]
        %v882 = vld [vmem:[%s371 + $0x40] sm:$0xff]
        %v883 = vld [vmem:[%s371 + $0x48] sm:$0xff]
        %v884 = vld [vmem:[%s371 + $0x50] sm:$0xff]
        %v885 = vld [vmem:[%s371 + $0x58] sm:$0xff]
        %v886 = vld [vmem:[%s371 + $0x60] sm:$0xff]
        %v887 = vld [vmem:[%s371 + $0x68] sm:$0xff]
        %v888 = vld [vmem:[%s371 + $0x70] sm:$0xff]
        %v889 = vld [vmem:[%s371 + $0x78] sm:$0xff]
        %890 = vmatprep.subr.mxu0 0.0
        %891 = vmatpush1.msra.mxu0 %v889
        %892 = vmatprep.subr.mxu0 0.0
        %893 = vmatpush1.msra.mxu0 %v888
        %894 = vmatprep.subr.mxu0 0.0
        %895 = vmatpush1.msra.mxu0 %v887
        %896 = vmatprep.subr.mxu0 0.0
        %897 = vmatpush1.msra.mxu0 %v886
        %898 = vmatprep.subr.mxu0 0.0
        %899 = vmatpush1.msra.mxu0 %v885
        %900 = vmatprep.subr.mxu0 0.0
        %901 = vmatpush1.msra.mxu0 %v884
        %902 = vmatprep.subr.mxu0 0.0
        %903 = vmatpush1.msra.mxu0 %v883
        %904 = vmatprep.subr.mxu0 0.0
        %905 = vmatpush1.msra.mxu0 %v882
        %906 = vmatprep.subr.mxu0 0.0
        %907 = vmatpush1.msra.mxu0 %v881
        %908 = vmatprep.subr.mxu0 0.0
        %909 = vmatpush1.msra.mxu0 %v880
        %910 = vmatprep.subr.mxu0 0.0
        %911 = vmatpush1.msra.mxu0 %v879
        %912 = vmatprep.subr.mxu0 0.0
        %913 = vmatpush1.msra.mxu0 %v878
        %914 = vmatprep.subr.mxu0 0.0
        %915 = vmatpush1.msra.mxu0 %v877
        %916 = vmatprep.subr.mxu0 0.0
        %917 = vmatpush1.msra.mxu0 %v876
        %918 = vmatprep.subr.mxu0 0.0
        %919 = vmatpush1.msra.mxu0 %v875
        %920 = vmatprep.subr.mxu0 0.0
        %921 = vmatpush1.msra.mxu0 %v874
        %922 = vmatprep.subr.mxu0 0.0
        %923 = vmatpush2.msra.mxu0 0.0
        %924 = vmatprep.subr.mxu0 0.0
        %925 = vmatpush2.msra.mxu0 0.0
        %926 = vmatprep.subr.mxu0 0.0
        %927 = vmatpush2.msra.mxu0 0.0
        %928 = vmatprep.subr.mxu0 0.0
        %929 = vmatpush2.msra.mxu0 0.0
        %930 = vmatprep.subr.mxu0 0.0
        %931 = vmatpush2.msra.mxu0 0.0
        %932 = vmatprep.subr.mxu0 0.0
        %933 = vmatpush2.msra.mxu0 0.0
        %934 = vmatprep.subr.mxu0 0.0
        %935 = vmatpush2.msra.mxu0 0.0
        %936 = vmatprep.subr.mxu0 0.0
        %937 = vmatpush2.msra.mxu0 0.0
        %938 = vmatprep.subr.mxu0 0.0
        %939 = vmatpush2.msra.mxu0 0.0
        %940 = vmatprep.subr.mxu0 0.0
        %941 = vmatpush2.msra.mxu0 0.0
        %942 = vmatprep.subr.mxu0 0.0
        %943 = vmatpush2.msra.mxu0 0.0
        %944 = vmatprep.subr.mxu0 0.0
        %945 = vmatpush2.msra.mxu0 0.0
        %946 = vmatprep.subr.mxu0 0.0
        %947 = vmatpush2.msra.mxu0 0.0
        %948 = vmatprep.subr.mxu0 0.0
        %949 = vmatpush2.msra.mxu0 0.0
        %950 = vmatprep.subr.mxu0 0.0
        %951 = vmatpush2.msra.mxu0 0.0
        %952 = vmatprep.subr.mxu0 0.0
        %953 = vmatpush2.msra.mxu0 0.0
        %954 = vmatprep.mubr.f32.mxu0 0.0
        %955 = vmatmul.mubr.f32.gmra.mxu0 %v768
        %v956 = vpop.f32.mrf.mxu0
        %v957 = vadd.f32 0.0, %v956
        %v958 = vpop.f32.mrf.mxu0
        %959 = vdwg.mxu0
        %s960 = sadd.s32 %s543, 2
        %s961 = sld [smem:[#allocation4 + %s960]]
        %v962 = vstv %s961
        %v963 = vmul.f32 %v962, %v439
        %v964 = vld [vmem:[%s380 + $0x2] sm:$0x1]
        %v965 = vadd.f32 %v963, %v964
        %v966 = vmul.f32 %v440, %v762
        %v967 = vadd.f32 %v966, %v957
        %v968 = vadd.f32 %v967, %v965
        %v969 = vxor.u32 %v968, 2147483648
        %v970 = vmul.f32 %v969, 1.442695
        %v971 = vpow.pop %v970
        %v972 = vadd.f32 %v971, 1.0
        %v973 = vrcp.pop %v972
        %v974 = vmul.f32 1.0, %v973
        %975 = vst [vmem:[%s429 + $0x2] sm:$0x1] %v968
        %976 = vst [vmem:[#allocation2 + $0x2] sm:$0x1] %v974
        %v977 = vld [vmem:[%s560] sm:$0xff]
        %v978 = vld [vmem:[%s560 + $0x8] sm:$0xff]
        %v979 = vld [vmem:[%s560 + $0x10] sm:$0xff]
        %v980 = vld [vmem:[%s560 + $0x18] sm:$0xff]
        %v981 = vld [vmem:[%s560 + $0x20] sm:$0xff]
        %v982 = vld [vmem:[%s560 + $0x28] sm:$0xff]
        %v983 = vld [vmem:[%s560 + $0x30] sm:$0xff]
        %v984 = vld [vmem:[%s560 + $0x38] sm:$0xff]
        %v985 = vld [vmem:[%s560 + $0x40] sm:$0xff]
        %v986 = vld [vmem:[%s560 + $0x48] sm:$0xff]
        %v987 = vld [vmem:[%s560 + $0x50] sm:$0xff]
        %v988 = vld [vmem:[%s560 + $0x58] sm:$0xff]
        %v989 = vld [vmem:[%s560 + $0x60] sm:$0xff]
        %v990 = vld [vmem:[%s560 + $0x68] sm:$0xff]
        %v991 = vld [vmem:[%s560 + $0x70] sm:$0xff]
        %v992 = vld [vmem:[%s560 + $0x78] sm:$0xff]
        %993 = vmatprep.subr.mxu0 0.0
        %994 = vmatpush1.msra.mxu0 %v992
        %995 = vmatprep.subr.mxu0 0.0
        %996 = vmatpush1.msra.mxu0 %v991
        %997 = vmatprep.subr.mxu0 0.0
        %998 = vmatpush1.msra.mxu0 %v990
        %999 = vmatprep.subr.mxu0 0.0
        %1000 = vmatpush1.msra.mxu0 %v989
        %1001 = vmatprep.subr.mxu0 0.0
        %1002 = vmatpush1.msra.mxu0 %v988
        %1003 = vmatprep.subr.mxu0 0.0
        %1004 = vmatpush1.msra.mxu0 %v987
        %1005 = vmatprep.subr.mxu0 0.0
        %1006 = vmatpush1.msra.mxu0 %v986
        %1007 = vmatprep.subr.mxu0 0.0
        %1008 = vmatpush1.msra.mxu0 %v985
        %1009 = vmatprep.subr.mxu0 0.0
        %1010 = vmatpush1.msra.mxu0 %v984
        %1011 = vmatprep.subr.mxu0 0.0
        %1012 = vmatpush1.msra.mxu0 %v983
        %1013 = vmatprep.subr.mxu0 0.0
        %1014 = vmatpush1.msra.mxu0 %v982
        %1015 = vmatprep.subr.mxu0 0.0
        %1016 = vmatpush1.msra.mxu0 %v981
        %1017 = vmatprep.subr.mxu0 0.0
        %1018 = vmatpush1.msra.mxu0 %v980
        %1019 = vmatprep.subr.mxu0 0.0
        %1020 = vmatpush1.msra.mxu0 %v979
        %1021 = vmatprep.subr.mxu0 0.0
        %1022 = vmatpush1.msra.mxu0 %v978
        %1023 = vmatprep.subr.mxu0 0.0
        %1024 = vmatpush1.msra.mxu0 %v977
        %1025 = vmatprep.subr.mxu0 0.0
        %1026 = vmatpush2.msra.mxu0 0.0
        %1027 = vmatprep.subr.mxu0 0.0
        %1028 = vmatpush2.msra.mxu0 0.0
        %1029 = vmatprep.subr.mxu0 0.0
        %1030 = vmatpush2.msra.mxu0 0.0
        %1031 = vmatprep.subr.mxu0 0.0
        %1032 = vmatpush2.msra.mxu0 0.0
        %1033 = vmatprep.subr.mxu0 0.0
        %1034 = vmatpush2.msra.mxu0 0.0
        %1035 = vmatprep.subr.mxu0 0.0
        %1036 = vmatpush2.msra.mxu0 0.0
        %1037 = vmatprep.subr.mxu0 0.0
        %1038 = vmatpush2.msra.mxu0 0.0
        %1039 = vmatprep.subr.mxu0 0.0
        %1040 = vmatpush2.msra.mxu0 0.0
        %1041 = vmatprep.subr.mxu0 0.0
        %1042 = vmatpush2.msra.mxu0 0.0
        %1043 = vmatprep.subr.mxu0 0.0
        %1044 = vmatpush2.msra.mxu0 0.0
        %1045 = vmatprep.subr.mxu0 0.0
        %1046 = vmatpush2.msra.mxu0 0.0
        %1047 = vmatprep.subr.mxu0 0.0
        %1048 = vmatpush2.msra.mxu0 0.0
        %1049 = vmatprep.subr.mxu0 0.0
        %1050 = vmatpush2.msra.mxu0 0.0
        %1051 = vmatprep.subr.mxu0 0.0
        %1052 = vmatpush2.msra.mxu0 0.0
        %1053 = vmatprep.subr.mxu0 0.0
        %1054 = vmatpush2.msra.mxu0 0.0
        %1055 = vmatprep.subr.mxu0 0.0
        %1056 = vmatpush2.msra.mxu0 0.0
        %1057 = vmatprep.mubr.f32.mxu0 0.0
        %1058 = vmatmul.mubr.f32.gmra.mxu0 %v871
        %v1059 = vpop.f32.mrf.mxu0
        %v1060 = vadd.f32 0.0, %v1059
        %v1061 = vpop.f32.mrf.mxu0
        %1062 = vdwg.mxu0
        %s1063 = sadd.s32 %s648, 2
        %s1064 = sld [smem:[#allocation4 + %s1063]]
        %v1065 = vstv %s1064
        %v1066 = vmul.f32 %v1065, %v439
        %v1067 = vld [vmem:[%s652 + $0x2] sm:$0x1]
        %v1068 = vadd.f32 %v1066, %v1067
        %v1069 = vmul.f32 %v440, %v865
        %v1070 = vadd.f32 %v1069, %v1060
        %v1071 = vadd.f32 %v1070, %v1068
        %v1072 = vxor.u32 %v1071, 2147483648
        %v1073 = vmul.f32 %v1072, 1.442695
        %v1074 = vpow.pop %v1073
        %v1075 = vadd.f32 %v1074, 1.0
        %v1076 = vrcp.pop %v1075
        %v1077 = vmul.f32 1.0, %v1076
        %1078 = vst [vmem:[%s664 + $0x2] sm:$0x1] %v1071
        %1079 = vst [vmem:[%s666 + $0x2] sm:$0x1] %v1077
        %v1080 = vld [vmem:[%s371] sm:$0xff]
        %v1081 = vld [vmem:[%s371 + $0x8] sm:$0xff]
        %v1082 = vld [vmem:[%s371 + $0x10] sm:$0xff]
        %v1083 = vld [vmem:[%s371 + $0x18] sm:$0xff]
        %v1084 = vld [vmem:[%s371 + $0x20] sm:$0xff]
        %v1085 = vld [vmem:[%s371 + $0x28] sm:$0xff]
        %v1086 = vld [vmem:[%s371 + $0x30] sm:$0xff]
        %v1087 = vld [vmem:[%s371 + $0x38] sm:$0xff]
        %v1088 = vld [vmem:[%s371 + $0x40] sm:$0xff]
        %v1089 = vld [vmem:[%s371 + $0x48] sm:$0xff]
        %v1090 = vld [vmem:[%s371 + $0x50] sm:$0xff]
        %v1091 = vld [vmem:[%s371 + $0x58] sm:$0xff]
        %v1092 = vld [vmem:[%s371 + $0x60] sm:$0xff]
        %v1093 = vld [vmem:[%s371 + $0x68] sm:$0xff]
        %v1094 = vld [vmem:[%s371 + $0x70] sm:$0xff]
        %v1095 = vld [vmem:[%s371 + $0x78] sm:$0xff]
        %1096 = vmatprep.subr.mxu0 0.0
        %1097 = vmatpush1.msra.mxu0 %v1095
        %1098 = vmatprep.subr.mxu0 0.0
        %1099 = vmatpush1.msra.mxu0 %v1094
        %1100 = vmatprep.subr.mxu0 0.0
        %1101 = vmatpush1.msra.mxu0 %v1093
        %1102 = vmatprep.subr.mxu0 0.0
        %1103 = vmatpush1.msra.mxu0 %v1092
        %1104 = vmatprep.subr.mxu0 0.0
        %1105 = vmatpush1.msra.mxu0 %v1091
        %1106 = vmatprep.subr.mxu0 0.0
        %1107 = vmatpush1.msra.mxu0 %v1090
        %1108 = vmatprep.subr.mxu0 0.0
        %1109 = vmatpush1.msra.mxu0 %v1089
        %1110 = vmatprep.subr.mxu0 0.0
        %1111 = vmatpush1.msra.mxu0 %v1088
        %1112 = vmatprep.subr.mxu0 0.0
        %1113 = vmatpush1.msra.mxu0 %v1087
        %1114 = vmatprep.subr.mxu0 0.0
        %1115 = vmatpush1.msra.mxu0 %v1086
        %1116 = vmatprep.subr.mxu0 0.0
        %1117 = vmatpush1.msra.mxu0 %v1085
        %1118 = vmatprep.subr.mxu0 0.0
        %1119 = vmatpush1.msra.mxu0 %v1084
        %1120 = vmatprep.subr.mxu0 0.0
        %1121 = vmatpush1.msra.mxu0 %v1083
        %1122 = vmatprep.subr.mxu0 0.0
        %1123 = vmatpush1.msra.mxu0 %v1082
        %1124 = vmatprep.subr.mxu0 0.0
        %1125 = vmatpush1.msra.mxu0 %v1081
        %1126 = vmatprep.subr.mxu0 0.0
        %1127 = vmatpush1.msra.mxu0 %v1080
        %1128 = vmatprep.subr.mxu0 0.0
        %1129 = vmatpush2.msra.mxu0 0.0
        %1130 = vmatprep.subr.mxu0 0.0
        %1131 = vmatpush2.msra.mxu0 0.0
        %1132 = vmatprep.subr.mxu0 0.0
        %1133 = vmatpush2.msra.mxu0 0.0
        %1134 = vmatprep.subr.mxu0 0.0
        %1135 = vmatpush2.msra.mxu0 0.0
        %1136 = vmatprep.subr.mxu0 0.0
        %1137 = vmatpush2.msra.mxu0 0.0
        %1138 = vmatprep.subr.mxu0 0.0
        %1139 = vmatpush2.msra.mxu0 0.0
        %1140 = vmatprep.subr.mxu0 0.0
        %1141 = vmatpush2.msra.mxu0 0.0
        %1142 = vmatprep.subr.mxu0 0.0
        %1143 = vmatpush2.msra.mxu0 0.0
        %1144 = vmatprep.subr.mxu0 0.0
        %1145 = vmatpush2.msra.mxu0 0.0
        %1146 = vmatprep.subr.mxu0 0.0
        %1147 = vmatpush2.msra.mxu0 0.0
        %1148 = vmatprep.subr.mxu0 0.0
        %1149 = vmatpush2.msra.mxu0 0.0
        %1150 = vmatprep.subr.mxu0 0.0
        %1151 = vmatpush2.msra.mxu0 0.0
        %1152 = vmatprep.subr.mxu0 0.0
        %1153 = vmatpush2.msra.mxu0 0.0
        %1154 = vmatprep.subr.mxu0 0.0
        %1155 = vmatpush2.msra.mxu0 0.0
        %1156 = vmatprep.subr.mxu0 0.0
        %1157 = vmatpush2.msra.mxu0 0.0
        %1158 = vmatprep.subr.mxu0 0.0
        %1159 = vmatpush2.msra.mxu0 0.0
        %1160 = vmatprep.mubr.f32.mxu0 0.0
        %1161 = vmatmul.mubr.f32.gmra.mxu0 %v974
        %v1162 = vpop.f32.mrf.mxu0
        %v1163 = vadd.f32 0.0, %v1162
        %v1164 = vpop.f32.mrf.mxu0
        %1165 = vdwg.mxu0
        %s1166 = sadd.s32 %s543, 3
        %s1167 = sld [smem:[#allocation4 + %s1166]]
        %v1168 = vstv %s1167
        %v1169 = vmul.f32 %v1168, %v439
        %v1170 = vld [vmem:[%s380 + $0x3] sm:$0x1]
        %v1171 = vadd.f32 %v1169, %v1170
        %v1172 = vmul.f32 %v440, %v968
        %v1173 = vadd.f32 %v1172, %v1163
        %v1174 = vadd.f32 %v1173, %v1171
        %v1175 = vxor.u32 %v1174, 2147483648
        %v1176 = vmul.f32 %v1175, 1.442695
        %v1177 = vpow.pop %v1176
        %v1178 = vadd.f32 %v1177, 1.0
        %v1179 = vrcp.pop %v1178
        %v1180 = vmul.f32 1.0, %v1179
        %1181 = vst [vmem:[%s429 + $0x3] sm:$0x1] %v1174
        %1182 = vst [vmem:[#allocation2 + $0x3] sm:$0x1] %v1180
        %v1183 = vld [vmem:[%s560] sm:$0xff]
        %v1184 = vld [vmem:[%s560 + $0x8] sm:$0xff]
        %v1185 = vld [vmem:[%s560 + $0x10] sm:$0xff]
        %v1186 = vld [vmem:[%s560 + $0x18] sm:$0xff]
        %v1187 = vld [vmem:[%s560 + $0x20] sm:$0xff]
        %v1188 = vld [vmem:[%s560 + $0x28] sm:$0xff]
        %v1189 = vld [vmem:[%s560 + $0x30] sm:$0xff]
        %v1190 = vld [vmem:[%s560 + $0x38] sm:$0xff]
        %v1191 = vld [vmem:[%s560 + $0x40] sm:$0xff]
        %v1192 = vld [vmem:[%s560 + $0x48] sm:$0xff]
        %v1193 = vld [vmem:[%s560 + $0x50] sm:$0xff]
        %v1194 = vld [vmem:[%s560 + $0x58] sm:$0xff]
        %v1195 = vld [vmem:[%s560 + $0x60] sm:$0xff]
        %v1196 = vld [vmem:[%s560 + $0x68] sm:$0xff]
        %v1197 = vld [vmem:[%s560 + $0x70] sm:$0xff]
        %v1198 = vld [vmem:[%s560 + $0x78] sm:$0xff]
        %1199 = vmatprep.subr.mxu0 0.0
        %1200 = vmatpush1.msra.mxu0 %v1198
        %1201 = vmatprep.subr.mxu0 0.0
        %1202 = vmatpush1.msra.mxu0 %v1197
        %1203 = vmatprep.subr.mxu0 0.0
        %1204 = vmatpush1.msra.mxu0 %v1196
        %1205 = vmatprep.subr.mxu0 0.0
        %1206 = vmatpush1.msra.mxu0 %v1195
        %1207 = vmatprep.subr.mxu0 0.0
        %1208 = vmatpush1.msra.mxu0 %v1194
        %1209 = vmatprep.subr.mxu0 0.0
        %1210 = vmatpush1.msra.mxu0 %v1193
        %1211 = vmatprep.subr.mxu0 0.0
        %1212 = vmatpush1.msra.mxu0 %v1192
        %1213 = vmatprep.subr.mxu0 0.0
        %1214 = vmatpush1.msra.mxu0 %v1191
        %1215 = vmatprep.subr.mxu0 0.0
        %1216 = vmatpush1.msra.mxu0 %v1190
        %1217 = vmatprep.subr.mxu0 0.0
        %1218 = vmatpush1.msra.mxu0 %v1189
        %1219 = vmatprep.subr.mxu0 0.0
        %1220 = vmatpush1.msra.mxu0 %v1188
        %1221 = vmatprep.subr.mxu0 0.0
        %1222 = vmatpush1.msra.mxu0 %v1187
        %1223 = vmatprep.subr.mxu0 0.0
        %1224 = vmatpush1.msra.mxu0 %v1186
        %1225 = vmatprep.subr.mxu0 0.0
        %1226 = vmatpush1.msra.mxu0 %v1185
        %1227 = vmatprep.subr.mxu0 0.0
        %1228 = vmatpush1.msra.mxu0 %v1184
        %1229 = vmatprep.subr.mxu0 0.0
        %1230 = vmatpush1.msra.mxu0 %v1183
        %1231 = vmatprep.subr.mxu0 0.0
        %1232 = vmatpush2.msra.mxu0 0.0
        %1233 = vmatprep.subr.mxu0 0.0
        %1234 = vmatpush2.msra.mxu0 0.0
        %1235 = vmatprep.subr.mxu0 0.0
        %1236 = vmatpush2.msra.mxu0 0.0
        %1237 = vmatprep.subr.mxu0 0.0
        %1238 = vmatpush2.msra.mxu0 0.0
        %1239 = vmatprep.subr.mxu0 0.0
        %1240 = vmatpush2.msra.mxu0 0.0
        %1241 = vmatprep.subr.mxu0 0.0
        %1242 = vmatpush2.msra.mxu0 0.0
        %1243 = vmatprep.subr.mxu0 0.0
        %1244 = vmatpush2.msra.mxu0 0.0
        %1245 = vmatprep.subr.mxu0 0.0
        %1246 = vmatpush2.msra.mxu0 0.0
        %1247 = vmatprep.subr.mxu0 0.0
        %1248 = vmatpush2.msra.mxu0 0.0
        %1249 = vmatprep.subr.mxu0 0.0
        %1250 = vmatpush2.msra.mxu0 0.0
        %1251 = vmatprep.subr.mxu0 0.0
        %1252 = vmatpush2.msra.mxu0 0.0
        %1253 = vmatprep.subr.mxu0 0.0
        %1254 = vmatpush2.msra.mxu0 0.0
        %1255 = vmatprep.subr.mxu0 0.0
        %1256 = vmatpush2.msra.mxu0 0.0
        %1257 = vmatprep.subr.mxu0 0.0
        %1258 = vmatpush2.msra.mxu0 0.0
        %1259 = vmatprep.subr.mxu0 0.0
        %1260 = vmatpush2.msra.mxu0 0.0
        %1261 = vmatprep.subr.mxu0 0.0
        %1262 = vmatpush2.msra.mxu0 0.0
        %1263 = vmatprep.mubr.f32.mxu0 0.0
        %1264 = vmatmul.mubr.f32.gmra.mxu0 %v1077
        %v1265 = vpop.f32.mrf.mxu0
        %v1266 = vadd.f32 0.0, %v1265
        %v1267 = vpop.f32.mrf.mxu0
        %1268 = vdwg.mxu0
        %s1269 = sadd.s32 %s648, 3
        %s1270 = sld [smem:[#allocation4 + %s1269]]
        %v1271 = vstv %s1270
        %v1272 = vmul.f32 %v1271, %v439
        %v1273 = vld [vmem:[%s652 + $0x3] sm:$0x1]
        %v1274 = vadd.f32 %v1272, %v1273
        %v1275 = vmul.f32 %v440, %v1071
        %v1276 = vadd.f32 %v1275, %v1266
        %v1277 = vadd.f32 %v1276, %v1274
        %v1278 = vxor.u32 %v1277, 2147483648
        %v1279 = vmul.f32 %v1278, 1.442695
        %v1280 = vpow.pop %v1279
        %v1281 = vadd.f32 %v1280, 1.0
        %v1282 = vrcp.pop %v1281
        %v1283 = vmul.f32 1.0, %v1282
        %1284 = vst [vmem:[%s664 + $0x3] sm:$0x1] %v1277
        %1285 = vst [vmem:[%s666 + $0x3] sm:$0x1] %v1283
        %v1286 = vld [vmem:[%s371] sm:$0xff]
        %v1287 = vld [vmem:[%s371 + $0x8] sm:$0xff]
        %v1288 = vld [vmem:[%s371 + $0x10] sm:$0xff]
        %v1289 = vld [vmem:[%s371 + $0x18] sm:$0xff]
        %v1290 = vld [vmem:[%s371 + $0x20] sm:$0xff]
        %v1291 = vld [vmem:[%s371 + $0x28] sm:$0xff]
        %v1292 = vld [vmem:[%s371 + $0x30] sm:$0xff]
        %v1293 = vld [vmem:[%s371 + $0x38] sm:$0xff]
        %v1294 = vld [vmem:[%s371 + $0x40] sm:$0xff]
        %v1295 = vld [vmem:[%s371 + $0x48] sm:$0xff]
        %v1296 = vld [vmem:[%s371 + $0x50] sm:$0xff]
        %v1297 = vld [vmem:[%s371 + $0x58] sm:$0xff]
        %v1298 = vld [vmem:[%s371 + $0x60] sm:$0xff]
        %v1299 = vld [vmem:[%s371 + $0x68] sm:$0xff]
        %v1300 = vld [vmem:[%s371 + $0x70] sm:$0xff]
        %v1301 = vld [vmem:[%s371 + $0x78] sm:$0xff]
        %1302 = vmatprep.subr.mxu0 0.0
        %1303 = vmatpush1.msra.mxu0 %v1301
        %1304 = vmatprep.subr.mxu0 0.0
        %1305 = vmatpush1.msra.mxu0 %v1300
        %1306 = vmatprep.subr.mxu0 0.0
        %1307 = vmatpush1.msra.mxu0 %v1299
        %1308 = vmatprep.subr.mxu0 0.0
        %1309 = vmatpush1.msra.mxu0 %v1298
        %1310 = vmatprep.subr.mxu0 0.0
        %1311 = vmatpush1.msra.mxu0 %v1297
        %1312 = vmatprep.subr.mxu0 0.0
        %1313 = vmatpush1.msra.mxu0 %v1296
        %1314 = vmatprep.subr.mxu0 0.0
        %1315 = vmatpush1.msra.mxu0 %v1295
        %1316 = vmatprep.subr.mxu0 0.0
        %1317 = vmatpush1.msra.mxu0 %v1294
        %1318 = vmatprep.subr.mxu0 0.0
        %1319 = vmatpush1.msra.mxu0 %v1293
        %1320 = vmatprep.subr.mxu0 0.0
        %1321 = vmatpush1.msra.mxu0 %v1292
        %1322 = vmatprep.subr.mxu0 0.0
        %1323 = vmatpush1.msra.mxu0 %v1291
        %1324 = vmatprep.subr.mxu0 0.0
        %1325 = vmatpush1.msra.mxu0 %v1290
        %1326 = vmatprep.subr.mxu0 0.0
        %1327 = vmatpush1.msra.mxu0 %v1289
        %1328 = vmatprep.subr.mxu0 0.0
        %1329 = vmatpush1.msra.mxu0 %v1288
        %1330 = vmatprep.subr.mxu0 0.0
        %1331 = vmatpush1.msra.mxu0 %v1287
        %1332 = vmatprep.subr.mxu0 0.0
        %1333 = vmatpush1.msra.mxu0 %v1286
        %1334 = vmatprep.subr.mxu0 0.0
        %1335 = vmatpush2.msra.mxu0 0.0
        %1336 = vmatprep.subr.mxu0 0.0
        %1337 = vmatpush2.msra.mxu0 0.0
        %1338 = vmatprep.subr.mxu0 0.0
        %1339 = vmatpush2.msra.mxu0 0.0
        %1340 = vmatprep.subr.mxu0 0.0
        %1341 = vmatpush2.msra.mxu0 0.0
        %1342 = vmatprep.subr.mxu0 0.0
        %1343 = vmatpush2.msra.mxu0 0.0
        %1344 = vmatprep.subr.mxu0 0.0
        %1345 = vmatpush2.msra.mxu0 0.0
        %1346 = vmatprep.subr.mxu0 0.0
        %1347 = vmatpush2.msra.mxu0 0.0
        %1348 = vmatprep.subr.mxu0 0.0
        %1349 = vmatpush2.msra.mxu0 0.0
        %1350 = vmatprep.subr.mxu0 0.0
        %1351 = vmatpush2.msra.mxu0 0.0
        %1352 = vmatprep.subr.mxu0 0.0
        %1353 = vmatpush2.msra.mxu0 0.0
        %1354 = vmatprep.subr.mxu0 0.0
        %1355 = vmatpush2.msra.mxu0 0.0
        %1356 = vmatprep.subr.mxu0 0.0
        %1357 = vmatpush2.msra.mxu0 0.0
        %1358 = vmatprep.subr.mxu0 0.0
        %1359 = vmatpush2.msra.mxu0 0.0
        %1360 = vmatprep.subr.mxu0 0.0
        %1361 = vmatpush2.msra.mxu0 0.0
        %1362 = vmatprep.subr.mxu0 0.0
        %1363 = vmatpush2.msra.mxu0 0.0
        %1364 = vmatprep.subr.mxu0 0.0
        %1365 = vmatpush2.msra.mxu0 0.0
        %1366 = vmatprep.mubr.f32.mxu0 0.0
        %1367 = vmatmul.mubr.f32.gmra.mxu0 %v1180
        %v1368 = vpop.f32.mrf.mxu0
        %v1369 = vadd.f32 0.0, %v1368
        %v1370 = vpop.f32.mrf.mxu0
        %1371 = vdwg.mxu0
        %s1372 = sadd.s32 %s543, 4
        %s1373 = sld [smem:[#allocation4 + %s1372]]
        %v1374 = vstv %s1373
        %v1375 = vmul.f32 %v1374, %v439
        %v1376 = vld [vmem:[%s380 + $0x4] sm:$0x1]
        %v1377 = vadd.f32 %v1375, %v1376
        %v1378 = vmul.f32 %v440, %v1174
        %v1379 = vadd.f32 %v1378, %v1369
        %v1380 = vadd.f32 %v1379, %v1377
        %v1381 = vxor.u32 %v1380, 2147483648
        %v1382 = vmul.f32 %v1381, 1.442695
        %v1383 = vpow.pop %v1382
        %v1384 = vadd.f32 %v1383, 1.0
        %v1385 = vrcp.pop %v1384
        %v1386 = vmul.f32 1.0, %v1385
        %1387 = vst [vmem:[%s429 + $0x4] sm:$0x1] %v1380
        %1388 = vst [vmem:[#allocation2 + $0x4] sm:$0x1] %v1386
        %v1389 = vld [vmem:[%s560] sm:$0xff]
        %v1390 = vld [vmem:[%s560 + $0x8] sm:$0xff]
        %v1391 = vld [vmem:[%s560 + $0x10] sm:$0xff]
        %v1392 = vld [vmem:[%s560 + $0x18] sm:$0xff]
        %v1393 = vld [vmem:[%s560 + $0x20] sm:$0xff]
        %v1394 = vld [vmem:[%s560 + $0x28] sm:$0xff]
        %v1395 = vld [vmem:[%s560 + $0x30] sm:$0xff]
        %v1396 = vld [vmem:[%s560 + $0x38] sm:$0xff]
        %v1397 = vld [vmem:[%s560 + $0x40] sm:$0xff]
        %v1398 = vld [vmem:[%s560 + $0x48] sm:$0xff]
        %v1399 = vld [vmem:[%s560 + $0x50] sm:$0xff]
        %v1400 = vld [vmem:[%s560 + $0x58] sm:$0xff]
        %v1401 = vld [vmem:[%s560 + $0x60] sm:$0xff]
        %v1402 = vld [vmem:[%s560 + $0x68] sm:$0xff]
        %v1403 = vld [vmem:[%s560 + $0x70] sm:$0xff]
        %v1404 = vld [vmem:[%s560 + $0x78] sm:$0xff]
        %1405 = vmatprep.subr.mxu0 0.0
        %1406 = vmatpush1.msra.mxu0 %v1404
        %1407 = vmatprep.subr.mxu0 0.0
        %1408 = vmatpush1.msra.mxu0 %v1403
        %1409 = vmatprep.subr.mxu0 0.0
        %1410 = vmatpush1.msra.mxu0 %v1402
        %1411 = vmatprep.subr.mxu0 0.0
        %1412 = vmatpush1.msra.mxu0 %v1401
        %1413 = vmatprep.subr.mxu0 0.0
        %1414 = vmatpush1.msra.mxu0 %v1400
        %1415 = vmatprep.subr.mxu0 0.0
        %1416 = vmatpush1.msra.mxu0 %v1399
        %1417 = vmatprep.subr.mxu0 0.0
        %1418 = vmatpush1.msra.mxu0 %v1398
        %1419 = vmatprep.subr.mxu0 0.0
        %1420 = vmatpush1.msra.mxu0 %v1397
        %1421 = vmatprep.subr.mxu0 0.0
        %1422 = vmatpush1.msra.mxu0 %v1396
        %1423 = vmatprep.subr.mxu0 0.0
        %1424 = vmatpush1.msra.mxu0 %v1395
        %1425 = vmatprep.subr.mxu0 0.0
        %1426 = vmatpush1.msra.mxu0 %v1394
        %1427 = vmatprep.subr.mxu0 0.0
        %1428 = vmatpush1.msra.mxu0 %v1393
        %1429 = vmatprep.subr.mxu0 0.0
        %1430 = vmatpush1.msra.mxu0 %v1392
        %1431 = vmatprep.subr.mxu0 0.0
        %1432 = vmatpush1.msra.mxu0 %v1391
        %1433 = vmatprep.subr.mxu0 0.0
        %1434 = vmatpush1.msra.mxu0 %v1390
        %1435 = vmatprep.subr.mxu0 0.0
        %1436 = vmatpush1.msra.mxu0 %v1389
        %1437 = vmatprep.subr.mxu0 0.0
        %1438 = vmatpush2.msra.mxu0 0.0
        %1439 = vmatprep.subr.mxu0 0.0
        %1440 = vmatpush2.msra.mxu0 0.0
        %1441 = vmatprep.subr.mxu0 0.0
        %1442 = vmatpush2.msra.mxu0 0.0
        %1443 = vmatprep.subr.mxu0 0.0
        %1444 = vmatpush2.msra.mxu0 0.0
        %1445 = vmatprep.subr.mxu0 0.0
        %1446 = vmatpush2.msra.mxu0 0.0
        %1447 = vmatprep.subr.mxu0 0.0
        %1448 = vmatpush2.msra.mxu0 0.0
        %1449 = vmatprep.subr.mxu0 0.0
        %1450 = vmatpush2.msra.mxu0 0.0
        %1451 = vmatprep.subr.mxu0 0.0
        %1452 = vmatpush2.msra.mxu0 0.0
        %1453 = vmatprep.subr.mxu0 0.0
        %1454 = vmatpush2.msra.mxu0 0.0
        %1455 = vmatprep.subr.mxu0 0.0
        %1456 = vmatpush2.msra.mxu0 0.0
        %1457 = vmatprep.subr.mxu0 0.0
        %1458 = vmatpush2.msra.mxu0 0.0
        %1459 = vmatprep.subr.mxu0 0.0
        %1460 = vmatpush2.msra.mxu0 0.0
        %1461 = vmatprep.subr.mxu0 0.0
        %1462 = vmatpush2.msra.mxu0 0.0
        %1463 = vmatprep.subr.mxu0 0.0
        %1464 = vmatpush2.msra.mxu0 0.0
        %1465 = vmatprep.subr.mxu0 0.0
        %1466 = vmatpush2.msra.mxu0 0.0
        %1467 = vmatprep.subr.mxu0 0.0
        %1468 = vmatpush2.msra.mxu0 0.0
        %1469 = vmatprep.mubr.f32.mxu0 0.0
        %1470 = vmatmul.mubr.f32.gmra.mxu0 %v1283
        %v1471 = vpop.f32.mrf.mxu0
        %v1472 = vadd.f32 0.0, %v1471
        %v1473 = vpop.f32.mrf.mxu0
        %1474 = vdwg.mxu0
        %s1475 = sadd.s32 %s648, 4
        %s1476 = sld [smem:[#allocation4 + %s1475]]
        %v1477 = vstv %s1476
        %v1478 = vmul.f32 %v1477, %v439
        %v1479 = vld [vmem:[%s652 + $0x4] sm:$0x1]
        %v1480 = vadd.f32 %v1478, %v1479
        %v1481 = vmul.f32 %v440, %v1277
        %v1482 = vadd.f32 %v1481, %v1472
        %v1483 = vadd.f32 %v1482, %v1480
        %v1484 = vxor.u32 %v1483, 2147483648
        %v1485 = vmul.f32 %v1484, 1.442695
        %v1486 = vpow.pop %v1485
        %v1487 = vadd.f32 %v1486, 1.0
        %v1488 = vrcp.pop %v1487
        %v1489 = vmul.f32 1.0, %v1488
        %1490 = vst [vmem:[%s664 + $0x4] sm:$0x1] %v1483
        %1491 = vst [vmem:[%s666 + $0x4] sm:$0x1] %v1489
        %v1492 = vld [vmem:[%s371] sm:$0xff]
        %v1493 = vld [vmem:[%s371 + $0x8] sm:$0xff]
        %v1494 = vld [vmem:[%s371 + $0x10] sm:$0xff]
        %v1495 = vld [vmem:[%s371 + $0x18] sm:$0xff]
        %v1496 = vld [vmem:[%s371 + $0x20] sm:$0xff]
        %v1497 = vld [vmem:[%s371 + $0x28] sm:$0xff]
        %v1498 = vld [vmem:[%s371 + $0x30] sm:$0xff]
        %v1499 = vld [vmem:[%s371 + $0x38] sm:$0xff]
        %v1500 = vld [vmem:[%s371 + $0x40] sm:$0xff]
        %v1501 = vld [vmem:[%s371 + $0x48] sm:$0xff]
        %v1502 = vld [vmem:[%s371 + $0x50] sm:$0xff]
        %v1503 = vld [vmem:[%s371 + $0x58] sm:$0xff]
        %v1504 = vld [vmem:[%s371 + $0x60] sm:$0xff]
        %v1505 = vld [vmem:[%s371 + $0x68] sm:$0xff]
        %v1506 = vld [vmem:[%s371 + $0x70] sm:$0xff]
        %v1507 = vld [vmem:[%s371 + $0x78] sm:$0xff]
        %1508 = vmatprep.subr.mxu0 0.0
        %1509 = vmatpush1.msra.mxu0 %v1507
        %1510 = vmatprep.subr.mxu0 0.0
        %1511 = vmatpush1.msra.mxu0 %v1506
        %1512 = vmatprep.subr.mxu0 0.0
        %1513 = vmatpush1.msra.mxu0 %v1505
        %1514 = vmatprep.subr.mxu0 0.0
        %1515 = vmatpush1.msra.mxu0 %v1504
        %1516 = vmatprep.subr.mxu0 0.0
        %1517 = vmatpush1.msra.mxu0 %v1503
        %1518 = vmatprep.subr.mxu0 0.0
        %1519 = vmatpush1.msra.mxu0 %v1502
        %1520 = vmatprep.subr.mxu0 0.0
        %1521 = vmatpush1.msra.mxu0 %v1501
        %1522 = vmatprep.subr.mxu0 0.0
        %1523 = vmatpush1.msra.mxu0 %v1500
        %1524 = vmatprep.subr.mxu0 0.0
        %1525 = vmatpush1.msra.mxu0 %v1499
        %1526 = vmatprep.subr.mxu0 0.0
        %1527 = vmatpush1.msra.mxu0 %v1498
        %1528 = vmatprep.subr.mxu0 0.0
        %1529 = vmatpush1.msra.mxu0 %v1497
        %1530 = vmatprep.subr.mxu0 0.0
        %1531 = vmatpush1.msra.mxu0 %v1496
        %1532 = vmatprep.subr.mxu0 0.0
        %1533 = vmatpush1.msra.mxu0 %v1495
        %1534 = vmatprep.subr.mxu0 0.0
        %1535 = vmatpush1.msra.mxu0 %v1494
        %1536 = vmatprep.subr.mxu0 0.0
        %1537 = vmatpush1.msra.mxu0 %v1493
        %1538 = vmatprep.subr.mxu0 0.0
        %1539 = vmatpush1.msra.mxu0 %v1492
        %1540 = vmatprep.subr.mxu0 0.0
        %1541 = vmatpush2.msra.mxu0 0.0
        %1542 = vmatprep.subr.mxu0 0.0
        %1543 = vmatpush2.msra.mxu0 0.0
        %1544 = vmatprep.subr.mxu0 0.0
        %1545 = vmatpush2.msra.mxu0 0.0
        %1546 = vmatprep.subr.mxu0 0.0
        %1547 = vmatpush2.msra.mxu0 0.0
        %1548 = vmatprep.subr.mxu0 0.0
        %1549 = vmatpush2.msra.mxu0 0.0
        %1550 = vmatprep.subr.mxu0 0.0
        %1551 = vmatpush2.msra.mxu0 0.0
        %1552 = vmatprep.subr.mxu0 0.0
        %1553 = vmatpush2.msra.mxu0 0.0
        %1554 = vmatprep.subr.mxu0 0.0
        %1555 = vmatpush2.msra.mxu0 0.0
        %1556 = vmatprep.subr.mxu0 0.0
        %1557 = vmatpush2.msra.mxu0 0.0
        %1558 = vmatprep.subr.mxu0 0.0
        %1559 = vmatpush2.msra.mxu0 0.0
        %1560 = vmatprep.subr.mxu0 0.0
        %1561 = vmatpush2.msra.mxu0 0.0
        %1562 = vmatprep.subr.mxu0 0.0
        %1563 = vmatpush2.msra.mxu0 0.0
        %1564 = vmatprep.subr.mxu0 0.0
        %1565 = vmatpush2.msra.mxu0 0.0
        %1566 = vmatprep.subr.mxu0 0.0
        %1567 = vmatpush2.msra.mxu0 0.0
        %1568 = vmatprep.subr.mxu0 0.0
        %1569 = vmatpush2.msra.mxu0 0.0
        %1570 = vmatprep.subr.mxu0 0.0
        %1571 = vmatpush2.msra.mxu0 0.0
        %1572 = vmatprep.mubr.f32.mxu0 0.0
        %1573 = vmatmul.mubr.f32.gmra.mxu0 %v1386
        %v1574 = vpop.f32.mrf.mxu0
        %v1575 = vadd.f32 0.0, %v1574
        %v1576 = vpop.f32.mrf.mxu0
        %1577 = vdwg.mxu0
        %s1578 = sadd.s32 %s543, 5
        %s1579 = sld [smem:[#allocation4 + %s1578]]
        %v1580 = vstv %s1579
        %v1581 = vmul.f32 %v1580, %v439
        %v1582 = vld [vmem:[%s380 + $0x5] sm:$0x1]
        %v1583 = vadd.f32 %v1581, %v1582
        %v1584 = vmul.f32 %v440, %v1380
        %v1585 = vadd.f32 %v1584, %v1575
        %v1586 = vadd.f32 %v1585, %v1583
        %v1587 = vxor.u32 %v1586, 2147483648
        %v1588 = vmul.f32 %v1587, 1.442695
        %v1589 = vpow.pop %v1588
        %v1590 = vadd.f32 %v1589, 1.0
        %v1591 = vrcp.pop %v1590
        %v1592 = vmul.f32 1.0, %v1591
        %1593 = vst [vmem:[%s429 + $0x5] sm:$0x1] %v1586
        %1594 = vst [vmem:[#allocation2 + $0x5] sm:$0x1] %v1592
        %v1595 = vld [vmem:[%s560] sm:$0xff]
        %v1596 = vld [vmem:[%s560 + $0x8] sm:$0xff]
        %v1597 = vld [vmem:[%s560 + $0x10] sm:$0xff]
        %v1598 = vld [vmem:[%s560 + $0x18] sm:$0xff]
        %v1599 = vld [vmem:[%s560 + $0x20] sm:$0xff]
        %v1600 = vld [vmem:[%s560 + $0x28] sm:$0xff]
        %v1601 = vld [vmem:[%s560 + $0x30] sm:$0xff]
        %v1602 = vld [vmem:[%s560 + $0x38] sm:$0xff]
        %v1603 = vld [vmem:[%s560 + $0x40] sm:$0xff]
        %v1604 = vld [vmem:[%s560 + $0x48] sm:$0xff]
        %v1605 = vld [vmem:[%s560 + $0x50] sm:$0xff]
        %v1606 = vld [vmem:[%s560 + $0x58] sm:$0xff]
        %v1607 = vld [vmem:[%s560 + $0x60] sm:$0xff]
        %v1608 = vld [vmem:[%s560 + $0x68] sm:$0xff]
        %v1609 = vld [vmem:[%s560 + $0x70] sm:$0xff]
        %v1610 = vld [vmem:[%s560 + $0x78] sm:$0xff]
        %1611 = vmatprep.subr.mxu0 0.0
        %1612 = vmatpush1.msra.mxu0 %v1610
        %1613 = vmatprep.subr.mxu0 0.0
        %1614 = vmatpush1.msra.mxu0 %v1609
        %1615 = vmatprep.subr.mxu0 0.0
        %1616 = vmatpush1.msra.mxu0 %v1608
        %1617 = vmatprep.subr.mxu0 0.0
        %1618 = vmatpush1.msra.mxu0 %v1607
        %1619 = vmatprep.subr.mxu0 0.0
        %1620 = vmatpush1.msra.mxu0 %v1606
        %1621 = vmatprep.subr.mxu0 0.0
        %1622 = vmatpush1.msra.mxu0 %v1605
        %1623 = vmatprep.subr.mxu0 0.0
        %1624 = vmatpush1.msra.mxu0 %v1604
        %1625 = vmatprep.subr.mxu0 0.0
        %1626 = vmatpush1.msra.mxu0 %v1603
        %1627 = vmatprep.subr.mxu0 0.0
        %1628 = vmatpush1.msra.mxu0 %v1602
        %1629 = vmatprep.subr.mxu0 0.0
        %1630 = vmatpush1.msra.mxu0 %v1601
        %1631 = vmatprep.subr.mxu0 0.0
        %1632 = vmatpush1.msra.mxu0 %v1600
        %1633 = vmatprep.subr.mxu0 0.0
        %1634 = vmatpush1.msra.mxu0 %v1599
        %1635 = vmatprep.subr.mxu0 0.0
        %1636 = vmatpush1.msra.mxu0 %v1598
        %1637 = vmatprep.subr.mxu0 0.0
        %1638 = vmatpush1.msra.mxu0 %v1597
        %1639 = vmatprep.subr.mxu0 0.0
        %1640 = vmatpush1.msra.mxu0 %v1596
        %1641 = vmatprep.subr.mxu0 0.0
        %1642 = vmatpush1.msra.mxu0 %v1595
        %1643 = vmatprep.subr.mxu0 0.0
        %1644 = vmatpush2.msra.mxu0 0.0
        %1645 = vmatprep.subr.mxu0 0.0
        %1646 = vmatpush2.msra.mxu0 0.0
        %1647 = vmatprep.subr.mxu0 0.0
        %1648 = vmatpush2.msra.mxu0 0.0
        %1649 = vmatprep.subr.mxu0 0.0
        %1650 = vmatpush2.msra.mxu0 0.0
        %1651 = vmatprep.subr.mxu0 0.0
        %1652 = vmatpush2.msra.mxu0 0.0
        %1653 = vmatprep.subr.mxu0 0.0
        %1654 = vmatpush2.msra.mxu0 0.0
        %1655 = vmatprep.subr.mxu0 0.0
        %1656 = vmatpush2.msra.mxu0 0.0
        %1657 = vmatprep.subr.mxu0 0.0
        %1658 = vmatpush2.msra.mxu0 0.0
        %1659 = vmatprep.subr.mxu0 0.0
        %1660 = vmatpush2.msra.mxu0 0.0
        %1661 = vmatprep.subr.mxu0 0.0
        %1662 = vmatpush2.msra.mxu0 0.0
        %1663 = vmatprep.subr.mxu0 0.0
        %1664 = vmatpush2.msra.mxu0 0.0
        %1665 = vmatprep.subr.mxu0 0.0
        %1666 = vmatpush2.msra.mxu0 0.0
        %1667 = vmatprep.subr.mxu0 0.0
        %1668 = vmatpush2.msra.mxu0 0.0
        %1669 = vmatprep.subr.mxu0 0.0
        %1670 = vmatpush2.msra.mxu0 0.0
        %1671 = vmatprep.subr.mxu0 0.0
        %1672 = vmatpush2.msra.mxu0 0.0
        %1673 = vmatprep.subr.mxu0 0.0
        %1674 = vmatpush2.msra.mxu0 0.0
        %1675 = vmatprep.mubr.f32.mxu0 0.0
        %1676 = vmatmul.mubr.f32.gmra.mxu0 %v1489
        %v1677 = vpop.f32.mrf.mxu0
        %v1678 = vadd.f32 0.0, %v1677
        %v1679 = vpop.f32.mrf.mxu0
        %1680 = vdwg.mxu0
        %s1681 = sadd.s32 %s648, 5
        %s1682 = sld [smem:[#allocation4 + %s1681]]
        %v1683 = vstv %s1682
        %v1684 = vmul.f32 %v1683, %v439
        %v1685 = vld [vmem:[%s652 + $0x5] sm:$0x1]
        %v1686 = vadd.f32 %v1684, %v1685
        %v1687 = vmul.f32 %v440, %v1483
        %v1688 = vadd.f32 %v1687, %v1678
        %v1689 = vadd.f32 %v1688, %v1686
        %v1690 = vxor.u32 %v1689, 2147483648
        %v1691 = vmul.f32 %v1690, 1.442695
        %v1692 = vpow.pop %v1691
        %v1693 = vadd.f32 %v1692, 1.0
        %v1694 = vrcp.pop %v1693
        %v1695 = vmul.f32 1.0, %v1694
        %1696 = vst [vmem:[%s664 + $0x5] sm:$0x1] %v1689
        %1697 = vst [vmem:[%s666 + $0x5] sm:$0x1] %v1695
        %v1698 = vld [vmem:[%s371] sm:$0xff]
        %v1699 = vld [vmem:[%s371 + $0x8] sm:$0xff]
        %v1700 = vld [vmem:[%s371 + $0x10] sm:$0xff]
        %v1701 = vld [vmem:[%s371 + $0x18] sm:$0xff]
        %v1702 = vld [vmem:[%s371 + $0x20] sm:$0xff]
        %v1703 = vld [vmem:[%s371 + $0x28] sm:$0xff]
        %v1704 = vld [vmem:[%s371 + $0x30] sm:$0xff]
        %v1705 = vld [vmem:[%s371 + $0x38] sm:$0xff]
        %v1706 = vld [vmem:[%s371 + $0x40] sm:$0xff]
        %v1707 = vld [vmem:[%s371 + $0x48] sm:$0xff]
        %v1708 = vld [vmem:[%s371 + $0x50] sm:$0xff]
        %v1709 = vld [vmem:[%s371 + $0x58] sm:$0xff]
        %v1710 = vld [vmem:[%s371 + $0x60] sm:$0xff]
        %v1711 = vld [vmem:[%s371 + $0x68] sm:$0xff]
        %v1712 = vld [vmem:[%s371 + $0x70] sm:$0xff]
        %v1713 = vld [vmem:[%s371 + $0x78] sm:$0xff]
        %1714 = vmatprep.subr.mxu0 0.0
        %1715 = vmatpush1.msra.mxu0 %v1713
        %1716 = vmatprep.subr.mxu0 0.0
        %1717 = vmatpush1.msra.mxu0 %v1712
        %1718 = vmatprep.subr.mxu0 0.0
        %1719 = vmatpush1.msra.mxu0 %v1711
        %1720 = vmatprep.subr.mxu0 0.0
        %1721 = vmatpush1.msra.mxu0 %v1710
        %1722 = vmatprep.subr.mxu0 0.0
        %1723 = vmatpush1.msra.mxu0 %v1709
        %1724 = vmatprep.subr.mxu0 0.0
        %1725 = vmatpush1.msra.mxu0 %v1708
        %1726 = vmatprep.subr.mxu0 0.0
        %1727 = vmatpush1.msra.mxu0 %v1707
        %1728 = vmatprep.subr.mxu0 0.0
        %1729 = vmatpush1.msra.mxu0 %v1706
        %1730 = vmatprep.subr.mxu0 0.0
        %1731 = vmatpush1.msra.mxu0 %v1705
        %1732 = vmatprep.subr.mxu0 0.0
        %1733 = vmatpush1.msra.mxu0 %v1704
        %1734 = vmatprep.subr.mxu0 0.0
        %1735 = vmatpush1.msra.mxu0 %v1703
        %1736 = vmatprep.subr.mxu0 0.0
        %1737 = vmatpush1.msra.mxu0 %v1702
        %1738 = vmatprep.subr.mxu0 0.0
        %1739 = vmatpush1.msra.mxu0 %v1701
        %1740 = vmatprep.subr.mxu0 0.0
        %1741 = vmatpush1.msra.mxu0 %v1700
        %1742 = vmatprep.subr.mxu0 0.0
        %1743 = vmatpush1.msra.mxu0 %v1699
        %1744 = vmatprep.subr.mxu0 0.0
        %1745 = vmatpush1.msra.mxu0 %v1698
        %1746 = vmatprep.subr.mxu0 0.0
        %1747 = vmatpush2.msra.mxu0 0.0
        %1748 = vmatprep.subr.mxu0 0.0
        %1749 = vmatpush2.msra.mxu0 0.0
        %1750 = vmatprep.subr.mxu0 0.0
        %1751 = vmatpush2.msra.mxu0 0.0
        %1752 = vmatprep.subr.mxu0 0.0
        %1753 = vmatpush2.msra.mxu0 0.0
        %1754 = vmatprep.subr.mxu0 0.0
        %1755 = vmatpush2.msra.mxu0 0.0
        %1756 = vmatprep.subr.mxu0 0.0
        %1757 = vmatpush2.msra.mxu0 0.0
        %1758 = vmatprep.subr.mxu0 0.0
        %1759 = vmatpush2.msra.mxu0 0.0
        %1760 = vmatprep.subr.mxu0 0.0
        %1761 = vmatpush2.msra.mxu0 0.0
        %1762 = vmatprep.subr.mxu0 0.0
        %1763 = vmatpush2.msra.mxu0 0.0
        %1764 = vmatprep.subr.mxu0 0.0
        %1765 = vmatpush2.msra.mxu0 0.0
        %1766 = vmatprep.subr.mxu0 0.0
        %1767 = vmatpush2.msra.mxu0 0.0
        %1768 = vmatprep.subr.mxu0 0.0
        %1769 = vmatpush2.msra.mxu0 0.0
        %1770 = vmatprep.subr.mxu0 0.0
        %1771 = vmatpush2.msra.mxu0 0.0
        %1772 = vmatprep.subr.mxu0 0.0
        %1773 = vmatpush2.msra.mxu0 0.0
        %1774 = vmatprep.subr.mxu0 0.0
        %1775 = vmatpush2.msra.mxu0 0.0
        %1776 = vmatprep.subr.mxu0 0.0
        %1777 = vmatpush2.msra.mxu0 0.0
        %1778 = vmatprep.mubr.f32.mxu0 0.0
        %1779 = vmatmul.mubr.f32.gmra.mxu0 %v1592
        %v1780 = vpop.f32.mrf.mxu0
        %v1781 = vadd.f32 0.0, %v1780
        %v1782 = vpop.f32.mrf.mxu0
        %1783 = vdwg.mxu0
        %s1784 = sadd.s32 %s543, 6
        %s1785 = sld [smem:[#allocation4 + %s1784]]
        %v1786 = vstv %s1785
        %v1787 = vmul.f32 %v1786, %v439
        %v1788 = vld [vmem:[%s380 + $0x6] sm:$0x1]
        %v1789 = vadd.f32 %v1787, %v1788
        %v1790 = vmul.f32 %v440, %v1586
        %v1791 = vadd.f32 %v1790, %v1781
        %v1792 = vadd.f32 %v1791, %v1789
        %v1793 = vxor.u32 %v1792, 2147483648
        %v1794 = vmul.f32 %v1793, 1.442695
        %v1795 = vpow.pop %v1794
        %v1796 = vadd.f32 %v1795, 1.0
        %v1797 = vrcp.pop %v1796
        %v1798 = vmul.f32 1.0, %v1797
        %1799 = vst [vmem:[%s429 + $0x6] sm:$0x1] %v1792
        %1800 = vst [vmem:[#allocation2 + $0x6] sm:$0x1] %v1798
        %v1801 = vld [vmem:[%s560] sm:$0xff]
        %v1802 = vld [vmem:[%s560 + $0x8] sm:$0xff]
        %v1803 = vld [vmem:[%s560 + $0x10] sm:$0xff]
        %v1804 = vld [vmem:[%s560 + $0x18] sm:$0xff]
        %v1805 = vld [vmem:[%s560 + $0x20] sm:$0xff]
        %v1806 = vld [vmem:[%s560 + $0x28] sm:$0xff]
        %v1807 = vld [vmem:[%s560 + $0x30] sm:$0xff]
        %v1808 = vld [vmem:[%s560 + $0x38] sm:$0xff]
        %v1809 = vld [vmem:[%s560 + $0x40] sm:$0xff]
        %v1810 = vld [vmem:[%s560 + $0x48] sm:$0xff]
        %v1811 = vld [vmem:[%s560 + $0x50] sm:$0xff]
        %v1812 = vld [vmem:[%s560 + $0x58] sm:$0xff]
        %v1813 = vld [vmem:[%s560 + $0x60] sm:$0xff]
        %v1814 = vld [vmem:[%s560 + $0x68] sm:$0xff]
        %v1815 = vld [vmem:[%s560 + $0x70] sm:$0xff]
        %v1816 = vld [vmem:[%s560 + $0x78] sm:$0xff]
        %1817 = vmatprep.subr.mxu0 0.0
        %1818 = vmatpush1.msra.mxu0 %v1816
        %1819 = vmatprep.subr.mxu0 0.0
        %1820 = vmatpush1.msra.mxu0 %v1815
        %1821 = vmatprep.subr.mxu0 0.0
        %1822 = vmatpush1.msra.mxu0 %v1814
        %1823 = vmatprep.subr.mxu0 0.0
        %1824 = vmatpush1.msra.mxu0 %v1813
        %1825 = vmatprep.subr.mxu0 0.0
        %1826 = vmatpush1.msra.mxu0 %v1812
        %1827 = vmatprep.subr.mxu0 0.0
        %1828 = vmatpush1.msra.mxu0 %v1811
        %1829 = vmatprep.subr.mxu0 0.0
        %1830 = vmatpush1.msra.mxu0 %v1810
        %1831 = vmatprep.subr.mxu0 0.0
        %1832 = vmatpush1.msra.mxu0 %v1809
        %1833 = vmatprep.subr.mxu0 0.0
        %1834 = vmatpush1.msra.mxu0 %v1808
        %1835 = vmatprep.subr.mxu0 0.0
        %1836 = vmatpush1.msra.mxu0 %v1807
        %1837 = vmatprep.subr.mxu0 0.0
        %1838 = vmatpush1.msra.mxu0 %v1806
        %1839 = vmatprep.subr.mxu0 0.0
        %1840 = vmatpush1.msra.mxu0 %v1805
        %1841 = vmatprep.subr.mxu0 0.0
        %1842 = vmatpush1.msra.mxu0 %v1804
        %1843 = vmatprep.subr.mxu0 0.0
        %1844 = vmatpush1.msra.mxu0 %v1803
        %1845 = vmatprep.subr.mxu0 0.0
        %1846 = vmatpush1.msra.mxu0 %v1802
        %1847 = vmatprep.subr.mxu0 0.0
        %1848 = vmatpush1.msra.mxu0 %v1801
        %1849 = vmatprep.subr.mxu0 0.0
        %1850 = vmatpush2.msra.mxu0 0.0
        %1851 = vmatprep.subr.mxu0 0.0
        %1852 = vmatpush2.msra.mxu0 0.0
        %1853 = vmatprep.subr.mxu0 0.0
        %1854 = vmatpush2.msra.mxu0 0.0
        %1855 = vmatprep.subr.mxu0 0.0
        %1856 = vmatpush2.msra.mxu0 0.0
        %1857 = vmatprep.subr.mxu0 0.0
        %1858 = vmatpush2.msra.mxu0 0.0
        %1859 = vmatprep.subr.mxu0 0.0
        %1860 = vmatpush2.msra.mxu0 0.0
        %1861 = vmatprep.subr.mxu0 0.0
        %1862 = vmatpush2.msra.mxu0 0.0
        %1863 = vmatprep.subr.mxu0 0.0
        %1864 = vmatpush2.msra.mxu0 0.0
        %1865 = vmatprep.subr.mxu0 0.0
        %1866 = vmatpush2.msra.mxu0 0.0
        %1867 = vmatprep.subr.mxu0 0.0
        %1868 = vmatpush2.msra.mxu0 0.0
        %1869 = vmatprep.subr.mxu0 0.0
        %1870 = vmatpush2.msra.mxu0 0.0
        %1871 = vmatprep.subr.mxu0 0.0
        %1872 = vmatpush2.msra.mxu0 0.0
        %1873 = vmatprep.subr.mxu0 0.0
        %1874 = vmatpush2.msra.mxu0 0.0
        %1875 = vmatprep.subr.mxu0 0.0
        %1876 = vmatpush2.msra.mxu0 0.0
        %1877 = vmatprep.subr.mxu0 0.0
        %1878 = vmatpush2.msra.mxu0 0.0
        %1879 = vmatprep.subr.mxu0 0.0
        %1880 = vmatpush2.msra.mxu0 0.0
        %1881 = vmatprep.mubr.f32.mxu0 0.0
        %1882 = vmatmul.mubr.f32.gmra.mxu0 %v1695
        %v1883 = vpop.f32.mrf.mxu0
        %v1884 = vadd.f32 0.0, %v1883
        %v1885 = vpop.f32.mrf.mxu0
        %1886 = vdwg.mxu0
        %s1887 = sadd.s32 %s648, 6
        %s1888 = sld [smem:[#allocation4 + %s1887]]
        %v1889 = vstv %s1888
        %v1890 = vmul.f32 %v1889, %v439
        %v1891 = vld [vmem:[%s652 + $0x6] sm:$0x1]
        %v1892 = vadd.f32 %v1890, %v1891
        %v1893 = vmul.f32 %v440, %v1689
        %v1894 = vadd.f32 %v1893, %v1884
        %v1895 = vadd.f32 %v1894, %v1892
        %v1896 = vxor.u32 %v1895, 2147483648
        %v1897 = vmul.f32 %v1896, 1.442695
        %v1898 = vpow.pop %v1897
        %v1899 = vadd.f32 %v1898, 1.0
        %v1900 = vrcp.pop %v1899
        %v1901 = vmul.f32 1.0, %v1900
        %1902 = vst [vmem:[%s664 + $0x6] sm:$0x1] %v1895
        %1903 = vst [vmem:[%s666 + $0x6] sm:$0x1] %v1901
        %v1904 = vld [vmem:[%s371] sm:$0xff]
        %v1905 = vld [vmem:[%s371 + $0x8] sm:$0xff]
        %v1906 = vld [vmem:[%s371 + $0x10] sm:$0xff]
        %v1907 = vld [vmem:[%s371 + $0x18] sm:$0xff]
        %v1908 = vld [vmem:[%s371 + $0x20] sm:$0xff]
        %v1909 = vld [vmem:[%s371 + $0x28] sm:$0xff]
        %v1910 = vld [vmem:[%s371 + $0x30] sm:$0xff]
        %v1911 = vld [vmem:[%s371 + $0x38] sm:$0xff]
        %v1912 = vld [vmem:[%s371 + $0x40] sm:$0xff]
        %v1913 = vld [vmem:[%s371 + $0x48] sm:$0xff]
        %v1914 = vld [vmem:[%s371 + $0x50] sm:$0xff]
        %v1915 = vld [vmem:[%s371 + $0x58] sm:$0xff]
        %v1916 = vld [vmem:[%s371 + $0x60] sm:$0xff]
        %v1917 = vld [vmem:[%s371 + $0x68] sm:$0xff]
        %v1918 = vld [vmem:[%s371 + $0x70] sm:$0xff]
        %v1919 = vld [vmem:[%s371 + $0x78] sm:$0xff]
        %1920 = vmatprep.subr.mxu0 0.0
        %1921 = vmatpush1.msra.mxu0 %v1919
        %1922 = vmatprep.subr.mxu0 0.0
        %1923 = vmatpush1.msra.mxu0 %v1918
        %1924 = vmatprep.subr.mxu0 0.0
        %1925 = vmatpush1.msra.mxu0 %v1917
        %1926 = vmatprep.subr.mxu0 0.0
        %1927 = vmatpush1.msra.mxu0 %v1916
        %1928 = vmatprep.subr.mxu0 0.0
        %1929 = vmatpush1.msra.mxu0 %v1915
        %1930 = vmatprep.subr.mxu0 0.0
        %1931 = vmatpush1.msra.mxu0 %v1914
        %1932 = vmatprep.subr.mxu0 0.0
        %1933 = vmatpush1.msra.mxu0 %v1913
        %1934 = vmatprep.subr.mxu0 0.0
        %1935 = vmatpush1.msra.mxu0 %v1912
        %1936 = vmatprep.subr.mxu0 0.0
        %1937 = vmatpush1.msra.mxu0 %v1911
        %1938 = vmatprep.subr.mxu0 0.0
        %1939 = vmatpush1.msra.mxu0 %v1910
        %1940 = vmatprep.subr.mxu0 0.0
        %1941 = vmatpush1.msra.mxu0 %v1909
        %1942 = vmatprep.subr.mxu0 0.0
        %1943 = vmatpush1.msra.mxu0 %v1908
        %1944 = vmatprep.subr.mxu0 0.0
        %1945 = vmatpush1.msra.mxu0 %v1907
        %1946 = vmatprep.subr.mxu0 0.0
        %1947 = vmatpush1.msra.mxu0 %v1906
        %1948 = vmatprep.subr.mxu0 0.0
        %1949 = vmatpush1.msra.mxu0 %v1905
        %1950 = vmatprep.subr.mxu0 0.0
        %1951 = vmatpush1.msra.mxu0 %v1904
        %1952 = vmatprep.subr.mxu0 0.0
        %1953 = vmatpush2.msra.mxu0 0.0
        %1954 = vmatprep.subr.mxu0 0.0
        %1955 = vmatpush2.msra.mxu0 0.0
        %1956 = vmatprep.subr.mxu0 0.0
        %1957 = vmatpush2.msra.mxu0 0.0
        %1958 = vmatprep.subr.mxu0 0.0
        %1959 = vmatpush2.msra.mxu0 0.0
        %1960 = vmatprep.subr.mxu0 0.0
        %1961 = vmatpush2.msra.mxu0 0.0
        %1962 = vmatprep.subr.mxu0 0.0
        %1963 = vmatpush2.msra.mxu0 0.0
        %1964 = vmatprep.subr.mxu0 0.0
        %1965 = vmatpush2.msra.mxu0 0.0
        %1966 = vmatprep.subr.mxu0 0.0
        %1967 = vmatpush2.msra.mxu0 0.0
        %1968 = vmatprep.subr.mxu0 0.0
        %1969 = vmatpush2.msra.mxu0 0.0
        %1970 = vmatprep.subr.mxu0 0.0
        %1971 = vmatpush2.msra.mxu0 0.0
        %1972 = vmatprep.subr.mxu0 0.0
        %1973 = vmatpush2.msra.mxu0 0.0
        %1974 = vmatprep.subr.mxu0 0.0
        %1975 = vmatpush2.msra.mxu0 0.0
        %1976 = vmatprep.subr.mxu0 0.0
        %1977 = vmatpush2.msra.mxu0 0.0
        %1978 = vmatprep.subr.mxu0 0.0
        %1979 = vmatpush2.msra.mxu0 0.0
        %1980 = vmatprep.subr.mxu0 0.0
        %1981 = vmatpush2.msra.mxu0 0.0
        %1982 = vmatprep.subr.mxu0 0.0
        %1983 = vmatpush2.msra.mxu0 0.0
        %1984 = vmatprep.mubr.f32.mxu0 0.0
        %1985 = vmatmul.mubr.f32.gmra.mxu0 %v1798
        %v1986 = vpop.f32.mrf.mxu0
        %v1987 = vadd.f32 0.0, %v1986
        %v1988 = vpop.f32.mrf.mxu0
        %1989 = vdwg.mxu0
        %s1990 = sadd.s32 %s543, 7
        %s1991 = sld [smem:[#allocation4 + %s1990]]
        %v1992 = vstv %s1991
        %v1993 = vmul.f32 %v1992, %v439
        %v1994 = vld [vmem:[%s380 + $0x7] sm:$0x1]
        %v1995 = vadd.f32 %v1993, %v1994
        %v1996 = vmul.f32 %v440, %v1792
        %v1997 = vadd.f32 %v1996, %v1987
        %v1998 = vadd.f32 %v1997, %v1995
        %v1999 = vxor.u32 %v1998, 2147483648
        %v2000 = vmul.f32 %v1999, 1.442695
        %v2001 = vpow.pop %v2000
        %v2002 = vadd.f32 %v2001, 1.0
        %v2003 = vrcp.pop %v2002
        %v2004 = vmul.f32 1.0, %v2003
        %2005 = vst [vmem:[%s429 + $0x7] sm:$0x1] %v1998
        %2006 = vst [vmem:[#allocation2 + $0x7] sm:$0x1] %v2004
        %v2007 = vld [vmem:[%s560] sm:$0xff]
        %v2008 = vld [vmem:[%s560 + $0x8] sm:$0xff]
        %v2009 = vld [vmem:[%s560 + $0x10] sm:$0xff]
        %v2010 = vld [vmem:[%s560 + $0x18] sm:$0xff]
        %v2011 = vld [vmem:[%s560 + $0x20] sm:$0xff]
        %v2012 = vld [vmem:[%s560 + $0x28] sm:$0xff]
        %v2013 = vld [vmem:[%s560 + $0x30] sm:$0xff]
        %v2014 = vld [vmem:[%s560 + $0x38] sm:$0xff]
        %v2015 = vld [vmem:[%s560 + $0x40] sm:$0xff]
        %v2016 = vld [vmem:[%s560 + $0x48] sm:$0xff]
        %v2017 = vld [vmem:[%s560 + $0x50] sm:$0xff]
        %v2018 = vld [vmem:[%s560 + $0x58] sm:$0xff]
        %v2019 = vld [vmem:[%s560 + $0x60] sm:$0xff]
        %v2020 = vld [vmem:[%s560 + $0x68] sm:$0xff]
        %v2021 = vld [vmem:[%s560 + $0x70] sm:$0xff]
        %v2022 = vld [vmem:[%s560 + $0x78] sm:$0xff]
        %2023 = vmatprep.subr.mxu0 0.0
        %2024 = vmatpush1.msra.mxu0 %v2022
        %2025 = vmatprep.subr.mxu0 0.0
        %2026 = vmatpush1.msra.mxu0 %v2021
        %2027 = vmatprep.subr.mxu0 0.0
        %2028 = vmatpush1.msra.mxu0 %v2020
        %2029 = vmatprep.subr.mxu0 0.0
        %2030 = vmatpush1.msra.mxu0 %v2019
        %2031 = vmatprep.subr.mxu0 0.0
        %2032 = vmatpush1.msra.mxu0 %v2018
        %2033 = vmatprep.subr.mxu0 0.0
        %2034 = vmatpush1.msra.mxu0 %v2017
        %2035 = vmatprep.subr.mxu0 0.0
        %2036 = vmatpush1.msra.mxu0 %v2016
        %2037 = vmatprep.subr.mxu0 0.0
        %2038 = vmatpush1.msra.mxu0 %v2015
        %2039 = vmatprep.subr.mxu0 0.0
        %2040 = vmatpush1.msra.mxu0 %v2014
        %2041 = vmatprep.subr.mxu0 0.0
        %2042 = vmatpush1.msra.mxu0 %v2013
        %2043 = vmatprep.subr.mxu0 0.0
        %2044 = vmatpush1.msra.mxu0 %v2012
        %2045 = vmatprep.subr.mxu0 0.0
        %2046 = vmatpush1.msra.mxu0 %v2011
        %2047 = vmatprep.subr.mxu0 0.0
        %2048 = vmatpush1.msra.mxu0 %v2010
        %2049 = vmatprep.subr.mxu0 0.0
        %2050 = vmatpush1.msra.mxu0 %v2009
        %2051 = vmatprep.subr.mxu0 0.0
        %2052 = vmatpush1.msra.mxu0 %v2008
        %2053 = vmatprep.subr.mxu0 0.0
        %2054 = vmatpush1.msra.mxu0 %v2007
        %2055 = vmatprep.subr.mxu0 0.0
        %2056 = vmatpush2.msra.mxu0 0.0
        %2057 = vmatprep.subr.mxu0 0.0
        %2058 = vmatpush2.msra.mxu0 0.0
        %2059 = vmatprep.subr.mxu0 0.0
        %2060 = vmatpush2.msra.mxu0 0.0
        %2061 = vmatprep.subr.mxu0 0.0
        %2062 = vmatpush2.msra.mxu0 0.0
        %2063 = vmatprep.subr.mxu0 0.0
        %2064 = vmatpush2.msra.mxu0 0.0
        %2065 = vmatprep.subr.mxu0 0.0
        %2066 = vmatpush2.msra.mxu0 0.0
        %2067 = vmatprep.subr.mxu0 0.0
        %2068 = vmatpush2.msra.mxu0 0.0
        %2069 = vmatprep.subr.mxu0 0.0
        %2070 = vmatpush2.msra.mxu0 0.0
        %2071 = vmatprep.subr.mxu0 0.0
        %2072 = vmatpush2.msra.mxu0 0.0
        %2073 = vmatprep.subr.mxu0 0.0
        %2074 = vmatpush2.msra.mxu0 0.0
        %2075 = vmatprep.subr.mxu0 0.0
        %2076 = vmatpush2.msra.mxu0 0.0
        %2077 = vmatprep.subr.mxu0 0.0
        %2078 = vmatpush2.msra.mxu0 0.0
        %2079 = vmatprep.subr.mxu0 0.0
        %2080 = vmatpush2.msra.mxu0 0.0
        %2081 = vmatprep.subr.mxu0 0.0
        %2082 = vmatpush2.msra.mxu0 0.0
        %2083 = vmatprep.subr.mxu0 0.0
        %2084 = vmatpush2.msra.mxu0 0.0
        %2085 = vmatprep.subr.mxu0 0.0
        %2086 = vmatpush2.msra.mxu0 0.0
        %2087 = vmatprep.mubr.f32.mxu0 0.0
        %2088 = vmatmul.mubr.f32.gmra.mxu0 %v1901
        %v2089 = vpop.f32.mrf.mxu0
        %v2090 = vadd.f32 0.0, %v2089
        %v2091 = vpop.f32.mrf.mxu0
        %2092 = vdwg.mxu0
        %s2093 = sadd.s32 %s648, 7
        %s2094 = sld [smem:[#allocation4 + %s2093]]
        %v2095 = vstv %s2094
        %v2096 = vmul.f32 %v2095, %v439
        %v2097 = vld [vmem:[%s652 + $0x7] sm:$0x1]
        %v2098 = vadd.f32 %v2096, %v2097
        %v2099 = vmul.f32 %v440, %v1895
        %v2100 = vadd.f32 %v2099, %v2090
        %v2101 = vadd.f32 %v2100, %v2098
        %v2102 = vxor.u32 %v2101, 2147483648
        %v2103 = vmul.f32 %v2102, 1.442695
        %v2104 = vpow.pop %v2103
        %v2105 = vadd.f32 %v2104, 1.0
        %v2106 = vrcp.pop %v2105
        %v2107 = vmul.f32 1.0, %v2106
        %2108 = vst [vmem:[%s664 + $0x7] sm:$0x1] %v2101
        %2109 = vst [vmem:[%s666 + $0x7] sm:$0x1] %v2107
        %v2110 = vld [vmem:[%s5] sm:$0x1]
        %v2111 = vld [vmem:[#allocation2] sm:$0xff]
        %s2112 = sld [smem:[#allocation3]]
        %v2113 = vstv %s2112
        %2114 = vmatprep.subr.mxu0 0.0
        %2115 = vmatpush1.xpose.msra.mxu0 0.0
        %2116 = vmatprep.subr.mxu0 0.0
        %2117 = vmatpush1.xpose.msra.mxu0 0.0
        %2118 = vmatprep.subr.mxu0 0.0
        %2119 = vmatpush1.xpose.msra.mxu0 0.0
        %2120 = vmatprep.subr.mxu0 0.0
        %2121 = vmatpush1.xpose.msra.mxu0 0.0
        %2122 = vmatprep.subr.mxu0 0.0
        %2123 = vmatpush1.xpose.msra.mxu0 0.0
        %2124 = vmatprep.subr.mxu0 0.0
        %2125 = vmatpush1.xpose.msra.mxu0 0.0
        %2126 = vmatprep.subr.mxu0 0.0
        %2127 = vmatpush1.xpose.msra.mxu0 0.0
        %2128 = vmatprep.subr.mxu0 0.0
        %2129 = vmatpush1.xpose.msra.mxu0 0.0
        %2130 = vmatprep.subr.mxu0 0.0
        %2131 = vmatpush1.xpose.msra.mxu0 0.0
        %2132 = vmatprep.subr.mxu0 0.0
        %2133 = vmatpush1.xpose.msra.mxu0 0.0
        %2134 = vmatprep.subr.mxu0 0.0
        %2135 = vmatpush1.xpose.msra.mxu0 0.0
        %2136 = vmatprep.subr.mxu0 0.0
        %2137 = vmatpush1.xpose.msra.mxu0 0.0
        %2138 = vmatprep.subr.mxu0 0.0
        %2139 = vmatpush1.xpose.msra.mxu0 0.0
        %2140 = vmatprep.subr.mxu0 0.0
        %2141 = vmatpush1.xpose.msra.mxu0 0.0
        %2142 = vmatprep.subr.mxu0 0.0
        %2143 = vmatpush1.xpose.msra.mxu0 0.0
        %2144 = vmatprep.subr.mxu0 0.0
        %2145 = vmatpush1.xpose.msra.mxu0 %v2111
        %2146 = vmatprep.subr.mxu0 0.0
        %2147 = vmatpush2.xpose.msra.mxu0 0.0
        %2148 = vmatprep.subr.mxu0 0.0
        %2149 = vmatpush2.xpose.msra.mxu0 0.0
        %2150 = vmatprep.subr.mxu0 0.0
        %2151 = vmatpush2.xpose.msra.mxu0 0.0
        %2152 = vmatprep.subr.mxu0 0.0
        %2153 = vmatpush2.xpose.msra.mxu0 0.0
        %2154 = vmatprep.subr.mxu0 0.0
        %2155 = vmatpush2.xpose.msra.mxu0 0.0
        %2156 = vmatprep.subr.mxu0 0.0
        %2157 = vmatpush2.xpose.msra.mxu0 0.0
        %2158 = vmatprep.subr.mxu0 0.0
        %2159 = vmatpush2.xpose.msra.mxu0 0.0
        %2160 = vmatprep.subr.mxu0 0.0
        %2161 = vmatpush2.xpose.msra.mxu0 0.0
        %2162 = vmatprep.subr.mxu0 0.0
        %2163 = vmatpush2.xpose.msra.mxu0 0.0
        %2164 = vmatprep.subr.mxu0 0.0
        %2165 = vmatpush2.xpose.msra.mxu0 0.0
        %2166 = vmatprep.subr.mxu0 0.0
        %2167 = vmatpush2.xpose.msra.mxu0 0.0
        %2168 = vmatprep.subr.mxu0 0.0
        %2169 = vmatpush2.xpose.msra.mxu0 0.0
        %2170 = vmatprep.subr.mxu0 0.0
        %2171 = vmatpush2.xpose.msra.mxu0 0.0
        %2172 = vmatprep.subr.mxu0 0.0
        %2173 = vmatpush2.xpose.msra.mxu0 0.0
        %2174 = vmatprep.subr.mxu0 0.0
        %2175 = vmatpush2.xpose.msra.mxu0 0.0
        %2176 = vmatprep.subr.mxu0 0.0
        %2177 = vmatpush2.xpose.msra.mxu0 0.0
        %2178 = vmatprep.mubr.f32.mxu0 0.0
        %2179 = vmatmul.mubr.f32.gmra.mxu0 %v2110
        %v2180 = vpop.f32.mrf.mxu0
        %v2181 = vadd.f32 %v2113, %v2180
        %v2182 = vpop.f32.mrf.mxu0
        %2183 = vdwg.mxu0
        %vm2184 = vcmask 57344
        %2185 = vst.msk [vmem:[%s422] sm:$0x1] %vm2184, %v2181
        %v2186 = vld [vmem:[%s5] sm:$0x1]
        %v2187 = vld [vmem:[%s666] sm:$0xff]
        %s2188 = sld [smem:[#allocation3]]
        %v2189 = vstv %s2188
        %2190 = vmatprep.subr.mxu0 0.0
        %2191 = vmatpush1.xpose.msra.mxu0 0.0
        %2192 = vmatprep.subr.mxu0 0.0
        %2193 = vmatpush1.xpose.msra.mxu0 0.0
        %2194 = vmatprep.subr.mxu0 0.0
        %2195 = vmatpush1.xpose.msra.mxu0 0.0
        %2196 = vmatprep.subr.mxu0 0.0
        %2197 = vmatpush1.xpose.msra.mxu0 0.0
        %2198 = vmatprep.subr.mxu0 0.0
        %2199 = vmatpush1.xpose.msra.mxu0 0.0
        %2200 = vmatprep.subr.mxu0 0.0
        %2201 = vmatpush1.xpose.msra.mxu0 0.0
        %2202 = vmatprep.subr.mxu0 0.0
        %2203 = vmatpush1.xpose.msra.mxu0 0.0
        %2204 = vmatprep.subr.mxu0 0.0
        %2205 = vmatpush1.xpose.msra.mxu0 0.0
        %2206 = vmatprep.subr.mxu0 0.0
        %2207 = vmatpush1.xpose.msra.mxu0 0.0
        %2208 = vmatprep.subr.mxu0 0.0
        %2209 = vmatpush1.xpose.msra.mxu0 0.0
        %2210 = vmatprep.subr.mxu0 0.0
        %2211 = vmatpush1.xpose.msra.mxu0 0.0
        %2212 = vmatprep.subr.mxu0 0.0
        %2213 = vmatpush1.xpose.msra.mxu0 0.0
        %2214 = vmatprep.subr.mxu0 0.0
        %2215 = vmatpush1.xpose.msra.mxu0 0.0
        %2216 = vmatprep.subr.mxu0 0.0
        %2217 = vmatpush1.xpose.msra.mxu0 0.0
        %2218 = vmatprep.subr.mxu0 0.0
        %2219 = vmatpush1.xpose.msra.mxu0 0.0
        %2220 = vmatprep.subr.mxu0 0.0
        %2221 = vmatpush1.xpose.msra.mxu0 %v2187
        %2222 = vmatprep.subr.mxu0 0.0
        %2223 = vmatpush2.xpose.msra.mxu0 0.0
        %2224 = vmatprep.subr.mxu0 0.0
        %2225 = vmatpush2.xpose.msra.mxu0 0.0
        %2226 = vmatprep.subr.mxu0 0.0
        %2227 = vmatpush2.xpose.msra.mxu0 0.0
        %2228 = vmatprep.subr.mxu0 0.0
        %2229 = vmatpush2.xpose.msra.mxu0 0.0
        %2230 = vmatprep.subr.mxu0 0.0
        %2231 = vmatpush2.xpose.msra.mxu0 0.0
        %2232 = vmatprep.subr.mxu0 0.0
        %2233 = vmatpush2.xpose.msra.mxu0 0.0
        %2234 = vmatprep.subr.mxu0 0.0
        %2235 = vmatpush2.xpose.msra.mxu0 0.0
        %2236 = vmatprep.subr.mxu0 0.0
        %2237 = vmatpush2.xpose.msra.mxu0 0.0
        %2238 = vmatprep.subr.mxu0 0.0
        %2239 = vmatpush2.xpose.msra.mxu0 0.0
        %2240 = vmatprep.subr.mxu0 0.0
        %2241 = vmatpush2.xpose.msra.mxu0 0.0
        %2242 = vmatprep.subr.mxu0 0.0
        %2243 = vmatpush2.xpose.msra.mxu0 0.0
        %2244 = vmatprep.subr.mxu0 0.0
        %2245 = vmatpush2.xpose.msra.mxu0 0.0
        %2246 = vmatprep.subr.mxu0 0.0
        %2247 = vmatpush2.xpose.msra.mxu0 0.0
        %2248 = vmatprep.subr.mxu0 0.0
        %2249 = vmatpush2.xpose.msra.mxu0 0.0
        %2250 = vmatprep.subr.mxu0 0.0
        %2251 = vmatpush2.xpose.msra.mxu0 0.0
        %2252 = vmatprep.subr.mxu0 0.0
        %2253 = vmatpush2.xpose.msra.mxu0 0.0
        %2254 = vmatprep.mubr.f32.mxu0 0.0
        %2255 = vmatmul.mubr.f32.gmra.mxu0 %v2186
        %v2256 = vpop.f32.mrf.mxu0
        %v2257 = vadd.f32 %v2189, %v2256
        %v2258 = vpop.f32.mrf.mxu0
        %2259 = vdwg.mxu0
        %s2260 = scalar_lea.vmem %s422, 1 [#allocation11]
        %2261 = vst.msk [vmem:[%s2260] sm:$0x1] %vm2184, %v2257
        %s2262 = sand.u32 %s226, 1
        %s2263 = scalar_lea.sflag [#allocation6], %s2262
        %s2264 = sand.u32 %s226, 1
        %s2265 = smul.addr %s2264, 2
        %s2266 = scalar_lea.vmem [#allocation11], %s2265
        %s2267 = sand.u32 %s252, 1
        %s2268 = scalar_lea.sflag [#allocation13], %s2267
        %s2269 = sand.u32 %s252, 1
        %s2270 = smul.addr %s2269, 16
        %s2271 = scalar_lea.vmem [#allocation12], %s2270
        // Predicated region
        $region65: #{tpu_custom_call.1} parent=51 // pred_check
          %p2272 = pneg %p236
        $region66: #{tpu_custom_call.1} parent=51 // pred_check_branch
          %2274 = sbr.rel (%p2272) target = $region68
        $region67: #{tpu_custom_call.1} parent=51 // pred_region
          %s2275 = smul.u32 2, %s35
          %s2277 = ssub.s32 32, 32
          %2278 = vsyncadd %s2263, %s2277
          %s2279 = smul.addr %s2275, 16
          %s2280 = scalar_lea.hbm %s8, %s2279
          %s2281 = sshll.u32 %s2266, 4
          %s2282 = int_to_ptr.vmem [resolvable:$true] %s2281
          %2287 = dma.vmem_to_hbm [thread:$0]  %s2282, 32, %s2280, %s2263, 16, 16, 1
        $region68: #{tpu_custom_call.1} parent=51 // pred_fallthru
          _
        // Predicated region
        $region69: #{tpu_custom_call.1} parent=51 // pred_check
          %p2288 = pneg %p262
        $region70: #{tpu_custom_call.1} parent=51 // pred_check_branch
          %2290 = sbr.rel (%p2288) target = $region72
        $region71: #{tpu_custom_call.1} parent=51 // pred_region
          %s2291 = smul.u32 2, %s35
          %s2293 = ssub.s32 256, 256
          %2294 = vsyncadd %s2268, %s2293
          %s2295 = smul.addr %s2291, 128
          %s2296 = scalar_lea.hbm %s9, %s2295
          %s2297 = sshll.u32 %s2271, 4
          %s2298 = int_to_ptr.vmem [resolvable:$true] %s2297
          %2303 = dma.vmem_to_hbm [thread:$0]  %s2298, 256, %s2296, %s2268, 128, 128, 8
        $region72: #{tpu_custom_call.1} parent=51 // pred_fallthru
          _
      $region52: #{tpu_custom_call.1} parent=5 // pred_fallthru
        _
      %p2304 = scmp.le.s32.totalorder 2, %s30
      // Predicated region
      $region73: #{tpu_custom_call.1} parent=5 // pred_check
        %p2305 = pneg %p2304
      $region74: #{tpu_custom_call.1} parent=5 // pred_check_branch
        %2307 = sbr.rel (%p2305) target = $region76
      $region75: #{tpu_custom_call.1} parent=5 // pred_region
        %s2308 = ssub.s32 %s30, 2
        // Predicated region
        $region77: #{tpu_custom_call.1} parent=75 // pred_check
          %p2309 = pneg %p242
        $region78: #{tpu_custom_call.1} parent=75 // pred_check_branch
          %2311 = sbr.rel (%p2309) target = $region80
        $region79: #{tpu_custom_call.1} parent=75 // pred_region
          %s2312 = sand.u32 %s227, 1
          %s2313 = scalar_lea.sflag [#allocation6], %s2312
          %s2314 = sand.u32 %s227, 1
          %s2315 = smul.addr %s2314, 2
          %s2316 = scalar_lea.vmem [#allocation11], %s2315
          %2317 = dma.done %s2313, 32
        $region80: #{tpu_custom_call.1} parent=75 // pred_fallthru
          _
        // Predicated region
        $region81: #{tpu_custom_call.1} parent=75 // pred_check
          %p2318 = pneg %p268
        $region82: #{tpu_custom_call.1} parent=75 // pred_check_branch
          %2320 = sbr.rel (%p2318) target = $region84
        $region83: #{tpu_custom_call.1} parent=75 // pred_region
          %s2321 = sand.u32 %s253, 1
          %s2322 = scalar_lea.sflag [#allocation13], %s2321
          %s2323 = sand.u32 %s253, 1
          %s2324 = smul.addr %s2323, 16
          %s2325 = scalar_lea.vmem [#allocation12], %s2324
          %2326 = dma.done %s2322, 256
        $region84: #{tpu_custom_call.1} parent=75 // pred_fallthru
          _
      $region76: #{tpu_custom_call.1} parent=5 // pred_fallthru
        _
    $region6: #{tpu_custom_call.1} parent=1 // loop_footer
      %s34 = sadd.s32 1, %s30
    $region7: #{tpu_custom_call.1} parent=1 // loop_footer_branch
      %29 = sbr.rel target = $region3
    $region8: #{tpu_custom_call.1} parent=1 // loop_exit
      _
    %2327 = vsyncpa [#allocation5], 1
    %s2328 = scalar_lea.sflag [#allocation5], 1
    %2329 = vsyncpa %s2328, 1
    %2330 = vsyncpa [#allocation10], 1
    %s2331 = scalar_lea.sflag [#allocation10], 1
    %2332 = vsyncpa %s2331, 1
    %2333 = vsyncpa [#allocation6], 1
    %s2334 = scalar_lea.sflag [#allocation6], 1
    %2335 = vsyncpa %s2334, 1
    %2336 = vsyncpa [#allocation13], 1
    %s2337 = scalar_lea.sflag [#allocation13], 1
    %2338 = vsyncpa %s2337, 1
    %2339 = vsyncpa [#allocation7], 1
    %s2340 = scalar_lea.sflag [#allocation7], 1
    %2341 = vsyncpa %s2340, 1

</llo_original>
